<compile_context>
chip_gen: v6e
topology: v6e:2x2x1
jax: 0.10.0
libtpu: 0.0.40
codegen_flags: <defaults>
</compile_context>

<pallas_src>
import functools
import math

import jax
import jax.numpy as jnp
from jax import lax
from jax.experimental import pallas as pl
from jax.experimental.pallas import tpu as pltpu

OUT_PAD = 128          # lane-dense padded width for the MLP output store
B_SUBLANE = 8          # pad batch to a full sublane tile


# ----------------------------------------------------------------------------
# Fused kernel: all LSTM layers (bidirectional) + MLP head.
# ----------------------------------------------------------------------------
def _fused_bilstm_mlp_kernel(
    x_ref,            # (S*Bp, 2H)  layer-0 input, feature-padded, time-major rows
    wih_ref,          # (L, 2H, 8H) [fwd | bwd] input->gate weights (pre-transposed)
    whh_ref,          # (L, 2H, 8H) block-diagonal [fwd | bwd] hidden->gate weights
    b_ref,            # (L, 1, 8H)  combined biases (b_ih + b_hh) per direction
    h0_ref, c0_ref,   # (2L, Bp, H)
    w1_ref, b1_ref,   # (2H, 64), (1, 64)
    w2_ref, b2_ref,   # (64, 32), (1, 32)
    w3_ref, b3_ref,   # (32, OUT_PAD), (1, OUT_PAD)   (zero-padded lanes)
    out_ref,          # (S*Bp, OUT_PAD)
    hN_ref, cN_ref,   # (2L, Bp, H)
    gates_sc,         # (S*Bp, 8H) VMEM scratch: hoisted X@W_ih + b, both dirs
    yf_sc, yb_sc,     # (S*Bp, H)  VMEM scratch: fwd / bwd outputs of current layer
    *, S, Bp, H, L, unroll):
  G4 = 4 * H

  for l in range(L):  # static python loop over layers (unrolled at trace time)
    # ---- hoisted input projection for BOTH directions, bias folded in ------
    if l == 0:
      xin = x_ref[...]                                              # (S*Bp, 2H)
    else:
      xin = jnp.concatenate([yf_sc[...], yb_sc[...]], axis=-1)      # (S*Bp, 2H)
    gates_sc[...] = (
        jnp.dot(xin, wih_ref[l], preferred_element_type=jnp.float32)
        + b_ref[l])                                                 # (S*Bp, 8H)

    whh_l = whh_ref[l]                                              # (2H, 8H)
    h_cat0 = jnp.concatenate([h0_ref[2 * l], h0_ref[2 * l + 1]], axis=-1)
    c_f0 = c0_ref[2 * l]
    c_b0 = c0_ref[2 * l + 1]

    def step(t, carry):
      h_cat, c_f, c_b = carry                                       # (Bp,2H),(Bp,H),(Bp,H)
      # one MXU push for both directions (block-diagonal W_hh)
      rec = jnp.dot(h_cat, whh_l, preferred_element_type=jnp.float32)  # (Bp, 8H)

      rf = pl.multiple_of(t * Bp, Bp)                # fwd reads time t
      rb = pl.multiple_of((S - 1 - t) * Bp, Bp)      # bwd reads time S-1-t
      g_f = gates_sc[pl.ds(rf, Bp), 0:G4] + rec[:, 0:G4]
      g_b = gates_sc[pl.ds(rb, Bp), G4:2 * G4] + rec[:, G4:2 * G4]

      i_f = jax.nn.sigmoid(g_f[:, 0:H]);       f_f = jax.nn.sigmoid(g_f[:, H:2 * H])
      gg_f = jnp.tanh(g_f[:, 2 * H:3 * H]);    o_f = jax.nn.sigmoid(g_f[:, 3 * H:4 * H])
      i_b = jax.nn.sigmoid(g_b[:, 0:H]);       f_b = jax.nn.sigmoid(g_b[:, H:2 * H])
      gg_b = jnp.tanh(g_b[:, 2 * H:3 * H]);    o_b = jax.nn.sigmoid(g_b[:, 3 * H:4 * H])

      c_f_new = f_f * c_f + i_f * gg_f
      c_b_new = f_b * c_b + i_b * gg_b
      h_f = o_f * jnp.tanh(c_f_new)
      h_b = o_b * jnp.tanh(c_b_new)

      yf_sc[pl.ds(rf, Bp), :] = h_f            # fwd output at time t
      yb_sc[pl.ds(rb, Bp), :] = h_b            # bwd output at time S-1-t
      return (jnp.concatenate([h_f, h_b], axis=-1), c_f_new, c_b_new)

    h_fin, c_f_fin, c_b_fin = lax.fori_loop(
        0, S, step, (h_cat0, c_f0, c_b0), unroll=unroll)

    hN_ref[2 * l] = h_fin[:, :H]
    hN_ref[2 * l + 1] = h_fin[:, H:]
    cN_ref[2 * l] = c_f_fin
    cN_ref[2 * l + 1] = c_b_fin

  # ---- fused MLP head: Linear(2H,64)->ReLU->Linear(64,32)->[Dropout=id]->ReLU
  #      ->Linear(32,out_dim) (output padded to 128 lanes for dense stores) ---
  y = jnp.concatenate([yf_sc[...], yb_sc[...]], axis=-1)            # (S*Bp, 2H)
  h1 = jnp.maximum(
      jnp.dot(y, w1_ref[...], preferred_element_type=jnp.float32) + b1_ref[...], 0.0)
  h2 = jnp.maximum(
      jnp.dot(h1, w2_ref[...], preferred_element_type=jnp.float32) + b2_ref[...], 0.0)
  out_ref[...] = (
      jnp.dot(h2, w3_ref[...], preferred_element_type=jnp.float32) + b3_ref[...])


# ----------------------------------------------------------------------------
# Wrapper: layout plumbing only (tiny tensors); all heavy data stays in VMEM.
# ----------------------------------------------------------------------------
def model_forward(params, x, hidden=None, *, hidden_dim, layers_num, out_dim=1):
  B, S, Din = x.shape
  H = hidden_dim
  L = layers_num
  assert Din <= 2 * H, "embedding_dim must be <= 2*hidden_dim for this packing"
  Bp = max(B_SUBLANE, B)

  if hidden is None:
    h0 = jnp.zeros((2 * L, Bp, H), jnp.float32)
    c0 = jnp.zeros((2 * L, Bp, H), jnp.float32)
  else:
    h0_in, c0_in = hidden
    h0 = jnp.pad(h0_in.astype(jnp.float32), ((0, 0), (0, Bp - B), (0, 0)))
    c0 = jnp.pad(c0_in.astype(jnp.float32), ((0, 0), (0, Bp - B), (0, 0)))

  # time-major + batch/feature padding of the (tiny) input
  x_tm = jnp.transpose(x, (1, 0, 2)).astype(jnp.float32)            # (S, B, Din)
  x_tm = jnp.pad(x_tm, ((0, 0), (0, Bp - B), (0, 2 * H - Din)))     # (S, Bp, 2H)
  x2d = x_tm.reshape(S * Bp, 2 * H)

  (w1, b1) = params["mlp"]["l1"]
  (w2, b2) = params["mlp"]["l2"]
  (w3, b3) = params["mlp"]["l3"]
  w3p = jnp.pad(w3, ((0, 0), (0, OUT_PAD - w3.shape[1])))
  b3p = jnp.pad(b3, ((0, 0), (0, OUT_PAD - b3.shape[1])))

  kernel = functools.partial(_fused_bilstm_mlp_kernel,
                             S=S, Bp=Bp, H=H, L=L, unroll=bool(S <= 32))

  out_pad, h_n_pad, c_n_pad = pl.pallas_call(
      kernel,
      out_shape=[
          jax.ShapeDtypeStruct((S * Bp, OUT_PAD), jnp.float32),
          jax.ShapeDtypeStruct((2 * L, Bp, H), jnp.float32),
          jax.ShapeDtypeStruct((2 * L, Bp, H), jnp.float32),
      ],
      scratch_shapes=[
          pltpu.VMEM((S * Bp, 8 * H), jnp.float32),   # hoisted gates
          pltpu.VMEM((S * Bp, H), jnp.float32),       # fwd layer output
          pltpu.VMEM((S * Bp, H), jnp.float32),       # bwd layer output
      ],
  )(x2d, params["wih"], params["whh"], params["b"], h0, c0,
    w1, b1, w2, b2, w3p, b3p)

  out = jnp.transpose(out_pad.reshape(S, Bp, OUT_PAD)[:, :B, :out_dim], (1, 0, 2))
  return out, (h_n_pad[:, :B, :], c_n_pad[:, :B, :])


# ----------------------------------------------------------------------------
# Parameter init (PyTorch-style uniform) + packing into the kernel layout.
# ----------------------------------------------------------------------------
def init_raw_params(key, hidden_dim, layers_num, embedding_dim=1, out_dim=1):
  H = hidden_dim
  kstd = 1.0 / math.sqrt(H)
  raw = {"lstm": [], "mlp": {}}
  for layer in range(layers_num):
    din = embedding_dim if layer == 0 else 2 * H
    layer_p = {}
    for direction in ("fwd", "bwd"):
      key, k0, k1, k2, k3 = jax.random.split(key, 5)
      w_ih = jax.random.uniform(k0, (4 * H, din), jnp.float32, -kstd, kstd)
      w_hh = jax.random.uniform(k1, (4 * H, H), jnp.float32, -kstd, kstd)
      b_ih = jax.random.uniform(k2, (4 * H,), jnp.float32, -kstd, kstd)
      b_hh = jax.random.uniform(k3, (4 * H,), jnp.float32, -kstd, kstd)
      layer_p[direction] = (w_ih, w_hh, b_ih, b_hh)
    raw["lstm"].append(layer_p)

  def linear(k, fan_in, fan_out):
    bound = 1.0 / math.sqrt(fan_in)
    ka, kb = jax.random.split(k)
    w = jax.random.uniform(ka, (fan_in, fan_out), jnp.float32, -bound, bound)
    b = jax.random.uniform(kb, (1, fan_out), jnp.float32, -bound, bound)
    return w, b

  key, k1, k2, k3 = jax.random.split(key, 4)
  raw["mlp"]["l1"] = linear(k1, 2 * H, 64)
  raw["mlp"]["l2"] = linear(k2, 64, 32)
  raw["mlp"]["l3"] = linear(k3, 32, out_dim)
  return raw


def pack_params(raw, *, hidden_dim, layers_num, embedding_dim=1):
  """Pack per-direction LSTM weights into the fused kernel layout."""
  H = hidden_dim
  L = layers_num
  wih = jnp.zeros((L, 2 * H, 8 * H), jnp.float32)
  whh = jnp.zeros((L, 2 * H, 8 * H), jnp.float32)
  b = jnp.zeros((L, 1, 8 * H), jnp.float32)
  for l in range(L):
    din = embedding_dim if l == 0 else 2 * H
    wif, whf, bif, bhf = raw["lstm"][l]["fwd"]
    wib, whb, bib, bhb = raw["lstm"][l]["bwd"]
    wih = wih.at[l, :din, :4 * H].set(wif.T)
    wih = wih.at[l, :din, 4 * H:].set(wib.T)
    whh = whh.at[l, :H, :4 * H].set(whf.T)          # block-diagonal
    whh = whh.at[l, H:, 4 * H:].set(whb.T)
    b = b.at[l, 0, :4 * H].set(bif + bhf)
    b = b.at[l, 0, 4 * H:].set(bib + bhb)
  return {"wih": wih, "whh": whh, "b": b, "mlp": raw["mlp"]}


# ----------------------------------------------------------------------------
# Pure-JAX reference (mirrors torch.nn.LSTM bidirectional + the MLP head).
# ----------------------------------------------------------------------------
def reference_forward(raw, x, hidden=None, *, hidden_dim, layers_num):
  B, S, _ = x.shape
  H = hidden_dim
  L = layers_num
  hp = jax.lax.Precision.HIGHEST
  if hidden is None:
    h0 = jnp.zeros((2 * L, B, H), jnp.float32)
    c0 = jnp.zeros((2 * L, B, H), jnp.float32)
  else:
    h0, c0 = hidden

  def cell(x_t, h, c, w_ih, w_hh, b_ih, b_hh):
    g = (jnp.dot(x_t, w_ih.T, precision=hp) + b_ih
         + jnp.dot(h, w_hh.T, precision=hp) + b_hh)
    i = jax.nn.sigmoid(g[:, 0:H]); f = jax.nn.sigmoid(g[:, H:2 * H])
    gg = jnp.tanh(g[:, 2 * H:3 * H]); o = jax.nn.sigmoid(g[:, 3 * H:4 * H])
    c2 = f * c + i * gg
    return o * jnp.tanh(c2), c2

  layer_in = [x[:, t, :].astype(jnp.float32) for t in range(S)]
  hN, cN = [], []
  for l in range(L):
    wf = raw["lstm"][l]["fwd"]; wb = raw["lstm"][l]["bwd"]
    h, c = h0[2 * l], c0[2 * l]
    yf = []
    for t in range(S):
      h, c = cell(layer_in[t], h, c, *wf)
      yf.append(h)
    hN.append(h); cN.append(c)
    h, c = h0[2 * l + 1], c0[2 * l + 1]
    yb = [None] * S
    for t in range(S - 1, -1, -1):
      h, c = cell(layer_in[t], h, c, *wb)
      yb[t] = h
    hN.append(h); cN.append(c)
    layer_in = [jnp.concatenate([yf[t], yb[t]], axis=-1) for t in range(S)]

  y = jnp.stack(layer_in, axis=1)                                   # (B, S, 2H)
  (w1, b1), (w2, b2), (w3, b3) = raw["mlp"]["l1"], raw["mlp"]["l2"], raw["mlp"]["l3"]
  h1 = jnp.maximum(jnp.dot(y, w1, precision=hp) + b1, 0.0)
  h2 = jnp.maximum(jnp.dot(h1, w2, precision=hp) + b2, 0.0)
  out = jnp.dot(h2, w3, precision=hp) + b3
  return out, (jnp.stack(hN, 0), jnp.stack(cN, 0))


if __name__ == "__main__":
  hidden_dim = 32
  layers_num = 2
  embedding_dim = 1
  out_dim = 1
  B, S = 2, 8

  key = jax.random.PRNGKey(0)
  kx, kp = jax.random.split(key)
  x = jax.random.normal(kx, (B, S, embedding_dim), dtype=jnp.float32)
  raw = init_raw_params(kp, hidden_dim, layers_num, embedding_dim, out_dim)
  params = pack_params(raw, hidden_dim=hidden_dim, layers_num=layers_num,
                       embedding_dim=embedding_dim)

  fwd = jax.jit(functools.partial(model_forward, hidden_dim=hidden_dim,
                                  layers_num=layers_num, out_dim=out_dim))
  out, (h_n, c_n) = fwd(params, x)
  jax.block_until_ready((out, h_n, c_n))

  assert out.shape == (B, S, out_dim), out.shape
  assert h_n.shape == (layers_num * 2, B, hidden_dim), h_n.shape
  assert c_n.shape == (layers_num * 2, B, hidden_dim), c_n.shape

  # semantic check against a pure-JAX mirror of the PyTorch module
  ref_out, (ref_h, ref_c) = reference_forward(
      raw, x, None, hidden_dim=hidden_dim, layers_num=layers_num)
  err = max(float(jnp.max(jnp.abs(out - ref_out))),
            float(jnp.max(jnp.abs(h_n - ref_h))),
            float(jnp.max(jnp.abs(c_n - ref_c))))
  assert err < 2e-2, f"mismatch vs reference: {err}"

  # TODO(synk): nn.Dropout (training-mode stochastic masking) is identity here.
  print("KERNEL_OK")
</pallas_src>

<mosaic_0001>
module attributes {stable_mosaic.version = 11 : i64} {
  func.func @_fused_bilstm_mlp_kernel(%arg0: memref<64x64xf32, #tpu.memory_space<vmem>>, %arg1: memref<2x64x256xf32, #tpu.memory_space<vmem>>, %arg2: memref<2x64x256xf32, #tpu.memory_space<vmem>>, %arg3: memref<2x1x256xf32, #tpu.memory_space<vmem>>, %arg4: memref<4x8x32xf32, #tpu.memory_space<vmem>>, %arg5: memref<4x8x32xf32, #tpu.memory_space<vmem>>, %arg6: memref<64x64xf32, #tpu.memory_space<vmem>>, %arg7: memref<1x64xf32, #tpu.memory_space<vmem>>, %arg8: memref<64x32xf32, #tpu.memory_space<vmem>>, %arg9: memref<1x32xf32, #tpu.memory_space<vmem>>, %arg10: memref<32x128xf32, #tpu.memory_space<vmem>>, %arg11: memref<1x128xf32, #tpu.memory_space<vmem>>, %arg12: memref<64x128xf32, #tpu.memory_space<vmem>>, %arg13: memref<4x8x32xf32, #tpu.memory_space<vmem>>, %arg14: memref<4x8x32xf32, #tpu.memory_space<vmem>>, %arg15: memref<64x256xf32, #tpu.memory_space<vmem>>, %arg16: memref<64x32xf32, #tpu.memory_space<vmem>>, %arg17: memref<64x32xf32, #tpu.memory_space<vmem>>) attributes {dimension_semantics = [], scalar_prefetch = 0 : i64, scratch_operands = 3 : i64, tpu.core_type = #tpu.core_type<tc>} {
    %c0 = arith.constant 0 : index
    %c0_0 = arith.constant 0 : index
    %0 = vector.load %arg0[%c0, %c0_0] : memref<64x64xf32, #tpu.memory_space<vmem>>, vector<64x64xf32>
    %c0_1 = arith.constant 0 : index
    %c0_2 = arith.constant 0 : index
    %c0_3 = arith.constant 0 : index
    %1 = vector.load %arg1[%c0_1, %c0_2, %c0_3] : memref<2x64x256xf32, #tpu.memory_space<vmem>>, vector<1x64x256xf32>
    %2 = vector.shape_cast %1 : vector<1x64x256xf32> to vector<64x256xf32>
    %cst = arith.constant dense<0.000000e+00> : vector<64x256xf32>
    %3 = tpu.matmul %0, %2, %cst {dimension_numbers = #tpu.dot_dimension_numbers<[1], [0], [0], [1], [0, 0, 1, 1], [], []>} : vector<64x64xf32>, vector<64x256xf32>, vector<64x256xf32> -> vector<64x256xf32>
    %c0_4 = arith.constant 0 : index
    %c0_5 = arith.constant 0 : index
    %c0_6 = arith.constant 0 : index
    %4 = vector.load %arg3[%c0_4, %c0_5, %c0_6] : memref<2x1x256xf32, #tpu.memory_space<vmem>>, vector<1x1x256xf32>
    %5 = vector.shape_cast %4 : vector<1x1x256xf32> to vector<1x256xf32>
    %6 = vector.broadcast %5 : vector<1x256xf32> to vector<64x256xf32>
    %7 = arith.addf %3, %6 : vector<64x256xf32>
    %c0_7 = arith.constant 0 : index
    %c0_8 = arith.constant 0 : index
    %8 = vector.load %arg15[%c0_7, %c0_8] : memref<64x256xf32, #tpu.memory_space<vmem>>, vector<64x256xf32>
    tpu.vector_store %arg15[%c0_7, %c0_8], %7 {strides = array<i32>} : memref<64x256xf32, #tpu.memory_space<vmem>>, vector<64x256xf32>,
    %c0_9 = arith.constant 0 : index
    %c0_10 = arith.constant 0 : index
    %c0_11 = arith.constant 0 : index
    %9 = vector.load %arg2[%c0_9, %c0_10, %c0_11] : memref<2x64x256xf32, #tpu.memory_space<vmem>>, vector<1x64x256xf32>
    %10 = vector.shape_cast %9 : vector<1x64x256xf32> to vector<64x256xf32>
    %c0_12 = arith.constant 0 : index
    %c0_13 = arith.constant 0 : index
    %c0_14 = arith.constant 0 : index
    %11 = vector.load %arg4[%c0_12, %c0_13, %c0_14] : memref<4x8x32xf32, #tpu.memory_space<vmem>>, vector<1x8x32xf32>
    %12 = vector.shape_cast %11 : vector<1x8x32xf32> to vector<8x32xf32>
    %c1 = arith.constant 1 : index
    %c0_15 = arith.constant 0 : index
    %c0_16 = arith.constant 0 : index
    %13 = vector.load %arg4[%c1, %c0_15, %c0_16] : memref<4x8x32xf32, #tpu.memory_space<vmem>>, vector<1x8x32xf32>
    %14 = vector.shape_cast %13 : vector<1x8x32xf32> to vector<8x32xf32>
    %15 = tpu.concatenate %12, %14 in 1 : vector<8x32xf32>, vector<8x32xf32> -> vector<8x64xf32>
    %c0_17 = arith.constant 0 : index
    %c0_18 = arith.constant 0 : index
    %c0_19 = arith.constant 0 : index
    %16 = vector.load %arg5[%c0_17, %c0_18, %c0_19] : memref<4x8x32xf32, #tpu.memory_space<vmem>>, vector<1x8x32xf32>
    %17 = vector.shape_cast %16 : vector<1x8x32xf32> to vector<8x32xf32>
    %c1_20 = arith.constant 1 : index
    %c0_21 = arith.constant 0 : index
    %c0_22 = arith.constant 0 : index
    %18 = vector.load %arg5[%c1_20, %c0_21, %c0_22] : memref<4x8x32xf32, #tpu.memory_space<vmem>>, vector<1x8x32xf32>
    %19 = vector.shape_cast %18 : vector<1x8x32xf32> to vector<8x32xf32>
    %c0_i32 = arith.constant 0 : i32
    %cst_23 = arith.constant dense<0.000000e+00> : vector<8x256xf32>
    %20 = tpu.matmul %15, %10, %cst_23 {dimension_numbers = #tpu.dot_dimension_numbers<[1], [0], [0], [1], [0, 0, 1, 1], [], []>} : vector<8x64xf32>, vector<64x256xf32>, vector<8x256xf32> -> vector<8x256xf32>
    %c8_i32 = arith.constant 8 : i32
    %21 = arith.muli %c0_i32, %c8_i32 : i32
    %22 = tpu.assume_multiple %21, 8 : i32
    %c7_i32 = arith.constant 7 : i32
    %23 = arith.subi %c7_i32, %c0_i32 : i32
    %c8_i32_24 = arith.constant 8 : i32
    %24 = arith.muli %23, %c8_i32_24 : i32
    %25 = tpu.assume_multiple %24, 8 : i32
    %26 = arith.index_cast %22 : i32 to index
    %c0_25 = arith.constant 0 : index
    %27 = vector.load %arg15[%26, %c0_25] : memref<64x256xf32, #tpu.memory_space<vmem>>, vector<8x128xf32>
    %28 = vector.extract_strided_slice %20 {offsets = [0, 0], sizes = [8, 128], strides = [1, 1]} : vector<8x256xf32> to vector<8x128xf32>
    %29 = arith.addf %27, %28 : vector<8x128xf32>
    %30 = arith.index_cast %25 : i32 to index
    %c128 = arith.constant 128 : index
    %31 = vector.load %arg15[%30, %c128] : memref<64x256xf32, #tpu.memory_space<vmem>>, vector<8x128xf32>
    %32 = vector.extract_strided_slice %20 {offsets = [0, 128], sizes = [8, 128], strides = [1, 1]} : vector<8x256xf32> to vector<8x128xf32>
    %33 = arith.addf %31, %32 : vector<8x128xf32>
    %34 = vector.extract_strided_slice %29 {offsets = [0, 0], sizes = [8, 32], strides = [1, 1]} : vector<8x128xf32> to vector<8x32xf32>
    %35 = arith.negf %34 : vector<8x32xf32>
    %36 = math.exp %35 : vector<8x32xf32>
    %cst_26 = arith.constant 1.000000e+00 : f32
    %37 = vector.broadcast %cst_26 : f32 to vector<8x32xf32>
    %38 = arith.addf %37, %36 : vector<8x32xf32>
    %39 = arith.divf %37, %38 : vector<8x32xf32>
    %40 = vector.extract_strided_slice %29 {offsets = [0, 32], sizes = [8, 32], strides = [1, 1]} : vector<8x128xf32> to vector<8x32xf32>
    %41 = arith.negf %40 : vector<8x32xf32>
    %42 = math.exp %41 : vector<8x32xf32>
    %cst_27 = arith.constant 1.000000e+00 : f32
    %43 = vector.broadcast %cst_27 : f32 to vector<8x32xf32>
    %44 = arith.addf %43, %42 : vector<8x32xf32>
    %45 = arith.divf %43, %44 : vector<8x32xf32>
    %46 = vector.extract_strided_slice %29 {offsets = [0, 64], sizes = [8, 32], strides = [1, 1]} : vector<8x128xf32> to vector<8x32xf32>
    %47 = math.tanh %46 : vector<8x32xf32>
    %48 = vector.extract_strided_slice %29 {offsets = [0, 96], sizes = [8, 32], strides = [1, 1]} : vector<8x128xf32> to vector<8x32xf32>
    %49 = arith.negf %48 : vector<8x32xf32>
    %50 = math.exp %49 : vector<8x32xf32>
    %cst_28 = arith.constant 1.000000e+00 : f32
    %51 = vector.broadcast %cst_28 : f32 to vector<8x32xf32>
    %52 = arith.addf %51, %50 : vector<8x32xf32>
    %53 = arith.divf %51, %52 : vector<8x32xf32>
    %54 = vector.extract_strided_slice %33 {offsets = [0, 0], sizes = [8, 32], strides = [1, 1]} : vector<8x128xf32> to vector<8x32xf32>
    %55 = arith.negf %54 : vector<8x32xf32>
    %56 = math.exp %55 : vector<8x32xf32>
    %cst_29 = arith.constant 1.000000e+00 : f32
    %57 = vector.broadcast %cst_29 : f32 to vector<8x32xf32>
    %58 = arith.addf %57, %56 : vector<8x32xf32>
    %59 = arith.divf %57, %58 : vector<8x32xf32>
    %60 = vector.extract_strided_slice %33 {offsets = [0, 32], sizes = [8, 32], strides = [1, 1]} : vector<8x128xf32> to vector<8x32xf32>
    %61 = arith.negf %60 : vector<8x32xf32>
    %62 = math.exp %61 : vector<8x32xf32>
    %cst_30 = arith.constant 1.000000e+00 : f32
    %63 = vector.broadcast %cst_30 : f32 to vector<8x32xf32>
    %64 = arith.addf %63, %62 : vector<8x32xf32>
    %65 = arith.divf %63, %64 : vector<8x32xf32>
    %66 = vector.extract_strided_slice %33 {offsets = [0, 64], sizes = [8, 32], strides = [1, 1]} : vector<8x128xf32> to vector<8x32xf32>
    %67 = math.tanh %66 : vector<8x32xf32>
    %68 = vector.extract_strided_slice %33 {offsets = [0, 96], sizes = [8, 32], strides = [1, 1]} : vector<8x128xf32> to vector<8x32xf32>
    %69 = arith.negf %68 : vector<8x32xf32>
    %70 = math.exp %69 : vector<8x32xf32>
    %cst_31 = arith.constant 1.000000e+00 : f32
    %71 = vector.broadcast %cst_31 : f32 to vector<8x32xf32>
    %72 = arith.addf %71, %70 : vector<8x32xf32>
    %73 = arith.divf %71, %72 : vector<8x32xf32>
    %74 = arith.mulf %45, %17 : vector<8x32xf32>
    %75 = arith.mulf %39, %47 : vector<8x32xf32>
    %76 = arith.addf %74, %75 : vector<8x32xf32>
    %77 = arith.mulf %65, %19 : vector<8x32xf32>
    %78 = arith.mulf %59, %67 : vector<8x32xf32>
    %79 = arith.addf %77, %78 : vector<8x32xf32>
    %80 = math.tanh %76 : vector<8x32xf32>
    %81 = arith.mulf %53, %80 : vector<8x32xf32>
    %82 = math.tanh %79 : vector<8x32xf32>
    %83 = arith.mulf %73, %82 : vector<8x32xf32>
    %84 = arith.index_cast %22 : i32 to index
    %c0_32 = arith.constant 0 : index
    %85 = vector.load %arg16[%84, %c0_32] : memref<64x32xf32, #tpu.memory_space<vmem>>, vector<8x32xf32>
    tpu.vector_store %arg16[%84, %c0_32], %81 {strides = array<i32>} : memref<64x32xf32, #tpu.memory_space<vmem>>, vector<8x32xf32>,
    %86 = arith.index_cast %25 : i32 to index
    %c0_33 = arith.constant 0 : index
    %87 = vector.load %arg17[%86, %c0_33] : memref<64x32xf32, #tpu.memory_space<vmem>>, vector<8x32xf32>
    tpu.vector_store %arg17[%86, %c0_33], %83 {strides = array<i32>} : memref<64x32xf32, #tpu.memory_space<vmem>>, vector<8x32xf32>,
    %88 = tpu.concatenate %81, %83 in 1 : vector<8x32xf32>, vector<8x32xf32> -> vector<8x64xf32>
    %c1_i32 = arith.constant 1 : i32
    %cst_34 = arith.constant dense<0.000000e+00> : vector<8x256xf32>
    %89 = tpu.matmul %88, %10, %cst_34 {dimension_numbers = #tpu.dot_dimension_numbers<[1], [0], [0], [1], [0, 0, 1, 1], [], []>} : vector<8x64xf32>, vector<64x256xf32>, vector<8x256xf32> -> vector<8x256xf32>
    %c8_i32_35 = arith.constant 8 : i32
    %90 = arith.muli %c1_i32, %c8_i32_35 : i32
    %91 = tpu.assume_multiple %90, 8 : i32
    %c7_i32_36 = arith.constant 7 : i32
    %92 = arith.subi %c7_i32_36, %c1_i32 : i32
    %c8_i32_37 = arith.constant 8 : i32
    %93 = arith.muli %92, %c8_i32_37 : i32
    %94 = tpu.assume_multiple %93, 8 : i32
    %95 = arith.index_cast %91 : i32 to index
    %c0_38 = arith.constant 0 : index
    %96 = vector.load %arg15[%95, %c0_38] : memref<64x256xf32, #tpu.memory_space<vmem>>, vector<8x128xf32>
    %97 = vector.extract_strided_slice %89 {offsets = [0, 0], sizes = [8, 128], strides = [1, 1]} : vector<8x256xf32> to vector<8x128xf32>
    %98 = arith.addf %96, %97 : vector<8x128xf32>
    %99 = arith.index_cast %94 : i32 to index
    %c128_39 = arith.constant 128 : index
    %100 = vector.load %arg15[%99, %c128_39] : memref<64x256xf32, #tpu.memory_space<vmem>>, vector<8x128xf32>
    %101 = vector.extract_strided_slice %89 {offsets = [0, 128], sizes = [8, 128], strides = [1, 1]} : vector<8x256xf32> to vector<8x128xf32>
    %102 = arith.addf %100, %101 : vector<8x128xf32>
    %103 = vector.extract_strided_slice %98 {offsets = [0, 0], sizes = [8, 32], strides = [1, 1]} : vector<8x128xf32> to vector<8x32xf32>
    %104 = arith.negf %103 : vector<8x32xf32>
    %105 = math.exp %104 : vector<8x32xf32>
    %cst_40 = arith.constant 1.000000e+00 : f32
    %106 = vector.broadcast %cst_40 : f32 to vector<8x32xf32>
    %107 = arith.addf %106, %105 : vector<8x32xf32>
    %108 = arith.divf %106, %107 : vector<8x32xf32>
    %109 = vector.extract_strided_slice %98 {offsets = [0, 32], sizes = [8, 32], strides = [1, 1]} : vector<8x128xf32> to vector<8x32xf32>
    %110 = arith.negf %109 : vector<8x32xf32>
    %111 = math.exp %110 : vector<8x32xf32>
    %cst_41 = arith.constant 1.000000e+00 : f32
    %112 = vector.broadcast %cst_41 : f32 to vector<8x32xf32>
    %113 = arith.addf %112, %111 : vector<8x32xf32>
    %114 = arith.divf %112, %113 : vector<8x32xf32>
    %115 = vector.extract_strided_slice %98 {offsets = [0, 64], sizes = [8, 32], strides = [1, 1]} : vector<8x128xf32> to vector<8x32xf32>
    %116 = math.tanh %115 : vector<8x32xf32>
    %117 = vector.extract_strided_slice %98 {offsets = [0, 96], sizes = [8, 32], strides = [1, 1]} : vector<8x128xf32> to vector<8x32xf32>
    %118 = arith.negf %117 : vector<8x32xf32>
    %119 = math.exp %118 : vector<8x32xf32>
    %cst_42 = arith.constant 1.000000e+00 : f32
    %120 = vector.broadcast %cst_42 : f32 to vector<8x32xf32>
    %121 = arith.addf %120, %119 : vector<8x32xf32>
    %122 = arith.divf %120, %121 : vector<8x32xf32>
    %123 = vector.extract_strided_slice %102 {offsets = [0, 0], sizes = [8, 32], strides = [1, 1]} : vector<8x128xf32> to vector<8x32xf32>
    %124 = arith.negf %123 : vector<8x32xf32>
    %125 = math.exp %124 : vector<8x32xf32>
    %cst_43 = arith.constant 1.000000e+00 : f32
    %126 = vector.broadcast %cst_43 : f32 to vector<8x32xf32>
    %127 = arith.addf %126, %125 : vector<8x32xf32>
    %128 = arith.divf %126, %127 : vector<8x32xf32>
    %129 = vector.extract_strided_slice %102 {offsets = [0, 32], sizes = [8, 32], strides = [1, 1]} : vector<8x128xf32> to vector<8x32xf32>
    %130 = arith.negf %129 : vector<8x32xf32>
    %131 = math.exp %130 : vector<8x32xf32>
    %cst_44 = arith.constant 1.000000e+00 : f32
    %132 = vector.broadcast %cst_44 : f32 to vector<8x32xf32>
    %133 = arith.addf %132, %131 : vector<8x32xf32>
    %134 = arith.divf %132, %133 : vector<8x32xf32>
    %135 = vector.extract_strided_slice %102 {offsets = [0, 64], sizes = [8, 32], strides = [1, 1]} : vector<8x128xf32> to vector<8x32xf32>
    %136 = math.tanh %135 : vector<8x32xf32>
    %137 = vector.extract_strided_slice %102 {offsets = [0, 96], sizes = [8, 32], strides = [1, 1]} : vector<8x128xf32> to vector<8x32xf32>
    %138 = arith.negf %137 : vector<8x32xf32>
    %139 = math.exp %138 : vector<8x32xf32>
    %cst_45 = arith.constant 1.000000e+00 : f32
    %140 = vector.broadcast %cst_45 : f32 to vector<8x32xf32>
    %141 = arith.addf %140, %139 : vector<8x32xf32>
    %142 = arith.divf %140, %141 : vector<8x32xf32>
    %143 = arith.mulf %114, %76 : vector<8x32xf32>
    %144 = arith.mulf %108, %116 : vector<8x32xf32>
    %145 = arith.addf %143, %144 : vector<8x32xf32>
    %146 = arith.mulf %134, %79 : vector<8x32xf32>
    %147 = arith.mulf %128, %136 : vector<8x32xf32>
    %148 = arith.addf %146, %147 : vector<8x32xf32>
    %149 = math.tanh %145 : vector<8x32xf32>
    %150 = arith.mulf %122, %149 : vector<8x32xf32>
    %151 = math.tanh %148 : vector<8x32xf32>
    %152 = arith.mulf %142, %151 : vector<8x32xf32>
    %153 = arith.index_cast %91 : i32 to index
    %c0_46 = arith.constant 0 : index
    %154 = vector.load %arg16[%153, %c0_46] : memref<64x32xf32, #tpu.memory_space<vmem>>, vector<8x32xf32>
    tpu.vector_store %arg16[%153, %c0_46], %150 {strides = array<i32>} : memref<64x32xf32, #tpu.memory_space<vmem>>, vector<8x32xf32>,
    %155 = arith.index_cast %94 : i32 to index
    %c0_47 = arith.constant 0 : index
    %156 = vector.load %arg17[%155, %c0_47] : memref<64x32xf32, #tpu.memory_space<vmem>>, vector<8x32xf32>
    tpu.vector_store %arg17[%155, %c0_47], %152 {strides = array<i32>} : memref<64x32xf32, #tpu.memory_space<vmem>>, vector<8x32xf32>,
    %157 = tpu.concatenate %150, %152 in 1 : vector<8x32xf32>, vector<8x32xf32> -> vector<8x64xf32>
    %c2_i32 = arith.constant 2 : i32
    %cst_48 = arith.constant dense<0.000000e+00> : vector<8x256xf32>
    %158 = tpu.matmul %157, %10, %cst_48 {dimension_numbers = #tpu.dot_dimension_numbers<[1], [0], [0], [1], [0, 0, 1, 1], [], []>} : vector<8x64xf32>, vector<64x256xf32>, vector<8x256xf32> -> vector<8x256xf32>
    %c8_i32_49 = arith.constant 8 : i32
    %159 = arith.muli %c2_i32, %c8_i32_49 : i32
    %160 = tpu.assume_multiple %159, 8 : i32
    %c7_i32_50 = arith.constant 7 : i32
    %161 = arith.subi %c7_i32_50, %c2_i32 : i32
    %c8_i32_51 = arith.constant 8 : i32
    %162 = arith.muli %161, %c8_i32_51 : i32
    %163 = tpu.assume_multiple %162, 8 : i32
    %164 = arith.index_cast %160 : i32 to index
    %c0_52 = arith.constant 0 : index
    %165 = vector.load %arg15[%164, %c0_52] : memref<64x256xf32, #tpu.memory_space<vmem>>, vector<8x128xf32>
    %166 = vector.extract_strided_slice %158 {offsets = [0, 0], sizes = [8, 128], strides = [1, 1]} : vector<8x256xf32> to vector<8x128xf32>
    %167 = arith.addf %165, %166 : vector<8x128xf32>
    %168 = arith.index_cast %163 : i32 to index
    %c128_53 = arith.constant 128 : index
    %169 = vector.load %arg15[%168, %c128_53] : memref<64x256xf32, #tpu.memory_space<vmem>>, vector<8x128xf32>
    %170 = vector.extract_strided_slice %158 {offsets = [0, 128], sizes = [8, 128], strides = [1, 1]} : vector<8x256xf32> to vector<8x128xf32>
    %171 = arith.addf %169, %170 : vector<8x128xf32>
    %172 = vector.extract_strided_slice %167 {offsets = [0, 0], sizes = [8, 32], strides = [1, 1]} : vector<8x128xf32> to vector<8x32xf32>
    %173 = arith.negf %172 : vector<8x32xf32>
    %174 = math.exp %173 : vector<8x32xf32>
    %cst_54 = arith.constant 1.000000e+00 : f32
    %175 = vector.broadcast %cst_54 : f32 to vector<8x32xf32>
    %176 = arith.addf %175, %174 : vector<8x32xf32>
    %177 = arith.divf %175, %176 : vector<8x32xf32>
    %178 = vector.extract_strided_slice %167 {offsets = [0, 32], sizes = [8, 32], strides = [1, 1]} : vector<8x128xf32> to vector<8x32xf32>
    %179 = arith.negf %178 : vector<8x32xf32>
    %180 = math.exp %179 : vector<8x32xf32>
    %cst_55 = arith.constant 1.000000e+00 : f32
    %181 = vector.broadcast %cst_55 : f32 to vector<8x32xf32>
    %182 = arith.addf %181, %180 : vector<8x32xf32>
    %183 = arith.divf %181, %182 : vector<8x32xf32>
    %184 = vector.extract_strided_slice %167 {offsets = [0, 64], sizes = [8, 32], strides = [1, 1]} : vector<8x128xf32> to vector<8x32xf32>
    %185 = math.tanh %184 : vector<8x32xf32>
    %186 = vector.extract_strided_slice %167 {offsets = [0, 96], sizes = [8, 32], strides = [1, 1]} : vector<8x128xf32> to vector<8x32xf32>
    %187 = arith.negf %186 : vector<8x32xf32>
    %188 = math.exp %187 : vector<8x32xf32>
    %cst_56 = arith.constant 1.000000e+00 : f32
    %189 = vector.broadcast %cst_56 : f32 to vector<8x32xf32>
    %190 = arith.addf %189, %188 : vector<8x32xf32>
    %191 = arith.divf %189, %190 : vector<8x32xf32>
    %192 = vector.extract_strided_slice %171 {offsets = [0, 0], sizes = [8, 32], strides = [1, 1]} : vector<8x128xf32> to vector<8x32xf32>
    %193 = arith.negf %192 : vector<8x32xf32>
    %194 = math.exp %193 : vector<8x32xf32>
    %cst_57 = arith.constant 1.000000e+00 : f32
    %195 = vector.broadcast %cst_57 : f32 to vector<8x32xf32>
    %196 = arith.addf %195, %194 : vector<8x32xf32>
    %197 = arith.divf %195, %196 : vector<8x32xf32>
    %198 = vector.extract_strided_slice %171 {offsets = [0, 32], sizes = [8, 32], strides = [1, 1]} : vector<8x128xf32> to vector<8x32xf32>
    %199 = arith.negf %198 : vector<8x32xf32>
    %200 = math.exp %199 : vector<8x32xf32>
    %cst_58 = arith.constant 1.000000e+00 : f32
    %201 = vector.broadcast %cst_58 : f32 to vector<8x32xf32>
    %202 = arith.addf %201, %200 : vector<8x32xf32>
    %203 = arith.divf %201, %202 : vector<8x32xf32>
    %204 = vector.extract_strided_slice %171 {offsets = [0, 64], sizes = [8, 32], strides = [1, 1]} : vector<8x128xf32> to vector<8x32xf32>
    %205 = math.tanh %204 : vector<8x32xf32>
    %206 = vector.extract_strided_slice %171 {offsets = [0, 96], sizes = [8, 32], strides = [1, 1]} : vector<8x128xf32> to vector<8x32xf32>
    %207 = arith.negf %206 : vector<8x32xf32>
    %208 = math.exp %207 : vector<8x32xf32>
    %cst_59 = arith.constant 1.000000e+00 : f32
    %209 = vector.broadcast %cst_59 : f32 to vector<8x32xf32>
    %210 = arith.addf %209, %208 : vector<8x32xf32>
    %211 = arith.divf %209, %210 : vector<8x32xf32>
    %212 = arith.mulf %183, %145 : vector<8x32xf32>
    %213 = arith.mulf %177, %185 : vector<8x32xf32>
    %214 = arith.addf %212, %213 : vector<8x32xf32>
    %215 = arith.mulf %203, %148 : vector<8x32xf32>
    %216 = arith.mulf %197, %205 : vector<8x32xf32>
    %217 = arith.addf %215, %216 : vector<8x32xf32>
    %218 = math.tanh %214 : vector<8x32xf32>
    %219 = arith.mulf %191, %218 : vector<8x32xf32>
    %220 = math.tanh %217 : vector<8x32xf32>
    %221 = arith.mulf %211, %220 : vector<8x32xf32>
    %222 = arith.index_cast %160 : i32 to index
    %c0_60 = arith.constant 0 : index
    %223 = vector.load %arg16[%222, %c0_60] : memref<64x32xf32, #tpu.memory_space<vmem>>, vector<8x32xf32>
    tpu.vector_store %arg16[%222, %c0_60], %219 {strides = array<i32>} : memref<64x32xf32, #tpu.memory_space<vmem>>, vector<8x32xf32>,
    %224 = arith.index_cast %163 : i32 to index
    %c0_61 = arith.constant 0 : index
    %225 = vector.load %arg17[%224, %c0_61] : memref<64x32xf32, #tpu.memory_space<vmem>>, vector<8x32xf32>
    tpu.vector_store %arg17[%224, %c0_61], %221 {strides = array<i32>} : memref<64x32xf32, #tpu.memory_space<vmem>>, vector<8x32xf32>,
    %226 = tpu.concatenate %219, %221 in 1 : vector<8x32xf32>, vector<8x32xf32> -> vector<8x64xf32>
    %c3_i32 = arith.constant 3 : i32
    %cst_62 = arith.constant dense<0.000000e+00> : vector<8x256xf32>
    %227 = tpu.matmul %226, %10, %cst_62 {dimension_numbers = #tpu.dot_dimension_numbers<[1], [0], [0], [1], [0, 0, 1, 1], [], []>} : vector<8x64xf32>, vector<64x256xf32>, vector<8x256xf32> -> vector<8x256xf32>
    %c8_i32_63 = arith.constant 8 : i32
    %228 = arith.muli %c3_i32, %c8_i32_63 : i32
    %229 = tpu.assume_multiple %228, 8 : i32
    %c7_i32_64 = arith.constant 7 : i32
    %230 = arith.subi %c7_i32_64, %c3_i32 : i32
    %c8_i32_65 = arith.constant 8 : i32
    %231 = arith.muli %230, %c8_i32_65 : i32
    %232 = tpu.assume_multiple %231, 8 : i32
    %233 = arith.index_cast %229 : i32 to index
    %c0_66 = arith.constant 0 : index
    %234 = vector.load %arg15[%233, %c0_66] : memref<64x256xf32, #tpu.memory_space<vmem>>, vector<8x128xf32>
    %235 = vector.extract_strided_slice %227 {offsets = [0, 0], sizes = [8, 128], strides = [1, 1]} : vector<8x256xf32> to vector<8x128xf32>
    %236 = arith.addf %234, %235 : vector<8x128xf32>
    %237 = arith.index_cast %232 : i32 to index
    %c128_67 = arith.constant 128 : index
    %238 = vector.load %arg15[%237, %c128_67] : memref<64x256xf32, #tpu.memory_space<vmem>>, vector<8x128xf32>
    %239 = vector.extract_strided_slice %227 {offsets = [0, 128], sizes = [8, 128], strides = [1, 1]} : vector<8x256xf32> to vector<8x128xf32>
    %240 = arith.addf %238, %239 : vector<8x128xf32>
    %241 = vector.extract_strided_slice %236 {offsets = [0, 0], sizes = [8, 32], strides = [1, 1]} : vector<8x128xf32> to vector<8x32xf32>
    %242 = arith.negf %241 : vector<8x32xf32>
    %243 = math.exp %242 : vector<8x32xf32>
    %cst_68 = arith.constant 1.000000e+00 : f32
    %244 = vector.broadcast %cst_68 : f32 to vector<8x32xf32>
    %245 = arith.addf %244, %243 : vector<8x32xf32>
    %246 = arith.divf %244, %245 : vector<8x32xf32>
    %247 = vector.extract_strided_slice %236 {offsets = [0, 32], sizes = [8, 32], strides = [1, 1]} : vector<8x128xf32> to vector<8x32xf32>
    %248 = arith.negf %247 : vector<8x32xf32>
    %249 = math.exp %248 : vector<8x32xf32>
    %cst_69 = arith.constant 1.000000e+00 : f32
    %250 = vector.broadcast %cst_69 : f32 to vector<8x32xf32>
    %251 = arith.addf %250, %249 : vector<8x32xf32>
    %252 = arith.divf %250, %251 : vector<8x32xf32>
    %253 = vector.extract_strided_slice %236 {offsets = [0, 64], sizes = [8, 32], strides = [1, 1]} : vector<8x128xf32> to vector<8x32xf32>
    %254 = math.tanh %253 : vector<8x32xf32>
    %255 = vector.extract_strided_slice %236 {offsets = [0, 96], sizes = [8, 32], strides = [1, 1]} : vector<8x128xf32> to vector<8x32xf32>
    %256 = arith.negf %255 : vector<8x32xf32>
    %257 = math.exp %256 : vector<8x32xf32>
    %cst_70 = arith.constant 1.000000e+00 : f32
    %258 = vector.broadcast %cst_70 : f32 to vector<8x32xf32>
    %259 = arith.addf %258, %257 : vector<8x32xf32>
    %260 = arith.divf %258, %259 : vector<8x32xf32>
    %261 = vector.extract_strided_slice %240 {offsets = [0, 0], sizes = [8, 32], strides = [1, 1]} : vector<8x128xf32> to vector<8x32xf32>
    %262 = arith.negf %261 : vector<8x32xf32>
    %263 = math.exp %262 : vector<8x32xf32>
    %cst_71 = arith.constant 1.000000e+00 : f32
    %264 = vector.broadcast %cst_71 : f32 to vector<8x32xf32>
    %265 = arith.addf %264, %263 : vector<8x32xf32>
    %266 = arith.divf %264, %265 : vector<8x32xf32>
    %267 = vector.extract_strided_slice %240 {offsets = [0, 32], sizes = [8, 32], strides = [1, 1]} : vector<8x128xf32> to vector<8x32xf32>
    %268 = arith.negf %267 : vector<8x32xf32>
    %269 = math.exp %268 : vector<8x32xf32>
    %cst_72 = arith.constant 1.000000e+00 : f32
    %270 = vector.broadcast %cst_72 : f32 to vector<8x32xf32>
    %271 = arith.addf %270, %269 : vector<8x32xf32>
    %272 = arith.divf %270, %271 : vector<8x32xf32>
    %273 = vector.extract_strided_slice %240 {offsets = [0, 64], sizes = [8, 32], strides = [1, 1]} : vector<8x128xf32> to vector<8x32xf32>
    %274 = math.tanh %273 : vector<8x32xf32>
    %275 = vector.extract_strided_slice %240 {offsets = [0, 96], sizes = [8, 32], strides = [1, 1]} : vector<8x128xf32> to vector<8x32xf32>
    %276 = arith.negf %275 : vector<8x32xf32>
    %277 = math.exp %276 : vector<8x32xf32>
    %cst_73 = arith.constant 1.000000e+00 : f32
    %278 = vector.broadcast %cst_73 : f32 to vector<8x32xf32>
    %279 = arith.addf %278, %277 : vector<8x32xf32>
    %280 = arith.divf %278, %279 : vector<8x32xf32>
    %281 = arith.mulf %252, %214 : vector<8x32xf32>
    %282 = arith.mulf %246, %254 : vector<8x32xf32>
    %283 = arith.addf %281, %282 : vector<8x32xf32>
    %284 = arith.mulf %272, %217 : vector<8x32xf32>
    %285 = arith.mulf %266, %274 : vector<8x32xf32>
    %286 = arith.addf %284, %285 : vector<8x32xf32>
    %287 = math.tanh %283 : vector<8x32xf32>
    %288 = arith.mulf %260, %287 : vector<8x32xf32>
    %289 = math.tanh %286 : vector<8x32xf32>
    %290 = arith.mulf %280, %289 : vector<8x32xf32>
    %291 = arith.index_cast %229 : i32 to index
    %c0_74 = arith.constant 0 : index
    %292 = vector.load %arg16[%291, %c0_74] : memref<64x32xf32, #tpu.memory_space<vmem>>, vector<8x32xf32>
    tpu.vector_store %arg16[%291, %c0_74], %288 {strides = array<i32>} : memref<64x32xf32, #tpu.memory_space<vmem>>, vector<8x32xf32>,
    %293 = arith.index_cast %232 : i32 to index
    %c0_75 = arith.constant 0 : index
    %294 = vector.load %arg17[%293, %c0_75] : memref<64x32xf32, #tpu.memory_space<vmem>>, vector<8x32xf32>
    tpu.vector_store %arg17[%293, %c0_75], %290 {strides = array<i32>} : memref<64x32xf32, #tpu.memory_space<vmem>>, vector<8x32xf32>,
    %295 = tpu.concatenate %288, %290 in 1 : vector<8x32xf32>, vector<8x32xf32> -> vector<8x64xf32>
    %c4_i32 = arith.constant 4 : i32
    %cst_76 = arith.constant dense<0.000000e+00> : vector<8x256xf32>
    %296 = tpu.matmul %295, %10, %cst_76 {dimension_numbers = #tpu.dot_dimension_numbers<[1], [0], [0], [1], [0, 0, 1, 1], [], []>} : vector<8x64xf32>, vector<64x256xf32>, vector<8x256xf32> -> vector<8x256xf32>
    %c8_i32_77 = arith.constant 8 : i32
    %297 = arith.muli %c4_i32, %c8_i32_77 : i32
    %298 = tpu.assume_multiple %297, 8 : i32
    %c7_i32_78 = arith.constant 7 : i32
    %299 = arith.subi %c7_i32_78, %c4_i32 : i32
    %c8_i32_79 = arith.constant 8 : i32
    %300 = arith.muli %299, %c8_i32_79 : i32
    %301 = tpu.assume_multiple %300, 8 : i32
    %302 = arith.index_cast %298 : i32 to index
    %c0_80 = arith.constant 0 : index
    %303 = vector.load %arg15[%302, %c0_80] : memref<64x256xf32, #tpu.memory_space<vmem>>, vector<8x128xf32>
    %304 = vector.extract_strided_slice %296 {offsets = [0, 0], sizes = [8, 128], strides = [1, 1]} : vector<8x256xf32> to vector<8x128xf32>
    %305 = arith.addf %303, %304 : vector<8x128xf32>
    %306 = arith.index_cast %301 : i32 to index
    %c128_81 = arith.constant 128 : index
    %307 = vector.load %arg15[%306, %c128_81] : memref<64x256xf32, #tpu.memory_space<vmem>>, vector<8x128xf32>
    %308 = vector.extract_strided_slice %296 {offsets = [0, 128], sizes = [8, 128], strides = [1, 1]} : vector<8x256xf32> to vector<8x128xf32>
    %309 = arith.addf %307, %308 : vector<8x128xf32>
    %310 = vector.extract_strided_slice %305 {offsets = [0, 0], sizes = [8, 32], strides = [1, 1]} : vector<8x128xf32> to vector<8x32xf32>
    %311 = arith.negf %310 : vector<8x32xf32>
    %312 = math.exp %311 : vector<8x32xf32>
    %cst_82 = arith.constant 1.000000e+00 : f32
    %313 = vector.broadcast %cst_82 : f32 to vector<8x32xf32>
    %314 = arith.addf %313, %312 : vector<8x32xf32>
    %315 = arith.divf %313, %314 : vector<8x32xf32>
    %316 = vector.extract_strided_slice %305 {offsets = [0, 32], sizes = [8, 32], strides = [1, 1]} : vector<8x128xf32> to vector<8x32xf32>
    %317 = arith.negf %316 : vector<8x32xf32>
    %318 = math.exp %317 : vector<8x32xf32>
    %cst_83 = arith.constant 1.000000e+00 : f32
    %319 = vector.broadcast %cst_83 : f32 to vector<8x32xf32>
    %320 = arith.addf %319, %318 : vector<8x32xf32>
    %321 = arith.divf %319, %320 : vector<8x32xf32>
    %322 = vector.extract_strided_slice %305 {offsets = [0, 64], sizes = [8, 32], strides = [1, 1]} : vector<8x128xf32> to vector<8x32xf32>
    %323 = math.tanh %322 : vector<8x32xf32>
    %324 = vector.extract_strided_slice %305 {offsets = [0, 96], sizes = [8, 32], strides = [1, 1]} : vector<8x128xf32> to vector<8x32xf32>
    %325 = arith.negf %324 : vector<8x32xf32>
    %326 = math.exp %325 : vector<8x32xf32>
    %cst_84 = arith.constant 1.000000e+00 : f32
    %327 = vector.broadcast %cst_84 : f32 to vector<8x32xf32>
    %328 = arith.addf %327, %326 : vector<8x32xf32>
    %329 = arith.divf %327, %328 : vector<8x32xf32>
    %330 = vector.extract_strided_slice %309 {offsets = [0, 0], sizes = [8, 32], strides = [1, 1]} : vector<8x128xf32> to vector<8x32xf32>
    %331 = arith.negf %330 : vector<8x32xf32>
    %332 = math.exp %331 : vector<8x32xf32>
    %cst_85 = arith.constant 1.000000e+00 : f32
    %333 = vector.broadcast %cst_85 : f32 to vector<8x32xf32>
    %334 = arith.addf %333, %332 : vector<8x32xf32>
    %335 = arith.divf %333, %334 : vector<8x32xf32>
    %336 = vector.extract_strided_slice %309 {offsets = [0, 32], sizes = [8, 32], strides = [1, 1]} : vector<8x128xf32> to vector<8x32xf32>
    %337 = arith.negf %336 : vector<8x32xf32>
    %338 = math.exp %337 : vector<8x32xf32>
    %cst_86 = arith.constant 1.000000e+00 : f32
    %339 = vector.broadcast %cst_86 : f32 to vector<8x32xf32>
    %340 = arith.addf %339, %338 : vector<8x32xf32>
    %341 = arith.divf %339, %340 : vector<8x32xf32>
    %342 = vector.extract_strided_slice %309 {offsets = [0, 64], sizes = [8, 32], strides = [1, 1]} : vector<8x128xf32> to vector<8x32xf32>
    %343 = math.tanh %342 : vector<8x32xf32>
    %344 = vector.extract_strided_slice %309 {offsets = [0, 96], sizes = [8, 32], strides = [1, 1]} : vector<8x128xf32> to vector<8x32xf32>
    %345 = arith.negf %344 : vector<8x32xf32>
    %346 = math.exp %345 : vector<8x32xf32>
    %cst_87 = arith.constant 1.000000e+00 : f32
    %347 = vector.broadcast %cst_87 : f32 to vector<8x32xf32>
    %348 = arith.addf %347, %346 : vector<8x32xf32>
    %349 = arith.divf %347, %348 : vector<8x32xf32>
    %350 = arith.mulf %321, %283 : vector<8x32xf32>
    %351 = arith.mulf %315, %323 : vector<8x32xf32>
    %352 = arith.addf %350, %351 : vector<8x32xf32>
    %353 = arith.mulf %341, %286 : vector<8x32xf32>
    %354 = arith.mulf %335, %343 : vector<8x32xf32>
    %355 = arith.addf %353, %354 : vector<8x32xf32>
    %356 = math.tanh %352 : vector<8x32xf32>
    %357 = arith.mulf %329, %356 : vector<8x32xf32>
    %358 = math.tanh %355 : vector<8x32xf32>
    %359 = arith.mulf %349, %358 : vector<8x32xf32>
    %360 = arith.index_cast %298 : i32 to index
    %c0_88 = arith.constant 0 : index
    %361 = vector.load %arg16[%360, %c0_88] : memref<64x32xf32, #tpu.memory_space<vmem>>, vector<8x32xf32>
    tpu.vector_store %arg16[%360, %c0_88], %357 {strides = array<i32>} : memref<64x32xf32, #tpu.memory_space<vmem>>, vector<8x32xf32>,
    %362 = arith.index_cast %301 : i32 to index
    %c0_89 = arith.constant 0 : index
    %363 = vector.load %arg17[%362, %c0_89] : memref<64x32xf32, #tpu.memory_space<vmem>>, vector<8x32xf32>
    tpu.vector_store %arg17[%362, %c0_89], %359 {strides = array<i32>} : memref<64x32xf32, #tpu.memory_space<vmem>>, vector<8x32xf32>,
    %364 = tpu.concatenate %357, %359 in 1 : vector<8x32xf32>, vector<8x32xf32> -> vector<8x64xf32>
    %c5_i32 = arith.constant 5 : i32
    %cst_90 = arith.constant dense<0.000000e+00> : vector<8x256xf32>
    %365 = tpu.matmul %364, %10, %cst_90 {dimension_numbers = #tpu.dot_dimension_numbers<[1], [0], [0], [1], [0, 0, 1, 1], [], []>} : vector<8x64xf32>, vector<64x256xf32>, vector<8x256xf32> -> vector<8x256xf32>
    %c8_i32_91 = arith.constant 8 : i32
    %366 = arith.muli %c5_i32, %c8_i32_91 : i32
    %367 = tpu.assume_multiple %366, 8 : i32
    %c7_i32_92 = arith.constant 7 : i32
    %368 = arith.subi %c7_i32_92, %c5_i32 : i32
    %c8_i32_93 = arith.constant 8 : i32
    %369 = arith.muli %368, %c8_i32_93 : i32
    %370 = tpu.assume_multiple %369, 8 : i32
    %371 = arith.index_cast %367 : i32 to index
    %c0_94 = arith.constant 0 : index
    %372 = vector.load %arg15[%371, %c0_94] : memref<64x256xf32, #tpu.memory_space<vmem>>, vector<8x128xf32>
    %373 = vector.extract_strided_slice %365 {offsets = [0, 0], sizes = [8, 128], strides = [1, 1]} : vector<8x256xf32> to vector<8x128xf32>
    %374 = arith.addf %372, %373 : vector<8x128xf32>
    %375 = arith.index_cast %370 : i32 to index
    %c128_95 = arith.constant 128 : index
    %376 = vector.load %arg15[%375, %c128_95] : memref<64x256xf32, #tpu.memory_space<vmem>>, vector<8x128xf32>
    %377 = vector.extract_strided_slice %365 {offsets = [0, 128], sizes = [8, 128], strides = [1, 1]} : vector<8x256xf32> to vector<8x128xf32>
    %378 = arith.addf %376, %377 : vector<8x128xf32>
    %379 = vector.extract_strided_slice %374 {offsets = [0, 0], sizes = [8, 32], strides = [1, 1]} : vector<8x128xf32> to vector<8x32xf32>
    %380 = arith.negf %379 : vector<8x32xf32>
    %381 = math.exp %380 : vector<8x32xf32>
    %cst_96 = arith.constant 1.000000e+00 : f32
    %382 = vector.broadcast %cst_96 : f32 to vector<8x32xf32>
    %383 = arith.addf %382, %381 : vector<8x32xf32>
    %384 = arith.divf %382, %383 : vector<8x32xf32>
    %385 = vector.extract_strided_slice %374 {offsets = [0, 32], sizes = [8, 32], strides = [1, 1]} : vector<8x128xf32> to vector<8x32xf32>
    %386 = arith.negf %385 : vector<8x32xf32>
    %387 = math.exp %386 : vector<8x32xf32>
    %cst_97 = arith.constant 1.000000e+00 : f32
    %388 = vector.broadcast %cst_97 : f32 to vector<8x32xf32>
    %389 = arith.addf %388, %387 : vector<8x32xf32>
    %390 = arith.divf %388, %389 : vector<8x32xf32>
    %391 = vector.extract_strided_slice %374 {offsets = [0, 64], sizes = [8, 32], strides = [1, 1]} : vector<8x128xf32> to vector<8x32xf32>
    %392 = math.tanh %391 : vector<8x32xf32>
    %393 = vector.extract_strided_slice %374 {offsets = [0, 96], sizes = [8, 32], strides = [1, 1]} : vector<8x128xf32> to vector<8x32xf32>
    %394 = arith.negf %393 : vector<8x32xf32>
    %395 = math.exp %394 : vector<8x32xf32>
    %cst_98 = arith.constant 1.000000e+00 : f32
    %396 = vector.broadcast %cst_98 : f32 to vector<8x32xf32>
    %397 = arith.addf %396, %395 : vector<8x32xf32>
    %398 = arith.divf %396, %397 : vector<8x32xf32>
    %399 = vector.extract_strided_slice %378 {offsets = [0, 0], sizes = [8, 32], strides = [1, 1]} : vector<8x128xf32> to vector<8x32xf32>
    %400 = arith.negf %399 : vector<8x32xf32>
    %401 = math.exp %400 : vector<8x32xf32>
    %cst_99 = arith.constant 1.000000e+00 : f32
    %402 = vector.broadcast %cst_99 : f32 to vector<8x32xf32>
    %403 = arith.addf %402, %401 : vector<8x32xf32>
    %404 = arith.divf %402, %403 : vector<8x32xf32>
    %405 = vector.extract_strided_slice %378 {offsets = [0, 32], sizes = [8, 32], strides = [1, 1]} : vector<8x128xf32> to vector<8x32xf32>
    %406 = arith.negf %405 : vector<8x32xf32>
    %407 = math.exp %406 : vector<8x32xf32>
    %cst_100 = arith.constant 1.000000e+00 : f32
    %408 = vector.broadcast %cst_100 : f32 to vector<8x32xf32>
    %409 = arith.addf %408, %407 : vector<8x32xf32>
    %410 = arith.divf %408, %409 : vector<8x32xf32>
    %411 = vector.extract_strided_slice %378 {offsets = [0, 64], sizes = [8, 32], strides = [1, 1]} : vector<8x128xf32> to vector<8x32xf32>
    %412 = math.tanh %411 : vector<8x32xf32>
    %413 = vector.extract_strided_slice %378 {offsets = [0, 96], sizes = [8, 32], strides = [1, 1]} : vector<8x128xf32> to vector<8x32xf32>
    %414 = arith.negf %413 : vector<8x32xf32>
    %415 = math.exp %414 : vector<8x32xf32>
    %cst_101 = arith.constant 1.000000e+00 : f32
    %416 = vector.broadcast %cst_101 : f32 to vector<8x32xf32>
    %417 = arith.addf %416, %415 : vector<8x32xf32>
    %418 = arith.divf %416, %417 : vector<8x32xf32>
    %419 = arith.mulf %390, %352 : vector<8x32xf32>
    %420 = arith.mulf %384, %392 : vector<8x32xf32>
    %421 = arith.addf %419, %420 : vector<8x32xf32>
    %422 = arith.mulf %410, %355 : vector<8x32xf32>
    %423 = arith.mulf %404, %412 : vector<8x32xf32>
    %424 = arith.addf %422, %423 : vector<8x32xf32>
    %425 = math.tanh %421 : vector<8x32xf32>
    %426 = arith.mulf %398, %425 : vector<8x32xf32>
    %427 = math.tanh %424 : vector<8x32xf32>
    %428 = arith.mulf %418, %427 : vector<8x32xf32>
    %429 = arith.index_cast %367 : i32 to index
    %c0_102 = arith.constant 0 : index
    %430 = vector.load %arg16[%429, %c0_102] : memref<64x32xf32, #tpu.memory_space<vmem>>, vector<8x32xf32>
    tpu.vector_store %arg16[%429, %c0_102], %426 {strides = array<i32>} : memref<64x32xf32, #tpu.memory_space<vmem>>, vector<8x32xf32>,
    %431 = arith.index_cast %370 : i32 to index
    %c0_103 = arith.constant 0 : index
    %432 = vector.load %arg17[%431, %c0_103] : memref<64x32xf32, #tpu.memory_space<vmem>>, vector<8x32xf32>
    tpu.vector_store %arg17[%431, %c0_103], %428 {strides = array<i32>} : memref<64x32xf32, #tpu.memory_space<vmem>>, vector<8x32xf32>,
    %433 = tpu.concatenate %426, %428 in 1 : vector<8x32xf32>, vector<8x32xf32> -> vector<8x64xf32>
    %c6_i32 = arith.constant 6 : i32
    %cst_104 = arith.constant dense<0.000000e+00> : vector<8x256xf32>
    %434 = tpu.matmul %433, %10, %cst_104 {dimension_numbers = #tpu.dot_dimension_numbers<[1], [0], [0], [1], [0, 0, 1, 1], [], []>} : vector<8x64xf32>, vector<64x256xf32>, vector<8x256xf32> -> vector<8x256xf32>
    %c8_i32_105 = arith.constant 8 : i32
    %435 = arith.muli %c6_i32, %c8_i32_105 : i32
    %436 = tpu.assume_multiple %435, 8 : i32
    %c7_i32_106 = arith.constant 7 : i32
    %437 = arith.subi %c7_i32_106, %c6_i32 : i32
    %c8_i32_107 = arith.constant 8 : i32
    %438 = arith.muli %437, %c8_i32_107 : i32
    %439 = tpu.assume_multiple %438, 8 : i32
    %440 = arith.index_cast %436 : i32 to index
    %c0_108 = arith.constant 0 : index
    %441 = vector.load %arg15[%440, %c0_108] : memref<64x256xf32, #tpu.memory_space<vmem>>, vector<8x128xf32>
    %442 = vector.extract_strided_slice %434 {offsets = [0, 0], sizes = [8, 128], strides = [1, 1]} : vector<8x256xf32> to vector<8x128xf32>
    %443 = arith.addf %441, %442 : vector<8x128xf32>
    %444 = arith.index_cast %439 : i32 to index
    %c128_109 = arith.constant 128 : index
    %445 = vector.load %arg15[%444, %c128_109] : memref<64x256xf32, #tpu.memory_space<vmem>>, vector<8x128xf32>
    %446 = vector.extract_strided_slice %434 {offsets = [0, 128], sizes = [8, 128], strides = [1, 1]} : vector<8x256xf32> to vector<8x128xf32>
    %447 = arith.addf %445, %446 : vector<8x128xf32>
    %448 = vector.extract_strided_slice %443 {offsets = [0, 0], sizes = [8, 32], strides = [1, 1]} : vector<8x128xf32> to vector<8x32xf32>
    %449 = arith.negf %448 : vector<8x32xf32>
    %450 = math.exp %449 : vector<8x32xf32>
    %cst_110 = arith.constant 1.000000e+00 : f32
    %451 = vector.broadcast %cst_110 : f32 to vector<8x32xf32>
    %452 = arith.addf %451, %450 : vector<8x32xf32>
    %453 = arith.divf %451, %452 : vector<8x32xf32>
    %454 = vector.extract_strided_slice %443 {offsets = [0, 32], sizes = [8, 32], strides = [1, 1]} : vector<8x128xf32> to vector<8x32xf32>
    %455 = arith.negf %454 : vector<8x32xf32>
    %456 = math.exp %455 : vector<8x32xf32>
    %cst_111 = arith.constant 1.000000e+00 : f32
    %457 = vector.broadcast %cst_111 : f32 to vector<8x32xf32>
    %458 = arith.addf %457, %456 : vector<8x32xf32>
    %459 = arith.divf %457, %458 : vector<8x32xf32>
    %460 = vector.extract_strided_slice %443 {offsets = [0, 64], sizes = [8, 32], strides = [1, 1]} : vector<8x128xf32> to vector<8x32xf32>
    %461 = math.tanh %460 : vector<8x32xf32>
    %462 = vector.extract_strided_slice %443 {offsets = [0, 96], sizes = [8, 32], strides = [1, 1]} : vector<8x128xf32> to vector<8x32xf32>
    %463 = arith.negf %462 : vector<8x32xf32>
    %464 = math.exp %463 : vector<8x32xf32>
    %cst_112 = arith.constant 1.000000e+00 : f32
    %465 = vector.broadcast %cst_112 : f32 to vector<8x32xf32>
    %466 = arith.addf %465, %464 : vector<8x32xf32>
    %467 = arith.divf %465, %466 : vector<8x32xf32>
    %468 = vector.extract_strided_slice %447 {offsets = [0, 0], sizes = [8, 32], strides = [1, 1]} : vector<8x128xf32> to vector<8x32xf32>
    %469 = arith.negf %468 : vector<8x32xf32>
    %470 = math.exp %469 : vector<8x32xf32>
    %cst_113 = arith.constant 1.000000e+00 : f32
    %471 = vector.broadcast %cst_113 : f32 to vector<8x32xf32>
    %472 = arith.addf %471, %470 : vector<8x32xf32>
    %473 = arith.divf %471, %472 : vector<8x32xf32>
    %474 = vector.extract_strided_slice %447 {offsets = [0, 32], sizes = [8, 32], strides = [1, 1]} : vector<8x128xf32> to vector<8x32xf32>
    %475 = arith.negf %474 : vector<8x32xf32>
    %476 = math.exp %475 : vector<8x32xf32>
    %cst_114 = arith.constant 1.000000e+00 : f32
    %477 = vector.broadcast %cst_114 : f32 to vector<8x32xf32>
    %478 = arith.addf %477, %476 : vector<8x32xf32>
    %479 = arith.divf %477, %478 : vector<8x32xf32>
    %480 = vector.extract_strided_slice %447 {offsets = [0, 64], sizes = [8, 32], strides = [1, 1]} : vector<8x128xf32> to vector<8x32xf32>
    %481 = math.tanh %480 : vector<8x32xf32>
    %482 = vector.extract_strided_slice %447 {offsets = [0, 96], sizes = [8, 32], strides = [1, 1]} : vector<8x128xf32> to vector<8x32xf32>
    %483 = arith.negf %482 : vector<8x32xf32>
    %484 = math.exp %483 : vector<8x32xf32>
    %cst_115 = arith.constant 1.000000e+00 : f32
    %485 = vector.broadcast %cst_115 : f32 to vector<8x32xf32>
    %486 = arith.addf %485, %484 : vector<8x32xf32>
    %487 = arith.divf %485, %486 : vector<8x32xf32>
    %488 = arith.mulf %459, %421 : vector<8x32xf32>
    %489 = arith.mulf %453, %461 : vector<8x32xf32>
    %490 = arith.addf %488, %489 : vector<8x32xf32>
    %491 = arith.mulf %479, %424 : vector<8x32xf32>
    %492 = arith.mulf %473, %481 : vector<8x32xf32>
    %493 = arith.addf %491, %492 : vector<8x32xf32>
    %494 = math.tanh %490 : vector<8x32xf32>
    %495 = arith.mulf %467, %494 : vector<8x32xf32>
    %496 = math.tanh %493 : vector<8x32xf32>
    %497 = arith.mulf %487, %496 : vector<8x32xf32>
    %498 = arith.index_cast %436 : i32 to index
    %c0_116 = arith.constant 0 : index
    %499 = vector.load %arg16[%498, %c0_116] : memref<64x32xf32, #tpu.memory_space<vmem>>, vector<8x32xf32>
    tpu.vector_store %arg16[%498, %c0_116], %495 {strides = array<i32>} : memref<64x32xf32, #tpu.memory_space<vmem>>, vector<8x32xf32>,
    %500 = arith.index_cast %439 : i32 to index
    %c0_117 = arith.constant 0 : index
    %501 = vector.load %arg17[%500, %c0_117] : memref<64x32xf32, #tpu.memory_space<vmem>>, vector<8x32xf32>
    tpu.vector_store %arg17[%500, %c0_117], %497 {strides = array<i32>} : memref<64x32xf32, #tpu.memory_space<vmem>>, vector<8x32xf32>,
    %502 = tpu.concatenate %495, %497 in 1 : vector<8x32xf32>, vector<8x32xf32> -> vector<8x64xf32>
    %c7_i32_118 = arith.constant 7 : i32
    %cst_119 = arith.constant dense<0.000000e+00> : vector<8x256xf32>
    %503 = tpu.matmul %502, %10, %cst_119 {dimension_numbers = #tpu.dot_dimension_numbers<[1], [0], [0], [1], [0, 0, 1, 1], [], []>} : vector<8x64xf32>, vector<64x256xf32>, vector<8x256xf32> -> vector<8x256xf32>
    %c8_i32_120 = arith.constant 8 : i32
    %504 = arith.muli %c7_i32_118, %c8_i32_120 : i32
    %505 = tpu.assume_multiple %504, 8 : i32
    %c7_i32_121 = arith.constant 7 : i32
    %506 = arith.subi %c7_i32_121, %c7_i32_118 : i32
    %c8_i32_122 = arith.constant 8 : i32
    %507 = arith.muli %506, %c8_i32_122 : i32
    %508 = tpu.assume_multiple %507, 8 : i32
    %509 = arith.index_cast %505 : i32 to index
    %c0_123 = arith.constant 0 : index
    %510 = vector.load %arg15[%509, %c0_123] : memref<64x256xf32, #tpu.memory_space<vmem>>, vector<8x128xf32>
    %511 = vector.extract_strided_slice %503 {offsets = [0, 0], sizes = [8, 128], strides = [1, 1]} : vector<8x256xf32> to vector<8x128xf32>
    %512 = arith.addf %510, %511 : vector<8x128xf32>
    %513 = arith.index_cast %508 : i32 to index
    %c128_124 = arith.constant 128 : index
    %514 = vector.load %arg15[%513, %c128_124] : memref<64x256xf32, #tpu.memory_space<vmem>>, vector<8x128xf32>
    %515 = vector.extract_strided_slice %503 {offsets = [0, 128], sizes = [8, 128], strides = [1, 1]} : vector<8x256xf32> to vector<8x128xf32>
    %516 = arith.addf %514, %515 : vector<8x128xf32>
    %517 = vector.extract_strided_slice %512 {offsets = [0, 0], sizes = [8, 32], strides = [1, 1]} : vector<8x128xf32> to vector<8x32xf32>
    %518 = arith.negf %517 : vector<8x32xf32>
    %519 = math.exp %518 : vector<8x32xf32>
    %cst_125 = arith.constant 1.000000e+00 : f32
    %520 = vector.broadcast %cst_125 : f32 to vector<8x32xf32>
    %521 = arith.addf %520, %519 : vector<8x32xf32>
    %522 = arith.divf %520, %521 : vector<8x32xf32>
    %523 = vector.extract_strided_slice %512 {offsets = [0, 32], sizes = [8, 32], strides = [1, 1]} : vector<8x128xf32> to vector<8x32xf32>
    %524 = arith.negf %523 : vector<8x32xf32>
    %525 = math.exp %524 : vector<8x32xf32>
    %cst_126 = arith.constant 1.000000e+00 : f32
    %526 = vector.broadcast %cst_126 : f32 to vector<8x32xf32>
    %527 = arith.addf %526, %525 : vector<8x32xf32>
    %528 = arith.divf %526, %527 : vector<8x32xf32>
    %529 = vector.extract_strided_slice %512 {offsets = [0, 64], sizes = [8, 32], strides = [1, 1]} : vector<8x128xf32> to vector<8x32xf32>
    %530 = math.tanh %529 : vector<8x32xf32>
    %531 = vector.extract_strided_slice %512 {offsets = [0, 96], sizes = [8, 32], strides = [1, 1]} : vector<8x128xf32> to vector<8x32xf32>
    %532 = arith.negf %531 : vector<8x32xf32>
    %533 = math.exp %532 : vector<8x32xf32>
    %cst_127 = arith.constant 1.000000e+00 : f32
    %534 = vector.broadcast %cst_127 : f32 to vector<8x32xf32>
    %535 = arith.addf %534, %533 : vector<8x32xf32>
    %536 = arith.divf %534, %535 : vector<8x32xf32>
    %537 = vector.extract_strided_slice %516 {offsets = [0, 0], sizes = [8, 32], strides = [1, 1]} : vector<8x128xf32> to vector<8x32xf32>
    %538 = arith.negf %537 : vector<8x32xf32>
    %539 = math.exp %538 : vector<8x32xf32>
    %cst_128 = arith.constant 1.000000e+00 : f32
    %540 = vector.broadcast %cst_128 : f32 to vector<8x32xf32>
    %541 = arith.addf %540, %539 : vector<8x32xf32>
    %542 = arith.divf %540, %541 : vector<8x32xf32>
    %543 = vector.extract_strided_slice %516 {offsets = [0, 32], sizes = [8, 32], strides = [1, 1]} : vector<8x128xf32> to vector<8x32xf32>
    %544 = arith.negf %543 : vector<8x32xf32>
    %545 = math.exp %544 : vector<8x32xf32>
    %cst_129 = arith.constant 1.000000e+00 : f32
    %546 = vector.broadcast %cst_129 : f32 to vector<8x32xf32>
    %547 = arith.addf %546, %545 : vector<8x32xf32>
    %548 = arith.divf %546, %547 : vector<8x32xf32>
    %549 = vector.extract_strided_slice %516 {offsets = [0, 64], sizes = [8, 32], strides = [1, 1]} : vector<8x128xf32> to vector<8x32xf32>
    %550 = math.tanh %549 : vector<8x32xf32>
    %551 = vector.extract_strided_slice %516 {offsets = [0, 96], sizes = [8, 32], strides = [1, 1]} : vector<8x128xf32> to vector<8x32xf32>
    %552 = arith.negf %551 : vector<8x32xf32>
    %553 = math.exp %552 : vector<8x32xf32>
    %cst_130 = arith.constant 1.000000e+00 : f32
    %554 = vector.broadcast %cst_130 : f32 to vector<8x32xf32>
    %555 = arith.addf %554, %553 : vector<8x32xf32>
    %556 = arith.divf %554, %555 : vector<8x32xf32>
    %557 = arith.mulf %528, %490 : vector<8x32xf32>
    %558 = arith.mulf %522, %530 : vector<8x32xf32>
    %559 = arith.addf %557, %558 : vector<8x32xf32>
    %560 = arith.mulf %548, %493 : vector<8x32xf32>
    %561 = arith.mulf %542, %550 : vector<8x32xf32>
    %562 = arith.addf %560, %561 : vector<8x32xf32>
    %563 = math.tanh %559 : vector<8x32xf32>
    %564 = arith.mulf %536, %563 : vector<8x32xf32>
    %565 = math.tanh %562 : vector<8x32xf32>
    %566 = arith.mulf %556, %565 : vector<8x32xf32>
    %567 = arith.index_cast %505 : i32 to index
    %c0_131 = arith.constant 0 : index
    %568 = vector.load %arg16[%567, %c0_131] : memref<64x32xf32, #tpu.memory_space<vmem>>, vector<8x32xf32>
    tpu.vector_store %arg16[%567, %c0_131], %564 {strides = array<i32>} : memref<64x32xf32, #tpu.memory_space<vmem>>, vector<8x32xf32>,
    %569 = arith.index_cast %508 : i32 to index
    %c0_132 = arith.constant 0 : index
    %570 = vector.load %arg17[%569, %c0_132] : memref<64x32xf32, #tpu.memory_space<vmem>>, vector<8x32xf32>
    tpu.vector_store %arg17[%569, %c0_132], %566 {strides = array<i32>} : memref<64x32xf32, #tpu.memory_space<vmem>>, vector<8x32xf32>,
    %571 = tpu.concatenate %564, %566 in 1 : vector<8x32xf32>, vector<8x32xf32> -> vector<8x64xf32>
    %c8_i32_133 = arith.constant 8 : i32
    %572 = vector.extract_strided_slice %571 {offsets = [0, 0], sizes = [8, 32], strides = [1, 1]} : vector<8x64xf32> to vector<8x32xf32>
    %c0_134 = arith.constant 0 : index
    %c0_135 = arith.constant 0 : index
    %c0_136 = arith.constant 0 : index
    %573 = vector.load %arg13[%c0_134, %c0_135, %c0_136] : memref<4x8x32xf32, #tpu.memory_space<vmem>>, vector<1x8x32xf32>
    %574 = vector.shape_cast %573 : vector<1x8x32xf32> to vector<8x32xf32>
    %575 = vector.shape_cast %572 : vector<8x32xf32> to vector<1x8x32xf32>
    tpu.vector_store %arg13[%c0_134, %c0_135, %c0_136], %575 {strides = array<i32>} : memref<4x8x32xf32, #tpu.memory_space<vmem>>, vector<1x8x32xf32>,
    %576 = vector.extract_strided_slice %571 {offsets = [0, 32], sizes = [8, 32], strides = [1, 1]} : vector<8x64xf32> to vector<8x32xf32>
    %c1_137 = arith.constant 1 : index
    %c0_138 = arith.constant 0 : index
    %c0_139 = arith.constant 0 : index
    %577 = vector.load %arg13[%c1_137, %c0_138, %c0_139] : memref<4x8x32xf32, #tpu.memory_space<vmem>>, vector<1x8x32xf32>
    %578 = vector.shape_cast %577 : vector<1x8x32xf32> to vector<8x32xf32>
    %579 = vector.shape_cast %576 : vector<8x32xf32> to vector<1x8x32xf32>
    tpu.vector_store %arg13[%c1_137, %c0_138, %c0_139], %579 {strides = array<i32>} : memref<4x8x32xf32, #tpu.memory_space<vmem>>, vector<1x8x32xf32>,
    %c0_140 = arith.constant 0 : index
    %c0_141 = arith.constant 0 : index
    %c0_142 = arith.constant 0 : index
    %580 = vector.load %arg14[%c0_140, %c0_141, %c0_142] : memref<4x8x32xf32, #tpu.memory_space<vmem>>, vector<1x8x32xf32>
    %581 = vector.shape_cast %580 : vector<1x8x32xf32> to vector<8x32xf32>
    %582 = vector.shape_cast %559 : vector<8x32xf32> to vector<1x8x32xf32>
    tpu.vector_store %arg14[%c0_140, %c0_141, %c0_142], %582 {strides = array<i32>} : memref<4x8x32xf32, #tpu.memory_space<vmem>>, vector<1x8x32xf32>,
    %c1_143 = arith.constant 1 : index
    %c0_144 = arith.constant 0 : index
    %c0_145 = arith.constant 0 : index
    %583 = vector.load %arg14[%c1_143, %c0_144, %c0_145] : memref<4x8x32xf32, #tpu.memory_space<vmem>>, vector<1x8x32xf32>
    %584 = vector.shape_cast %583 : vector<1x8x32xf32> to vector<8x32xf32>
    %585 = vector.shape_cast %562 : vector<8x32xf32> to vector<1x8x32xf32>
    tpu.vector_store %arg14[%c1_143, %c0_144, %c0_145], %585 {strides = array<i32>} : memref<4x8x32xf32, #tpu.memory_space<vmem>>, vector<1x8x32xf32>,
    %c0_146 = arith.constant 0 : index
    %c0_147 = arith.constant 0 : index
    %586 = vector.load %arg16[%c0_146, %c0_147] : memref<64x32xf32, #tpu.memory_space<vmem>>, vector<64x32xf32>
    %c0_148 = arith.constant 0 : index
    %c0_149 = arith.constant 0 : index
    %587 = vector.load %arg17[%c0_148, %c0_149] : memref<64x32xf32, #tpu.memory_space<vmem>>, vector<64x32xf32>
    %588 = tpu.concatenate %586, %587 in 1 : vector<64x32xf32>, vector<64x32xf32> -> vector<64x64xf32>
    %c1_150 = arith.constant 1 : index
    %c0_151 = arith.constant 0 : index
    %c0_152 = arith.constant 0 : index
    %589 = vector.load %arg1[%c1_150, %c0_151, %c0_152] : memref<2x64x256xf32, #tpu.memory_space<vmem>>, vector<1x64x256xf32>
    %590 = vector.shape_cast %589 : vector<1x64x256xf32> to vector<64x256xf32>
    %cst_153 = arith.constant dense<0.000000e+00> : vector<64x256xf32>
    %591 = tpu.matmul %588, %590, %cst_153 {dimension_numbers = #tpu.dot_dimension_numbers<[1], [0], [0], [1], [0, 0, 1, 1], [], []>} : vector<64x64xf32>, vector<64x256xf32>, vector<64x256xf32> -> vector<64x256xf32>
    %c1_154 = arith.constant 1 : index
    %c0_155 = arith.constant 0 : index
    %c0_156 = arith.constant 0 : index
    %592 = vector.load %arg3[%c1_154, %c0_155, %c0_156] : memref<2x1x256xf32, #tpu.memory_space<vmem>>, vector<1x1x256xf32>
    %593 = vector.shape_cast %592 : vector<1x1x256xf32> to vector<1x256xf32>
    %594 = vector.broadcast %593 : vector<1x256xf32> to vector<64x256xf32>
    %595 = arith.addf %591, %594 : vector<64x256xf32>
    %c0_157 = arith.constant 0 : index
    %c0_158 = arith.constant 0 : index
    %596 = vector.load %arg15[%c0_157, %c0_158] : memref<64x256xf32, #tpu.memory_space<vmem>>, vector<64x256xf32>
    tpu.vector_store %arg15[%c0_157, %c0_158], %595 {strides = array<i32>} : memref<64x256xf32, #tpu.memory_space<vmem>>, vector<64x256xf32>,
    %c1_159 = arith.constant 1 : index
    %c0_160 = arith.constant 0 : index
    %c0_161 = arith.constant 0 : index
    %597 = vector.load %arg2[%c1_159, %c0_160, %c0_161] : memref<2x64x256xf32, #tpu.memory_space<vmem>>, vector<1x64x256xf32>
    %598 = vector.shape_cast %597 : vector<1x64x256xf32> to vector<64x256xf32>
    %c2 = arith.constant 2 : index
    %c0_162 = arith.constant 0 : index
    %c0_163 = arith.constant 0 : index
    %599 = vector.load %arg4[%c2, %c0_162, %c0_163] : memref<4x8x32xf32, #tpu.memory_space<vmem>>, vector<1x8x32xf32>
    %600 = vector.shape_cast %599 : vector<1x8x32xf32> to vector<8x32xf32>
    %c3 = arith.constant 3 : index
    %c0_164 = arith.constant 0 : index
    %c0_165 = arith.constant 0 : index
    %601 = vector.load %arg4[%c3, %c0_164, %c0_165] : memref<4x8x32xf32, #tpu.memory_space<vmem>>, vector<1x8x32xf32>
    %602 = vector.shape_cast %601 : vector<1x8x32xf32> to vector<8x32xf32>
    %603 = tpu.concatenate %600, %602 in 1 : vector<8x32xf32>, vector<8x32xf32> -> vector<8x64xf32>
    %c2_166 = arith.constant 2 : index
    %c0_167 = arith.constant 0 : index
    %c0_168 = arith.constant 0 : index
    %604 = vector.load %arg5[%c2_166, %c0_167, %c0_168] : memref<4x8x32xf32, #tpu.memory_space<vmem>>, vector<1x8x32xf32>
    %605 = vector.shape_cast %604 : vector<1x8x32xf32> to vector<8x32xf32>
    %c3_169 = arith.constant 3 : index
    %c0_170 = arith.constant 0 : index
    %c0_171 = arith.constant 0 : index
    %606 = vector.load %arg5[%c3_169, %c0_170, %c0_171] : memref<4x8x32xf32, #tpu.memory_space<vmem>>, vector<1x8x32xf32>
    %607 = vector.shape_cast %606 : vector<1x8x32xf32> to vector<8x32xf32>
    %c0_i32_172 = arith.constant 0 : i32
    %cst_173 = arith.constant dense<0.000000e+00> : vector<8x256xf32>
    %608 = tpu.matmul %603, %598, %cst_173 {dimension_numbers = #tpu.dot_dimension_numbers<[1], [0], [0], [1], [0, 0, 1, 1], [], []>} : vector<8x64xf32>, vector<64x256xf32>, vector<8x256xf32> -> vector<8x256xf32>
    %c8_i32_174 = arith.constant 8 : i32
    %609 = arith.muli %c0_i32_172, %c8_i32_174 : i32
    %610 = tpu.assume_multiple %609, 8 : i32
    %c7_i32_175 = arith.constant 7 : i32
    %611 = arith.subi %c7_i32_175, %c0_i32_172 : i32
    %c8_i32_176 = arith.constant 8 : i32
    %612 = arith.muli %611, %c8_i32_176 : i32
    %613 = tpu.assume_multiple %612, 8 : i32
    %614 = arith.index_cast %610 : i32 to index
    %c0_177 = arith.constant 0 : index
    %615 = vector.load %arg15[%614, %c0_177] : memref<64x256xf32, #tpu.memory_space<vmem>>, vector<8x128xf32>
    %616 = vector.extract_strided_slice %608 {offsets = [0, 0], sizes = [8, 128], strides = [1, 1]} : vector<8x256xf32> to vector<8x128xf32>
    %617 = arith.addf %615, %616 : vector<8x128xf32>
    %618 = arith.index_cast %613 : i32 to index
    %c128_178 = arith.constant 128 : index
    %619 = vector.load %arg15[%618, %c128_178] : memref<64x256xf32, #tpu.memory_space<vmem>>, vector<8x128xf32>
    %620 = vector.extract_strided_slice %608 {offsets = [0, 128], sizes = [8, 128], strides = [1, 1]} : vector<8x256xf32> to vector<8x128xf32>
    %621 = arith.addf %619, %620 : vector<8x128xf32>
    %622 = vector.extract_strided_slice %617 {offsets = [0, 0], sizes = [8, 32], strides = [1, 1]} : vector<8x128xf32> to vector<8x32xf32>
    %623 = arith.negf %622 : vector<8x32xf32>
    %624 = math.exp %623 : vector<8x32xf32>
    %cst_179 = arith.constant 1.000000e+00 : f32
    %625 = vector.broadcast %cst_179 : f32 to vector<8x32xf32>
    %626 = arith.addf %625, %624 : vector<8x32xf32>
    %627 = arith.divf %625, %626 : vector<8x32xf32>
    %628 = vector.extract_strided_slice %617 {offsets = [0, 32], sizes = [8, 32], strides = [1, 1]} : vector<8x128xf32> to vector<8x32xf32>
    %629 = arith.negf %628 : vector<8x32xf32>
    %630 = math.exp %629 : vector<8x32xf32>
    %cst_180 = arith.constant 1.000000e+00 : f32
    %631 = vector.broadcast %cst_180 : f32 to vector<8x32xf32>
    %632 = arith.addf %631, %630 : vector<8x32xf32>
    %633 = arith.divf %631, %632 : vector<8x32xf32>
    %634 = vector.extract_strided_slice %617 {offsets = [0, 64], sizes = [8, 32], strides = [1, 1]} : vector<8x128xf32> to vector<8x32xf32>
    %635 = math.tanh %634 : vector<8x32xf32>
    %636 = vector.extract_strided_slice %617 {offsets = [0, 96], sizes = [8, 32], strides = [1, 1]} : vector<8x128xf32> to vector<8x32xf32>
    %637 = arith.negf %636 : vector<8x32xf32>
    %638 = math.exp %637 : vector<8x32xf32>
    %cst_181 = arith.constant 1.000000e+00 : f32
    %639 = vector.broadcast %cst_181 : f32 to vector<8x32xf32>
    %640 = arith.addf %639, %638 : vector<8x32xf32>
    %641 = arith.divf %639, %640 : vector<8x32xf32>
    %642 = vector.extract_strided_slice %621 {offsets = [0, 0], sizes = [8, 32], strides = [1, 1]} : vector<8x128xf32> to vector<8x32xf32>
    %643 = arith.negf %642 : vector<8x32xf32>
    %644 = math.exp %643 : vector<8x32xf32>
    %cst_182 = arith.constant 1.000000e+00 : f32
    %645 = vector.broadcast %cst_182 : f32 to vector<8x32xf32>
    %646 = arith.addf %645, %644 : vector<8x32xf32>
    %647 = arith.divf %645, %646 : vector<8x32xf32>
    %648 = vector.extract_strided_slice %621 {offsets = [0, 32], sizes = [8, 32], strides = [1, 1]} : vector<8x128xf32> to vector<8x32xf32>
    %649 = arith.negf %648 : vector<8x32xf32>
    %650 = math.exp %649 : vector<8x32xf32>
    %cst_183 = arith.constant 1.000000e+00 : f32
    %651 = vector.broadcast %cst_183 : f32 to vector<8x32xf32>
    %652 = arith.addf %651, %650 : vector<8x32xf32>
    %653 = arith.divf %651, %652 : vector<8x32xf32>
    %654 = vector.extract_strided_slice %621 {offsets = [0, 64], sizes = [8, 32], strides = [1, 1]} : vector<8x128xf32> to vector<8x32xf32>
    %655 = math.tanh %654 : vector<8x32xf32>
    %656 = vector.extract_strided_slice %621 {offsets = [0, 96], sizes = [8, 32], strides = [1, 1]} : vector<8x128xf32> to vector<8x32xf32>
    %657 = arith.negf %656 : vector<8x32xf32>
    %658 = math.exp %657 : vector<8x32xf32>
    %cst_184 = arith.constant 1.000000e+00 : f32
    %659 = vector.broadcast %cst_184 : f32 to vector<8x32xf32>
    %660 = arith.addf %659, %658 : vector<8x32xf32>
    %661 = arith.divf %659, %660 : vector<8x32xf32>
    %662 = arith.mulf %633, %605 : vector<8x32xf32>
    %663 = arith.mulf %627, %635 : vector<8x32xf32>
    %664 = arith.addf %662, %663 : vector<8x32xf32>
    %665 = arith.mulf %653, %607 : vector<8x32xf32>
    %666 = arith.mulf %647, %655 : vector<8x32xf32>
    %667 = arith.addf %665, %666 : vector<8x32xf32>
    %668 = math.tanh %664 : vector<8x32xf32>
    %669 = arith.mulf %641, %668 : vector<8x32xf32>
    %670 = math.tanh %667 : vector<8x32xf32>
    %671 = arith.mulf %661, %670 : vector<8x32xf32>
    %672 = arith.index_cast %610 : i32 to index
    %c0_185 = arith.constant 0 : index
    %673 = vector.load %arg16[%672, %c0_185] : memref<64x32xf32, #tpu.memory_space<vmem>>, vector<8x32xf32>
    tpu.vector_store %arg16[%672, %c0_185], %669 {strides = array<i32>} : memref<64x32xf32, #tpu.memory_space<vmem>>, vector<8x32xf32>,
    %674 = arith.index_cast %613 : i32 to index
    %c0_186 = arith.constant 0 : index
    %675 = vector.load %arg17[%674, %c0_186] : memref<64x32xf32, #tpu.memory_space<vmem>>, vector<8x32xf32>
    tpu.vector_store %arg17[%674, %c0_186], %671 {strides = array<i32>} : memref<64x32xf32, #tpu.memory_space<vmem>>, vector<8x32xf32>,
    %676 = tpu.concatenate %669, %671 in 1 : vector<8x32xf32>, vector<8x32xf32> -> vector<8x64xf32>
    %c1_i32_187 = arith.constant 1 : i32
    %cst_188 = arith.constant dense<0.000000e+00> : vector<8x256xf32>
    %677 = tpu.matmul %676, %598, %cst_188 {dimension_numbers = #tpu.dot_dimension_numbers<[1], [0], [0], [1], [0, 0, 1, 1], [], []>} : vector<8x64xf32>, vector<64x256xf32>, vector<8x256xf32> -> vector<8x256xf32>
    %c8_i32_189 = arith.constant 8 : i32
    %678 = arith.muli %c1_i32_187, %c8_i32_189 : i32
    %679 = tpu.assume_multiple %678, 8 : i32
    %c7_i32_190 = arith.constant 7 : i32
    %680 = arith.subi %c7_i32_190, %c1_i32_187 : i32
    %c8_i32_191 = arith.constant 8 : i32
    %681 = arith.muli %680, %c8_i32_191 : i32
    %682 = tpu.assume_multiple %681, 8 : i32
    %683 = arith.index_cast %679 : i32 to index
    %c0_192 = arith.constant 0 : index
    %684 = vector.load %arg15[%683, %c0_192] : memref<64x256xf32, #tpu.memory_space<vmem>>, vector<8x128xf32>
    %685 = vector.extract_strided_slice %677 {offsets = [0, 0], sizes = [8, 128], strides = [1, 1]} : vector<8x256xf32> to vector<8x128xf32>
    %686 = arith.addf %684, %685 : vector<8x128xf32>
    %687 = arith.index_cast %682 : i32 to index
    %c128_193 = arith.constant 128 : index
    %688 = vector.load %arg15[%687, %c128_193] : memref<64x256xf32, #tpu.memory_space<vmem>>, vector<8x128xf32>
    %689 = vector.extract_strided_slice %677 {offsets = [0, 128], sizes = [8, 128], strides = [1, 1]} : vector<8x256xf32> to vector<8x128xf32>
    %690 = arith.addf %688, %689 : vector<8x128xf32>
    %691 = vector.extract_strided_slice %686 {offsets = [0, 0], sizes = [8, 32], strides = [1, 1]} : vector<8x128xf32> to vector<8x32xf32>
    %692 = arith.negf %691 : vector<8x32xf32>
    %693 = math.exp %692 : vector<8x32xf32>
    %cst_194 = arith.constant 1.000000e+00 : f32
    %694 = vector.broadcast %cst_194 : f32 to vector<8x32xf32>
    %695 = arith.addf %694, %693 : vector<8x32xf32>
    %696 = arith.divf %694, %695 : vector<8x32xf32>
    %697 = vector.extract_strided_slice %686 {offsets = [0, 32], sizes = [8, 32], strides = [1, 1]} : vector<8x128xf32> to vector<8x32xf32>
    %698 = arith.negf %697 : vector<8x32xf32>
    %699 = math.exp %698 : vector<8x32xf32>
    %cst_195 = arith.constant 1.000000e+00 : f32
    %700 = vector.broadcast %cst_195 : f32 to vector<8x32xf32>
    %701 = arith.addf %700, %699 : vector<8x32xf32>
    %702 = arith.divf %700, %701 : vector<8x32xf32>
    %703 = vector.extract_strided_slice %686 {offsets = [0, 64], sizes = [8, 32], strides = [1, 1]} : vector<8x128xf32> to vector<8x32xf32>
    %704 = math.tanh %703 : vector<8x32xf32>
    %705 = vector.extract_strided_slice %686 {offsets = [0, 96], sizes = [8, 32], strides = [1, 1]} : vector<8x128xf32> to vector<8x32xf32>
    %706 = arith.negf %705 : vector<8x32xf32>
    %707 = math.exp %706 : vector<8x32xf32>
    %cst_196 = arith.constant 1.000000e+00 : f32
    %708 = vector.broadcast %cst_196 : f32 to vector<8x32xf32>
    %709 = arith.addf %708, %707 : vector<8x32xf32>
    %710 = arith.divf %708, %709 : vector<8x32xf32>
    %711 = vector.extract_strided_slice %690 {offsets = [0, 0], sizes = [8, 32], strides = [1, 1]} : vector<8x128xf32> to vector<8x32xf32>
    %712 = arith.negf %711 : vector<8x32xf32>
    %713 = math.exp %712 : vector<8x32xf32>
    %cst_197 = arith.constant 1.000000e+00 : f32
    %714 = vector.broadcast %cst_197 : f32 to vector<8x32xf32>
    %715 = arith.addf %714, %713 : vector<8x32xf32>
    %716 = arith.divf %714, %715 : vector<8x32xf32>
    %717 = vector.extract_strided_slice %690 {offsets = [0, 32], sizes = [8, 32], strides = [1, 1]} : vector<8x128xf32> to vector<8x32xf32>
    %718 = arith.negf %717 : vector<8x32xf32>
    %719 = math.exp %718 : vector<8x32xf32>
    %cst_198 = arith.constant 1.000000e+00 : f32
    %720 = vector.broadcast %cst_198 : f32 to vector<8x32xf32>
    %721 = arith.addf %720, %719 : vector<8x32xf32>
    %722 = arith.divf %720, %721 : vector<8x32xf32>
    %723 = vector.extract_strided_slice %690 {offsets = [0, 64], sizes = [8, 32], strides = [1, 1]} : vector<8x128xf32> to vector<8x32xf32>
    %724 = math.tanh %723 : vector<8x32xf32>
    %725 = vector.extract_strided_slice %690 {offsets = [0, 96], sizes = [8, 32], strides = [1, 1]} : vector<8x128xf32> to vector<8x32xf32>
    %726 = arith.negf %725 : vector<8x32xf32>
    %727 = math.exp %726 : vector<8x32xf32>
    %cst_199 = arith.constant 1.000000e+00 : f32
    %728 = vector.broadcast %cst_199 : f32 to vector<8x32xf32>
    %729 = arith.addf %728, %727 : vector<8x32xf32>
    %730 = arith.divf %728, %729 : vector<8x32xf32>
    %731 = arith.mulf %702, %664 : vector<8x32xf32>
    %732 = arith.mulf %696, %704 : vector<8x32xf32>
    %733 = arith.addf %731, %732 : vector<8x32xf32>
    %734 = arith.mulf %722, %667 : vector<8x32xf32>
    %735 = arith.mulf %716, %724 : vector<8x32xf32>
    %736 = arith.addf %734, %735 : vector<8x32xf32>
    %737 = math.tanh %733 : vector<8x32xf32>
    %738 = arith.mulf %710, %737 : vector<8x32xf32>
    %739 = math.tanh %736 : vector<8x32xf32>
    %740 = arith.mulf %730, %739 : vector<8x32xf32>
    %741 = arith.index_cast %679 : i32 to index
    %c0_200 = arith.constant 0 : index
    %742 = vector.load %arg16[%741, %c0_200] : memref<64x32xf32, #tpu.memory_space<vmem>>, vector<8x32xf32>
    tpu.vector_store %arg16[%741, %c0_200], %738 {strides = array<i32>} : memref<64x32xf32, #tpu.memory_space<vmem>>, vector<8x32xf32>,
    %743 = arith.index_cast %682 : i32 to index
    %c0_201 = arith.constant 0 : index
    %744 = vector.load %arg17[%743, %c0_201] : memref<64x32xf32, #tpu.memory_space<vmem>>, vector<8x32xf32>
    tpu.vector_store %arg17[%743, %c0_201], %740 {strides = array<i32>} : memref<64x32xf32, #tpu.memory_space<vmem>>, vector<8x32xf32>,
    %745 = tpu.concatenate %738, %740 in 1 : vector<8x32xf32>, vector<8x32xf32> -> vector<8x64xf32>
    %c2_i32_202 = arith.constant 2 : i32
    %cst_203 = arith.constant dense<0.000000e+00> : vector<8x256xf32>
    %746 = tpu.matmul %745, %598, %cst_203 {dimension_numbers = #tpu.dot_dimension_numbers<[1], [0], [0], [1], [0, 0, 1, 1], [], []>} : vector<8x64xf32>, vector<64x256xf32>, vector<8x256xf32> -> vector<8x256xf32>
    %c8_i32_204 = arith.constant 8 : i32
    %747 = arith.muli %c2_i32_202, %c8_i32_204 : i32
    %748 = tpu.assume_multiple %747, 8 : i32
    %c7_i32_205 = arith.constant 7 : i32
    %749 = arith.subi %c7_i32_205, %c2_i32_202 : i32
    %c8_i32_206 = arith.constant 8 : i32
    %750 = arith.muli %749, %c8_i32_206 : i32
    %751 = tpu.assume_multiple %750, 8 : i32
    %752 = arith.index_cast %748 : i32 to index
    %c0_207 = arith.constant 0 : index
    %753 = vector.load %arg15[%752, %c0_207] : memref<64x256xf32, #tpu.memory_space<vmem>>, vector<8x128xf32>
    %754 = vector.extract_strided_slice %746 {offsets = [0, 0], sizes = [8, 128], strides = [1, 1]} : vector<8x256xf32> to vector<8x128xf32>
    %755 = arith.addf %753, %754 : vector<8x128xf32>
    %756 = arith.index_cast %751 : i32 to index
    %c128_208 = arith.constant 128 : index
    %757 = vector.load %arg15[%756, %c128_208] : memref<64x256xf32, #tpu.memory_space<vmem>>, vector<8x128xf32>
    %758 = vector.extract_strided_slice %746 {offsets = [0, 128], sizes = [8, 128], strides = [1, 1]} : vector<8x256xf32> to vector<8x128xf32>
    %759 = arith.addf %757, %758 : vector<8x128xf32>
    %760 = vector.extract_strided_slice %755 {offsets = [0, 0], sizes = [8, 32], strides = [1, 1]} : vector<8x128xf32> to vector<8x32xf32>
    %761 = arith.negf %760 : vector<8x32xf32>
    %762 = math.exp %761 : vector<8x32xf32>
    %cst_209 = arith.constant 1.000000e+00 : f32
    %763 = vector.broadcast %cst_209 : f32 to vector<8x32xf32>
    %764 = arith.addf %763, %762 : vector<8x32xf32>
    %765 = arith.divf %763, %764 : vector<8x32xf32>
    %766 = vector.extract_strided_slice %755 {offsets = [0, 32], sizes = [8, 32], strides = [1, 1]} : vector<8x128xf32> to vector<8x32xf32>
    %767 = arith.negf %766 : vector<8x32xf32>
    %768 = math.exp %767 : vector<8x32xf32>
    %cst_210 = arith.constant 1.000000e+00 : f32
    %769 = vector.broadcast %cst_210 : f32 to vector<8x32xf32>
    %770 = arith.addf %769, %768 : vector<8x32xf32>
    %771 = arith.divf %769, %770 : vector<8x32xf32>
    %772 = vector.extract_strided_slice %755 {offsets = [0, 64], sizes = [8, 32], strides = [1, 1]} : vector<8x128xf32> to vector<8x32xf32>
    %773 = math.tanh %772 : vector<8x32xf32>
    %774 = vector.extract_strided_slice %755 {offsets = [0, 96], sizes = [8, 32], strides = [1, 1]} : vector<8x128xf32> to vector<8x32xf32>
    %775 = arith.negf %774 : vector<8x32xf32>
    %776 = math.exp %775 : vector<8x32xf32>
    %cst_211 = arith.constant 1.000000e+00 : f32
    %777 = vector.broadcast %cst_211 : f32 to vector<8x32xf32>
    %778 = arith.addf %777, %776 : vector<8x32xf32>
    %779 = arith.divf %777, %778 : vector<8x32xf32>
    %780 = vector.extract_strided_slice %759 {offsets = [0, 0], sizes = [8, 32], strides = [1, 1]} : vector<8x128xf32> to vector<8x32xf32>
    %781 = arith.negf %780 : vector<8x32xf32>
    %782 = math.exp %781 : vector<8x32xf32>
    %cst_212 = arith.constant 1.000000e+00 : f32
    %783 = vector.broadcast %cst_212 : f32 to vector<8x32xf32>
    %784 = arith.addf %783, %782 : vector<8x32xf32>
    %785 = arith.divf %783, %784 : vector<8x32xf32>
    %786 = vector.extract_strided_slice %759 {offsets = [0, 32], sizes = [8, 32], strides = [1, 1]} : vector<8x128xf32> to vector<8x32xf32>
    %787 = arith.negf %786 : vector<8x32xf32>
    %788 = math.exp %787 : vector<8x32xf32>
    %cst_213 = arith.constant 1.000000e+00 : f32
    %789 = vector.broadcast %cst_213 : f32 to vector<8x32xf32>
    %790 = arith.addf %789, %788 : vector<8x32xf32>
    %791 = arith.divf %789, %790 : vector<8x32xf32>
    %792 = vector.extract_strided_slice %759 {offsets = [0, 64], sizes = [8, 32], strides = [1, 1]} : vector<8x128xf32> to vector<8x32xf32>
    %793 = math.tanh %792 : vector<8x32xf32>
    %794 = vector.extract_strided_slice %759 {offsets = [0, 96], sizes = [8, 32], strides = [1, 1]} : vector<8x128xf32> to vector<8x32xf32>
    %795 = arith.negf %794 : vector<8x32xf32>
    %796 = math.exp %795 : vector<8x32xf32>
    %cst_214 = arith.constant 1.000000e+00 : f32
    %797 = vector.broadcast %cst_214 : f32 to vector<8x32xf32>
    %798 = arith.addf %797, %796 : vector<8x32xf32>
    %799 = arith.divf %797, %798 : vector<8x32xf32>
    %800 = arith.mulf %771, %733 : vector<8x32xf32>
    %801 = arith.mulf %765, %773 : vector<8x32xf32>
    %802 = arith.addf %800, %801 : vector<8x32xf32>
    %803 = arith.mulf %791, %736 : vector<8x32xf32>
    %804 = arith.mulf %785, %793 : vector<8x32xf32>
    %805 = arith.addf %803, %804 : vector<8x32xf32>
    %806 = math.tanh %802 : vector<8x32xf32>
    %807 = arith.mulf %779, %806 : vector<8x32xf32>
    %808 = math.tanh %805 : vector<8x32xf32>
    %809 = arith.mulf %799, %808 : vector<8x32xf32>
    %810 = arith.index_cast %748 : i32 to index
    %c0_215 = arith.constant 0 : index
    %811 = vector.load %arg16[%810, %c0_215] : memref<64x32xf32, #tpu.memory_space<vmem>>, vector<8x32xf32>
    tpu.vector_store %arg16[%810, %c0_215], %807 {strides = array<i32>} : memref<64x32xf32, #tpu.memory_space<vmem>>, vector<8x32xf32>,
    %812 = arith.index_cast %751 : i32 to index
    %c0_216 = arith.constant 0 : index
    %813 = vector.load %arg17[%812, %c0_216] : memref<64x32xf32, #tpu.memory_space<vmem>>, vector<8x32xf32>
    tpu.vector_store %arg17[%812, %c0_216], %809 {strides = array<i32>} : memref<64x32xf32, #tpu.memory_space<vmem>>, vector<8x32xf32>,
    %814 = tpu.concatenate %807, %809 in 1 : vector<8x32xf32>, vector<8x32xf32> -> vector<8x64xf32>
    %c3_i32_217 = arith.constant 3 : i32
    %cst_218 = arith.constant dense<0.000000e+00> : vector<8x256xf32>
    %815 = tpu.matmul %814, %598, %cst_218 {dimension_numbers = #tpu.dot_dimension_numbers<[1], [0], [0], [1], [0, 0, 1, 1], [], []>} : vector<8x64xf32>, vector<64x256xf32>, vector<8x256xf32> -> vector<8x256xf32>
    %c8_i32_219 = arith.constant 8 : i32
    %816 = arith.muli %c3_i32_217, %c8_i32_219 : i32
    %817 = tpu.assume_multiple %816, 8 : i32
    %c7_i32_220 = arith.constant 7 : i32
    %818 = arith.subi %c7_i32_220, %c3_i32_217 : i32
    %c8_i32_221 = arith.constant 8 : i32
    %819 = arith.muli %818, %c8_i32_221 : i32
    %820 = tpu.assume_multiple %819, 8 : i32
    %821 = arith.index_cast %817 : i32 to index
    %c0_222 = arith.constant 0 : index
    %822 = vector.load %arg15[%821, %c0_222] : memref<64x256xf32, #tpu.memory_space<vmem>>, vector<8x128xf32>
    %823 = vector.extract_strided_slice %815 {offsets = [0, 0], sizes = [8, 128], strides = [1, 1]} : vector<8x256xf32> to vector<8x128xf32>
    %824 = arith.addf %822, %823 : vector<8x128xf32>
    %825 = arith.index_cast %820 : i32 to index
    %c128_223 = arith.constant 128 : index
    %826 = vector.load %arg15[%825, %c128_223] : memref<64x256xf32, #tpu.memory_space<vmem>>, vector<8x128xf32>
    %827 = vector.extract_strided_slice %815 {offsets = [0, 128], sizes = [8, 128], strides = [1, 1]} : vector<8x256xf32> to vector<8x128xf32>
    %828 = arith.addf %826, %827 : vector<8x128xf32>
    %829 = vector.extract_strided_slice %824 {offsets = [0, 0], sizes = [8, 32], strides = [1, 1]} : vector<8x128xf32> to vector<8x32xf32>
    %830 = arith.negf %829 : vector<8x32xf32>
    %831 = math.exp %830 : vector<8x32xf32>
    %cst_224 = arith.constant 1.000000e+00 : f32
    %832 = vector.broadcast %cst_224 : f32 to vector<8x32xf32>
    %833 = arith.addf %832, %831 : vector<8x32xf32>
    %834 = arith.divf %832, %833 : vector<8x32xf32>
    %835 = vector.extract_strided_slice %824 {offsets = [0, 32], sizes = [8, 32], strides = [1, 1]} : vector<8x128xf32> to vector<8x32xf32>
    %836 = arith.negf %835 : vector<8x32xf32>
    %837 = math.exp %836 : vector<8x32xf32>
    %cst_225 = arith.constant 1.000000e+00 : f32
    %838 = vector.broadcast %cst_225 : f32 to vector<8x32xf32>
    %839 = arith.addf %838, %837 : vector<8x32xf32>
    %840 = arith.divf %838, %839 : vector<8x32xf32>
    %841 = vector.extract_strided_slice %824 {offsets = [0, 64], sizes = [8, 32], strides = [1, 1]} : vector<8x128xf32> to vector<8x32xf32>
    %842 = math.tanh %841 : vector<8x32xf32>
    %843 = vector.extract_strided_slice %824 {offsets = [0, 96], sizes = [8, 32], strides = [1, 1]} : vector<8x128xf32> to vector<8x32xf32>
    %844 = arith.negf %843 : vector<8x32xf32>
    %845 = math.exp %844 : vector<8x32xf32>
    %cst_226 = arith.constant 1.000000e+00 : f32
    %846 = vector.broadcast %cst_226 : f32 to vector<8x32xf32>
    %847 = arith.addf %846, %845 : vector<8x32xf32>
    %848 = arith.divf %846, %847 : vector<8x32xf32>
    %849 = vector.extract_strided_slice %828 {offsets = [0, 0], sizes = [8, 32], strides = [1, 1]} : vector<8x128xf32> to vector<8x32xf32>
    %850 = arith.negf %849 : vector<8x32xf32>
    %851 = math.exp %850 : vector<8x32xf32>
    %cst_227 = arith.constant 1.000000e+00 : f32
    %852 = vector.broadcast %cst_227 : f32 to vector<8x32xf32>
    %853 = arith.addf %852, %851 : vector<8x32xf32>
    %854 = arith.divf %852, %853 : vector<8x32xf32>
    %855 = vector.extract_strided_slice %828 {offsets = [0, 32], sizes = [8, 32], strides = [1, 1]} : vector<8x128xf32> to vector<8x32xf32>
    %856 = arith.negf %855 : vector<8x32xf32>
    %857 = math.exp %856 : vector<8x32xf32>
    %cst_228 = arith.constant 1.000000e+00 : f32
    %858 = vector.broadcast %cst_228 : f32 to vector<8x32xf32>
    %859 = arith.addf %858, %857 : vector<8x32xf32>
    %860 = arith.divf %858, %859 : vector<8x32xf32>
    %861 = vector.extract_strided_slice %828 {offsets = [0, 64], sizes = [8, 32], strides = [1, 1]} : vector<8x128xf32> to vector<8x32xf32>
    %862 = math.tanh %861 : vector<8x32xf32>
    %863 = vector.extract_strided_slice %828 {offsets = [0, 96], sizes = [8, 32], strides = [1, 1]} : vector<8x128xf32> to vector<8x32xf32>
    %864 = arith.negf %863 : vector<8x32xf32>
    %865 = math.exp %864 : vector<8x32xf32>
    %cst_229 = arith.constant 1.000000e+00 : f32
    %866 = vector.broadcast %cst_229 : f32 to vector<8x32xf32>
    %867 = arith.addf %866, %865 : vector<8x32xf32>
    %868 = arith.divf %866, %867 : vector<8x32xf32>
    %869 = arith.mulf %840, %802 : vector<8x32xf32>
    %870 = arith.mulf %834, %842 : vector<8x32xf32>
    %871 = arith.addf %869, %870 : vector<8x32xf32>
    %872 = arith.mulf %860, %805 : vector<8x32xf32>
    %873 = arith.mulf %854, %862 : vector<8x32xf32>
    %874 = arith.addf %872, %873 : vector<8x32xf32>
    %875 = math.tanh %871 : vector<8x32xf32>
    %876 = arith.mulf %848, %875 : vector<8x32xf32>
    %877 = math.tanh %874 : vector<8x32xf32>
    %878 = arith.mulf %868, %877 : vector<8x32xf32>
    %879 = arith.index_cast %817 : i32 to index
    %c0_230 = arith.constant 0 : index
    %880 = vector.load %arg16[%879, %c0_230] : memref<64x32xf32, #tpu.memory_space<vmem>>, vector<8x32xf32>
    tpu.vector_store %arg16[%879, %c0_230], %876 {strides = array<i32>} : memref<64x32xf32, #tpu.memory_space<vmem>>, vector<8x32xf32>,
    %881 = arith.index_cast %820 : i32 to index
    %c0_231 = arith.constant 0 : index
    %882 = vector.load %arg17[%881, %c0_231] : memref<64x32xf32, #tpu.memory_space<vmem>>, vector<8x32xf32>
    tpu.vector_store %arg17[%881, %c0_231], %878 {strides = array<i32>} : memref<64x32xf32, #tpu.memory_space<vmem>>, vector<8x32xf32>,
    %883 = tpu.concatenate %876, %878 in 1 : vector<8x32xf32>, vector<8x32xf32> -> vector<8x64xf32>
    %c4_i32_232 = arith.constant 4 : i32
    %cst_233 = arith.constant dense<0.000000e+00> : vector<8x256xf32>
    %884 = tpu.matmul %883, %598, %cst_233 {dimension_numbers = #tpu.dot_dimension_numbers<[1], [0], [0], [1], [0, 0, 1, 1], [], []>} : vector<8x64xf32>, vector<64x256xf32>, vector<8x256xf32> -> vector<8x256xf32>
    %c8_i32_234 = arith.constant 8 : i32
    %885 = arith.muli %c4_i32_232, %c8_i32_234 : i32
    %886 = tpu.assume_multiple %885, 8 : i32
    %c7_i32_235 = arith.constant 7 : i32
    %887 = arith.subi %c7_i32_235, %c4_i32_232 : i32
    %c8_i32_236 = arith.constant 8 : i32
    %888 = arith.muli %887, %c8_i32_236 : i32
    %889 = tpu.assume_multiple %888, 8 : i32
    %890 = arith.index_cast %886 : i32 to index
    %c0_237 = arith.constant 0 : index
    %891 = vector.load %arg15[%890, %c0_237] : memref<64x256xf32, #tpu.memory_space<vmem>>, vector<8x128xf32>
    %892 = vector.extract_strided_slice %884 {offsets = [0, 0], sizes = [8, 128], strides = [1, 1]} : vector<8x256xf32> to vector<8x128xf32>
    %893 = arith.addf %891, %892 : vector<8x128xf32>
    %894 = arith.index_cast %889 : i32 to index
    %c128_238 = arith.constant 128 : index
    %895 = vector.load %arg15[%894, %c128_238] : memref<64x256xf32, #tpu.memory_space<vmem>>, vector<8x128xf32>
    %896 = vector.extract_strided_slice %884 {offsets = [0, 128], sizes = [8, 128], strides = [1, 1]} : vector<8x256xf32> to vector<8x128xf32>
    %897 = arith.addf %895, %896 : vector<8x128xf32>
    %898 = vector.extract_strided_slice %893 {offsets = [0, 0], sizes = [8, 32], strides = [1, 1]} : vector<8x128xf32> to vector<8x32xf32>
    %899 = arith.negf %898 : vector<8x32xf32>
    %900 = math.exp %899 : vector<8x32xf32>
    %cst_239 = arith.constant 1.000000e+00 : f32
    %901 = vector.broadcast %cst_239 : f32 to vector<8x32xf32>
    %902 = arith.addf %901, %900 : vector<8x32xf32>
    %903 = arith.divf %901, %902 : vector<8x32xf32>
    %904 = vector.extract_strided_slice %893 {offsets = [0, 32], sizes = [8, 32], strides = [1, 1]} : vector<8x128xf32> to vector<8x32xf32>
    %905 = arith.negf %904 : vector<8x32xf32>
    %906 = math.exp %905 : vector<8x32xf32>
    %cst_240 = arith.constant 1.000000e+00 : f32
    %907 = vector.broadcast %cst_240 : f32 to vector<8x32xf32>
    %908 = arith.addf %907, %906 : vector<8x32xf32>
    %909 = arith.divf %907, %908 : vector<8x32xf32>
    %910 = vector.extract_strided_slice %893 {offsets = [0, 64], sizes = [8, 32], strides = [1, 1]} : vector<8x128xf32> to vector<8x32xf32>
    %911 = math.tanh %910 : vector<8x32xf32>
    %912 = vector.extract_strided_slice %893 {offsets = [0, 96], sizes = [8, 32], strides = [1, 1]} : vector<8x128xf32> to vector<8x32xf32>
    %913 = arith.negf %912 : vector<8x32xf32>
    %914 = math.exp %913 : vector<8x32xf32>
    %cst_241 = arith.constant 1.000000e+00 : f32
    %915 = vector.broadcast %cst_241 : f32 to vector<8x32xf32>
    %916 = arith.addf %915, %914 : vector<8x32xf32>
    %917 = arith.divf %915, %916 : vector<8x32xf32>
    %918 = vector.extract_strided_slice %897 {offsets = [0, 0], sizes = [8, 32], strides = [1, 1]} : vector<8x128xf32> to vector<8x32xf32>
    %919 = arith.negf %918 : vector<8x32xf32>
    %920 = math.exp %919 : vector<8x32xf32>
    %cst_242 = arith.constant 1.000000e+00 : f32
    %921 = vector.broadcast %cst_242 : f32 to vector<8x32xf32>
    %922 = arith.addf %921, %920 : vector<8x32xf32>
    %923 = arith.divf %921, %922 : vector<8x32xf32>
    %924 = vector.extract_strided_slice %897 {offsets = [0, 32], sizes = [8, 32], strides = [1, 1]} : vector<8x128xf32> to vector<8x32xf32>
    %925 = arith.negf %924 : vector<8x32xf32>
    %926 = math.exp %925 : vector<8x32xf32>
    %cst_243 = arith.constant 1.000000e+00 : f32
    %927 = vector.broadcast %cst_243 : f32 to vector<8x32xf32>
    %928 = arith.addf %927, %926 : vector<8x32xf32>
    %929 = arith.divf %927, %928 : vector<8x32xf32>
    %930 = vector.extract_strided_slice %897 {offsets = [0, 64], sizes = [8, 32], strides = [1, 1]} : vector<8x128xf32> to vector<8x32xf32>
    %931 = math.tanh %930 : vector<8x32xf32>
    %932 = vector.extract_strided_slice %897 {offsets = [0, 96], sizes = [8, 32], strides = [1, 1]} : vector<8x128xf32> to vector<8x32xf32>
    %933 = arith.negf %932 : vector<8x32xf32>
    %934 = math.exp %933 : vector<8x32xf32>
    %cst_244 = arith.constant 1.000000e+00 : f32
    %935 = vector.broadcast %cst_244 : f32 to vector<8x32xf32>
    %936 = arith.addf %935, %934 : vector<8x32xf32>
    %937 = arith.divf %935, %936 : vector<8x32xf32>
    %938 = arith.mulf %909, %871 : vector<8x32xf32>
    %939 = arith.mulf %903, %911 : vector<8x32xf32>
    %940 = arith.addf %938, %939 : vector<8x32xf32>
    %941 = arith.mulf %929, %874 : vector<8x32xf32>
    %942 = arith.mulf %923, %931 : vector<8x32xf32>
    %943 = arith.addf %941, %942 : vector<8x32xf32>
    %944 = math.tanh %940 : vector<8x32xf32>
    %945 = arith.mulf %917, %944 : vector<8x32xf32>
    %946 = math.tanh %943 : vector<8x32xf32>
    %947 = arith.mulf %937, %946 : vector<8x32xf32>
    %948 = arith.index_cast %886 : i32 to index
    %c0_245 = arith.constant 0 : index
    %949 = vector.load %arg16[%948, %c0_245] : memref<64x32xf32, #tpu.memory_space<vmem>>, vector<8x32xf32>
    tpu.vector_store %arg16[%948, %c0_245], %945 {strides = array<i32>} : memref<64x32xf32, #tpu.memory_space<vmem>>, vector<8x32xf32>,
    %950 = arith.index_cast %889 : i32 to index
    %c0_246 = arith.constant 0 : index
    %951 = vector.load %arg17[%950, %c0_246] : memref<64x32xf32, #tpu.memory_space<vmem>>, vector<8x32xf32>
    tpu.vector_store %arg17[%950, %c0_246], %947 {strides = array<i32>} : memref<64x32xf32, #tpu.memory_space<vmem>>, vector<8x32xf32>,
    %952 = tpu.concatenate %945, %947 in 1 : vector<8x32xf32>, vector<8x32xf32> -> vector<8x64xf32>
    %c5_i32_247 = arith.constant 5 : i32
    %cst_248 = arith.constant dense<0.000000e+00> : vector<8x256xf32>
    %953 = tpu.matmul %952, %598, %cst_248 {dimension_numbers = #tpu.dot_dimension_numbers<[1], [0], [0], [1], [0, 0, 1, 1], [], []>} : vector<8x64xf32>, vector<64x256xf32>, vector<8x256xf32> -> vector<8x256xf32>
    %c8_i32_249 = arith.constant 8 : i32
    %954 = arith.muli %c5_i32_247, %c8_i32_249 : i32
    %955 = tpu.assume_multiple %954, 8 : i32
    %c7_i32_250 = arith.constant 7 : i32
    %956 = arith.subi %c7_i32_250, %c5_i32_247 : i32
    %c8_i32_251 = arith.constant 8 : i32
    %957 = arith.muli %956, %c8_i32_251 : i32
    %958 = tpu.assume_multiple %957, 8 : i32
    %959 = arith.index_cast %955 : i32 to index
    %c0_252 = arith.constant 0 : index
    %960 = vector.load %arg15[%959, %c0_252] : memref<64x256xf32, #tpu.memory_space<vmem>>, vector<8x128xf32>
    %961 = vector.extract_strided_slice %953 {offsets = [0, 0], sizes = [8, 128], strides = [1, 1]} : vector<8x256xf32> to vector<8x128xf32>
    %962 = arith.addf %960, %961 : vector<8x128xf32>
    %963 = arith.index_cast %958 : i32 to index
    %c128_253 = arith.constant 128 : index
    %964 = vector.load %arg15[%963, %c128_253] : memref<64x256xf32, #tpu.memory_space<vmem>>, vector<8x128xf32>
    %965 = vector.extract_strided_slice %953 {offsets = [0, 128], sizes = [8, 128], strides = [1, 1]} : vector<8x256xf32> to vector<8x128xf32>
    %966 = arith.addf %964, %965 : vector<8x128xf32>
    %967 = vector.extract_strided_slice %962 {offsets = [0, 0], sizes = [8, 32], strides = [1, 1]} : vector<8x128xf32> to vector<8x32xf32>
    %968 = arith.negf %967 : vector<8x32xf32>
    %969 = math.exp %968 : vector<8x32xf32>
    %cst_254 = arith.constant 1.000000e+00 : f32
    %970 = vector.broadcast %cst_254 : f32 to vector<8x32xf32>
    %971 = arith.addf %970, %969 : vector<8x32xf32>
    %972 = arith.divf %970, %971 : vector<8x32xf32>
    %973 = vector.extract_strided_slice %962 {offsets = [0, 32], sizes = [8, 32], strides = [1, 1]} : vector<8x128xf32> to vector<8x32xf32>
    %974 = arith.negf %973 : vector<8x32xf32>
    %975 = math.exp %974 : vector<8x32xf32>
    %cst_255 = arith.constant 1.000000e+00 : f32
    %976 = vector.broadcast %cst_255 : f32 to vector<8x32xf32>
    %977 = arith.addf %976, %975 : vector<8x32xf32>
    %978 = arith.divf %976, %977 : vector<8x32xf32>
    %979 = vector.extract_strided_slice %962 {offsets = [0, 64], sizes = [8, 32], strides = [1, 1]} : vector<8x128xf32> to vector<8x32xf32>
    %980 = math.tanh %979 : vector<8x32xf32>
    %981 = vector.extract_strided_slice %962 {offsets = [0, 96], sizes = [8, 32], strides = [1, 1]} : vector<8x128xf32> to vector<8x32xf32>
    %982 = arith.negf %981 : vector<8x32xf32>
    %983 = math.exp %982 : vector<8x32xf32>
    %cst_256 = arith.constant 1.000000e+00 : f32
    %984 = vector.broadcast %cst_256 : f32 to vector<8x32xf32>
    %985 = arith.addf %984, %983 : vector<8x32xf32>
    %986 = arith.divf %984, %985 : vector<8x32xf32>
    %987 = vector.extract_strided_slice %966 {offsets = [0, 0], sizes = [8, 32], strides = [1, 1]} : vector<8x128xf32> to vector<8x32xf32>
    %988 = arith.negf %987 : vector<8x32xf32>
    %989 = math.exp %988 : vector<8x32xf32>
    %cst_257 = arith.constant 1.000000e+00 : f32
    %990 = vector.broadcast %cst_257 : f32 to vector<8x32xf32>
    %991 = arith.addf %990, %989 : vector<8x32xf32>
    %992 = arith.divf %990, %991 : vector<8x32xf32>
    %993 = vector.extract_strided_slice %966 {offsets = [0, 32], sizes = [8, 32], strides = [1, 1]} : vector<8x128xf32> to vector<8x32xf32>
    %994 = arith.negf %993 : vector<8x32xf32>
    %995 = math.exp %994 : vector<8x32xf32>
    %cst_258 = arith.constant 1.000000e+00 : f32
    %996 = vector.broadcast %cst_258 : f32 to vector<8x32xf32>
    %997 = arith.addf %996, %995 : vector<8x32xf32>
    %998 = arith.divf %996, %997 : vector<8x32xf32>
    %999 = vector.extract_strided_slice %966 {offsets = [0, 64], sizes = [8, 32], strides = [1, 1]} : vector<8x128xf32> to vector<8x32xf32>
    %1000 = math.tanh %999 : vector<8x32xf32>
    %1001 = vector.extract_strided_slice %966 {offsets = [0, 96], sizes = [8, 32], strides = [1, 1]} : vector<8x128xf32> to vector<8x32xf32>
    %1002 = arith.negf %1001 : vector<8x32xf32>
    %1003 = math.exp %1002 : vector<8x32xf32>
    %cst_259 = arith.constant 1.000000e+00 : f32
    %1004 = vector.broadcast %cst_259 : f32 to vector<8x32xf32>
    %1005 = arith.addf %1004, %1003 : vector<8x32xf32>
    %1006 = arith.divf %1004, %1005 : vector<8x32xf32>
    %1007 = arith.mulf %978, %940 : vector<8x32xf32>
    %1008 = arith.mulf %972, %980 : vector<8x32xf32>
    %1009 = arith.addf %1007, %1008 : vector<8x32xf32>
    %1010 = arith.mulf %998, %943 : vector<8x32xf32>
    %1011 = arith.mulf %992, %1000 : vector<8x32xf32>
    %1012 = arith.addf %1010, %1011 : vector<8x32xf32>
    %1013 = math.tanh %1009 : vector<8x32xf32>
    %1014 = arith.mulf %986, %1013 : vector<8x32xf32>
    %1015 = math.tanh %1012 : vector<8x32xf32>
    %1016 = arith.mulf %1006, %1015 : vector<8x32xf32>
    %1017 = arith.index_cast %955 : i32 to index
    %c0_260 = arith.constant 0 : index
    %1018 = vector.load %arg16[%1017, %c0_260] : memref<64x32xf32, #tpu.memory_space<vmem>>, vector<8x32xf32>
    tpu.vector_store %arg16[%1017, %c0_260], %1014 {strides = array<i32>} : memref<64x32xf32, #tpu.memory_space<vmem>>, vector<8x32xf32>,
    %1019 = arith.index_cast %958 : i32 to index
    %c0_261 = arith.constant 0 : index
    %1020 = vector.load %arg17[%1019, %c0_261] : memref<64x32xf32, #tpu.memory_space<vmem>>, vector<8x32xf32>
    tpu.vector_store %arg17[%1019, %c0_261], %1016 {strides = array<i32>} : memref<64x32xf32, #tpu.memory_space<vmem>>, vector<8x32xf32>,
    %1021 = tpu.concatenate %1014, %1016 in 1 : vector<8x32xf32>, vector<8x32xf32> -> vector<8x64xf32>
    %c6_i32_262 = arith.constant 6 : i32
    %cst_263 = arith.constant dense<0.000000e+00> : vector<8x256xf32>
    %1022 = tpu.matmul %1021, %598, %cst_263 {dimension_numbers = #tpu.dot_dimension_numbers<[1], [0], [0], [1], [0, 0, 1, 1], [], []>} : vector<8x64xf32>, vector<64x256xf32>, vector<8x256xf32> -> vector<8x256xf32>
    %c8_i32_264 = arith.constant 8 : i32
    %1023 = arith.muli %c6_i32_262, %c8_i32_264 : i32
    %1024 = tpu.assume_multiple %1023, 8 : i32
    %c7_i32_265 = arith.constant 7 : i32
    %1025 = arith.subi %c7_i32_265, %c6_i32_262 : i32
    %c8_i32_266 = arith.constant 8 : i32
    %1026 = arith.muli %1025, %c8_i32_266 : i32
    %1027 = tpu.assume_multiple %1026, 8 : i32
    %1028 = arith.index_cast %1024 : i32 to index
    %c0_267 = arith.constant 0 : index
    %1029 = vector.load %arg15[%1028, %c0_267] : memref<64x256xf32, #tpu.memory_space<vmem>>, vector<8x128xf32>
    %1030 = vector.extract_strided_slice %1022 {offsets = [0, 0], sizes = [8, 128], strides = [1, 1]} : vector<8x256xf32> to vector<8x128xf32>
    %1031 = arith.addf %1029, %1030 : vector<8x128xf32>
    %1032 = arith.index_cast %1027 : i32 to index
    %c128_268 = arith.constant 128 : index
    %1033 = vector.load %arg15[%1032, %c128_268] : memref<64x256xf32, #tpu.memory_space<vmem>>, vector<8x128xf32>
    %1034 = vector.extract_strided_slice %1022 {offsets = [0, 128], sizes = [8, 128], strides = [1, 1]} : vector<8x256xf32> to vector<8x128xf32>
    %1035 = arith.addf %1033, %1034 : vector<8x128xf32>
    %1036 = vector.extract_strided_slice %1031 {offsets = [0, 0], sizes = [8, 32], strides = [1, 1]} : vector<8x128xf32> to vector<8x32xf32>
    %1037 = arith.negf %1036 : vector<8x32xf32>
    %1038 = math.exp %1037 : vector<8x32xf32>
    %cst_269 = arith.constant 1.000000e+00 : f32
    %1039 = vector.broadcast %cst_269 : f32 to vector<8x32xf32>
    %1040 = arith.addf %1039, %1038 : vector<8x32xf32>
    %1041 = arith.divf %1039, %1040 : vector<8x32xf32>
    %1042 = vector.extract_strided_slice %1031 {offsets = [0, 32], sizes = [8, 32], strides = [1, 1]} : vector<8x128xf32> to vector<8x32xf32>
    %1043 = arith.negf %1042 : vector<8x32xf32>
    %1044 = math.exp %1043 : vector<8x32xf32>
    %cst_270 = arith.constant 1.000000e+00 : f32
    %1045 = vector.broadcast %cst_270 : f32 to vector<8x32xf32>
    %1046 = arith.addf %1045, %1044 : vector<8x32xf32>
    %1047 = arith.divf %1045, %1046 : vector<8x32xf32>
    %1048 = vector.extract_strided_slice %1031 {offsets = [0, 64], sizes = [8, 32], strides = [1, 1]} : vector<8x128xf32> to vector<8x32xf32>
    %1049 = math.tanh %1048 : vector<8x32xf32>
    %1050 = vector.extract_strided_slice %1031 {offsets = [0, 96], sizes = [8, 32], strides = [1, 1]} : vector<8x128xf32> to vector<8x32xf32>
    %1051 = arith.negf %1050 : vector<8x32xf32>
    %1052 = math.exp %1051 : vector<8x32xf32>
    %cst_271 = arith.constant 1.000000e+00 : f32
    %1053 = vector.broadcast %cst_271 : f32 to vector<8x32xf32>
    %1054 = arith.addf %1053, %1052 : vector<8x32xf32>
    %1055 = arith.divf %1053, %1054 : vector<8x32xf32>
    %1056 = vector.extract_strided_slice %1035 {offsets = [0, 0], sizes = [8, 32], strides = [1, 1]} : vector<8x128xf32> to vector<8x32xf32>
    %1057 = arith.negf %1056 : vector<8x32xf32>
    %1058 = math.exp %1057 : vector<8x32xf32>
    %cst_272 = arith.constant 1.000000e+00 : f32
    %1059 = vector.broadcast %cst_272 : f32 to vector<8x32xf32>
    %1060 = arith.addf %1059, %1058 : vector<8x32xf32>
    %1061 = arith.divf %1059, %1060 : vector<8x32xf32>
    %1062 = vector.extract_strided_slice %1035 {offsets = [0, 32], sizes = [8, 32], strides = [1, 1]} : vector<8x128xf32> to vector<8x32xf32>
    %1063 = arith.negf %1062 : vector<8x32xf32>
    %1064 = math.exp %1063 : vector<8x32xf32>
    %cst_273 = arith.constant 1.000000e+00 : f32
    %1065 = vector.broadcast %cst_273 : f32 to vector<8x32xf32>
    %1066 = arith.addf %1065, %1064 : vector<8x32xf32>
    %1067 = arith.divf %1065, %1066 : vector<8x32xf32>
    %1068 = vector.extract_strided_slice %1035 {offsets = [0, 64], sizes = [8, 32], strides = [1, 1]} : vector<8x128xf32> to vector<8x32xf32>
    %1069 = math.tanh %1068 : vector<8x32xf32>
    %1070 = vector.extract_strided_slice %1035 {offsets = [0, 96], sizes = [8, 32], strides = [1, 1]} : vector<8x128xf32> to vector<8x32xf32>
    %1071 = arith.negf %1070 : vector<8x32xf32>
    %1072 = math.exp %1071 : vector<8x32xf32>
    %cst_274 = arith.constant 1.000000e+00 : f32
    %1073 = vector.broadcast %cst_274 : f32 to vector<8x32xf32>
    %1074 = arith.addf %1073, %1072 : vector<8x32xf32>
    %1075 = arith.divf %1073, %1074 : vector<8x32xf32>
    %1076 = arith.mulf %1047, %1009 : vector<8x32xf32>
    %1077 = arith.mulf %1041, %1049 : vector<8x32xf32>
    %1078 = arith.addf %1076, %1077 : vector<8x32xf32>
    %1079 = arith.mulf %1067, %1012 : vector<8x32xf32>
    %1080 = arith.mulf %1061, %1069 : vector<8x32xf32>
    %1081 = arith.addf %1079, %1080 : vector<8x32xf32>
    %1082 = math.tanh %1078 : vector<8x32xf32>
    %1083 = arith.mulf %1055, %1082 : vector<8x32xf32>
    %1084 = math.tanh %1081 : vector<8x32xf32>
    %1085 = arith.mulf %1075, %1084 : vector<8x32xf32>
    %1086 = arith.index_cast %1024 : i32 to index
    %c0_275 = arith.constant 0 : index
    %1087 = vector.load %arg16[%1086, %c0_275] : memref<64x32xf32, #tpu.memory_space<vmem>>, vector<8x32xf32>
    tpu.vector_store %arg16[%1086, %c0_275], %1083 {strides = array<i32>} : memref<64x32xf32, #tpu.memory_space<vmem>>, vector<8x32xf32>,
    %1088 = arith.index_cast %1027 : i32 to index
    %c0_276 = arith.constant 0 : index
    %1089 = vector.load %arg17[%1088, %c0_276] : memref<64x32xf32, #tpu.memory_space<vmem>>, vector<8x32xf32>
    tpu.vector_store %arg17[%1088, %c0_276], %1085 {strides = array<i32>} : memref<64x32xf32, #tpu.memory_space<vmem>>, vector<8x32xf32>,
    %1090 = tpu.concatenate %1083, %1085 in 1 : vector<8x32xf32>, vector<8x32xf32> -> vector<8x64xf32>
    %c7_i32_277 = arith.constant 7 : i32
    %cst_278 = arith.constant dense<0.000000e+00> : vector<8x256xf32>
    %1091 = tpu.matmul %1090, %598, %cst_278 {dimension_numbers = #tpu.dot_dimension_numbers<[1], [0], [0], [1], [0, 0, 1, 1], [], []>} : vector<8x64xf32>, vector<64x256xf32>, vector<8x256xf32> -> vector<8x256xf32>
    %c8_i32_279 = arith.constant 8 : i32
    %1092 = arith.muli %c7_i32_277, %c8_i32_279 : i32
    %1093 = tpu.assume_multiple %1092, 8 : i32
    %c7_i32_280 = arith.constant 7 : i32
    %1094 = arith.subi %c7_i32_280, %c7_i32_277 : i32
    %c8_i32_281 = arith.constant 8 : i32
    %1095 = arith.muli %1094, %c8_i32_281 : i32
    %1096 = tpu.assume_multiple %1095, 8 : i32
    %1097 = arith.index_cast %1093 : i32 to index
    %c0_282 = arith.constant 0 : index
    %1098 = vector.load %arg15[%1097, %c0_282] : memref<64x256xf32, #tpu.memory_space<vmem>>, vector<8x128xf32>
    %1099 = vector.extract_strided_slice %1091 {offsets = [0, 0], sizes = [8, 128], strides = [1, 1]} : vector<8x256xf32> to vector<8x128xf32>
    %1100 = arith.addf %1098, %1099 : vector<8x128xf32>
    %1101 = arith.index_cast %1096 : i32 to index
    %c128_283 = arith.constant 128 : index
    %1102 = vector.load %arg15[%1101, %c128_283] : memref<64x256xf32, #tpu.memory_space<vmem>>, vector<8x128xf32>
    %1103 = vector.extract_strided_slice %1091 {offsets = [0, 128], sizes = [8, 128], strides = [1, 1]} : vector<8x256xf32> to vector<8x128xf32>
    %1104 = arith.addf %1102, %1103 : vector<8x128xf32>
    %1105 = vector.extract_strided_slice %1100 {offsets = [0, 0], sizes = [8, 32], strides = [1, 1]} : vector<8x128xf32> to vector<8x32xf32>
    %1106 = arith.negf %1105 : vector<8x32xf32>
    %1107 = math.exp %1106 : vector<8x32xf32>
    %cst_284 = arith.constant 1.000000e+00 : f32
    %1108 = vector.broadcast %cst_284 : f32 to vector<8x32xf32>
    %1109 = arith.addf %1108, %1107 : vector<8x32xf32>
    %1110 = arith.divf %1108, %1109 : vector<8x32xf32>
    %1111 = vector.extract_strided_slice %1100 {offsets = [0, 32], sizes = [8, 32], strides = [1, 1]} : vector<8x128xf32> to vector<8x32xf32>
    %1112 = arith.negf %1111 : vector<8x32xf32>
    %1113 = math.exp %1112 : vector<8x32xf32>
    %cst_285 = arith.constant 1.000000e+00 : f32
    %1114 = vector.broadcast %cst_285 : f32 to vector<8x32xf32>
    %1115 = arith.addf %1114, %1113 : vector<8x32xf32>
    %1116 = arith.divf %1114, %1115 : vector<8x32xf32>
    %1117 = vector.extract_strided_slice %1100 {offsets = [0, 64], sizes = [8, 32], strides = [1, 1]} : vector<8x128xf32> to vector<8x32xf32>
    %1118 = math.tanh %1117 : vector<8x32xf32>
    %1119 = vector.extract_strided_slice %1100 {offsets = [0, 96], sizes = [8, 32], strides = [1, 1]} : vector<8x128xf32> to vector<8x32xf32>
    %1120 = arith.negf %1119 : vector<8x32xf32>
    %1121 = math.exp %1120 : vector<8x32xf32>
    %cst_286 = arith.constant 1.000000e+00 : f32
    %1122 = vector.broadcast %cst_286 : f32 to vector<8x32xf32>
    %1123 = arith.addf %1122, %1121 : vector<8x32xf32>
    %1124 = arith.divf %1122, %1123 : vector<8x32xf32>
    %1125 = vector.extract_strided_slice %1104 {offsets = [0, 0], sizes = [8, 32], strides = [1, 1]} : vector<8x128xf32> to vector<8x32xf32>
    %1126 = arith.negf %1125 : vector<8x32xf32>
    %1127 = math.exp %1126 : vector<8x32xf32>
    %cst_287 = arith.constant 1.000000e+00 : f32
    %1128 = vector.broadcast %cst_287 : f32 to vector<8x32xf32>
    %1129 = arith.addf %1128, %1127 : vector<8x32xf32>
    %1130 = arith.divf %1128, %1129 : vector<8x32xf32>
    %1131 = vector.extract_strided_slice %1104 {offsets = [0, 32], sizes = [8, 32], strides = [1, 1]} : vector<8x128xf32> to vector<8x32xf32>
    %1132 = arith.negf %1131 : vector<8x32xf32>
    %1133 = math.exp %1132 : vector<8x32xf32>
    %cst_288 = arith.constant 1.000000e+00 : f32
    %1134 = vector.broadcast %cst_288 : f32 to vector<8x32xf32>
    %1135 = arith.addf %1134, %1133 : vector<8x32xf32>
    %1136 = arith.divf %1134, %1135 : vector<8x32xf32>
    %1137 = vector.extract_strided_slice %1104 {offsets = [0, 64], sizes = [8, 32], strides = [1, 1]} : vector<8x128xf32> to vector<8x32xf32>
    %1138 = math.tanh %1137 : vector<8x32xf32>
    %1139 = vector.extract_strided_slice %1104 {offsets = [0, 96], sizes = [8, 32], strides = [1, 1]} : vector<8x128xf32> to vector<8x32xf32>
    %1140 = arith.negf %1139 : vector<8x32xf32>
    %1141 = math.exp %1140 : vector<8x32xf32>
    %cst_289 = arith.constant 1.000000e+00 : f32
    %1142 = vector.broadcast %cst_289 : f32 to vector<8x32xf32>
    %1143 = arith.addf %1142, %1141 : vector<8x32xf32>
    %1144 = arith.divf %1142, %1143 : vector<8x32xf32>
    %1145 = arith.mulf %1116, %1078 : vector<8x32xf32>
    %1146 = arith.mulf %1110, %1118 : vector<8x32xf32>
    %1147 = arith.addf %1145, %1146 : vector<8x32xf32>
    %1148 = arith.mulf %1136, %1081 : vector<8x32xf32>
    %1149 = arith.mulf %1130, %1138 : vector<8x32xf32>
    %1150 = arith.addf %1148, %1149 : vector<8x32xf32>
    %1151 = math.tanh %1147 : vector<8x32xf32>
    %1152 = arith.mulf %1124, %1151 : vector<8x32xf32>
    %1153 = math.tanh %1150 : vector<8x32xf32>
    %1154 = arith.mulf %1144, %1153 : vector<8x32xf32>
    %1155 = arith.index_cast %1093 : i32 to index
    %c0_290 = arith.constant 0 : index
    %1156 = vector.load %arg16[%1155, %c0_290] : memref<64x32xf32, #tpu.memory_space<vmem>>, vector<8x32xf32>
    tpu.vector_store %arg16[%1155, %c0_290], %1152 {strides = array<i32>} : memref<64x32xf32, #tpu.memory_space<vmem>>, vector<8x32xf32>,
    %1157 = arith.index_cast %1096 : i32 to index
    %c0_291 = arith.constant 0 : index
    %1158 = vector.load %arg17[%1157, %c0_291] : memref<64x32xf32, #tpu.memory_space<vmem>>, vector<8x32xf32>
    tpu.vector_store %arg17[%1157, %c0_291], %1154 {strides = array<i32>} : memref<64x32xf32, #tpu.memory_space<vmem>>, vector<8x32xf32>,
    %1159 = tpu.concatenate %1152, %1154 in 1 : vector<8x32xf32>, vector<8x32xf32> -> vector<8x64xf32>
    %c8_i32_292 = arith.constant 8 : i32
    %1160 = vector.extract_strided_slice %1159 {offsets = [0, 0], sizes = [8, 32], strides = [1, 1]} : vector<8x64xf32> to vector<8x32xf32>
    %c2_293 = arith.constant 2 : index
    %c0_294 = arith.constant 0 : index
    %c0_295 = arith.constant 0 : index
    %1161 = vector.load %arg13[%c2_293, %c0_294, %c0_295] : memref<4x8x32xf32, #tpu.memory_space<vmem>>, vector<1x8x32xf32>
    %1162 = vector.shape_cast %1161 : vector<1x8x32xf32> to vector<8x32xf32>
    %1163 = vector.shape_cast %1160 : vector<8x32xf32> to vector<1x8x32xf32>
    tpu.vector_store %arg13[%c2_293, %c0_294, %c0_295], %1163 {strides = array<i32>} : memref<4x8x32xf32, #tpu.memory_space<vmem>>, vector<1x8x32xf32>,
    %1164 = vector.extract_strided_slice %1159 {offsets = [0, 32], sizes = [8, 32], strides = [1, 1]} : vector<8x64xf32> to vector<8x32xf32>
    %c3_296 = arith.constant 3 : index
    %c0_297 = arith.constant 0 : index
    %c0_298 = arith.constant 0 : index
    %1165 = vector.load %arg13[%c3_296, %c0_297, %c0_298] : memref<4x8x32xf32, #tpu.memory_space<vmem>>, vector<1x8x32xf32>
    %1166 = vector.shape_cast %1165 : vector<1x8x32xf32> to vector<8x32xf32>
    %1167 = vector.shape_cast %1164 : vector<8x32xf32> to vector<1x8x32xf32>
    tpu.vector_store %arg13[%c3_296, %c0_297, %c0_298], %1167 {strides = array<i32>} : memref<4x8x32xf32, #tpu.memory_space<vmem>>, vector<1x8x32xf32>,
    %c2_299 = arith.constant 2 : index
    %c0_300 = arith.constant 0 : index
    %c0_301 = arith.constant 0 : index
    %1168 = vector.load %arg14[%c2_299, %c0_300, %c0_301] : memref<4x8x32xf32, #tpu.memory_space<vmem>>, vector<1x8x32xf32>
    %1169 = vector.shape_cast %1168 : vector<1x8x32xf32> to vector<8x32xf32>
    %1170 = vector.shape_cast %1147 : vector<8x32xf32> to vector<1x8x32xf32>
    tpu.vector_store %arg14[%c2_299, %c0_300, %c0_301], %1170 {strides = array<i32>} : memref<4x8x32xf32, #tpu.memory_space<vmem>>, vector<1x8x32xf32>,
    %c3_302 = arith.constant 3 : index
    %c0_303 = arith.constant 0 : index
    %c0_304 = arith.constant 0 : index
    %1171 = vector.load %arg14[%c3_302, %c0_303, %c0_304] : memref<4x8x32xf32, #tpu.memory_space<vmem>>, vector<1x8x32xf32>
    %1172 = vector.shape_cast %1171 : vector<1x8x32xf32> to vector<8x32xf32>
    %1173 = vector.shape_cast %1150 : vector<8x32xf32> to vector<1x8x32xf32>
    tpu.vector_store %arg14[%c3_302, %c0_303, %c0_304], %1173 {strides = array<i32>} : memref<4x8x32xf32, #tpu.memory_space<vmem>>, vector<1x8x32xf32>,
    %c0_305 = arith.constant 0 : index
    %c0_306 = arith.constant 0 : index
    %1174 = vector.load %arg16[%c0_305, %c0_306] : memref<64x32xf32, #tpu.memory_space<vmem>>, vector<64x32xf32>
    %c0_307 = arith.constant 0 : index
    %c0_308 = arith.constant 0 : index
    %1175 = vector.load %arg17[%c0_307, %c0_308] : memref<64x32xf32, #tpu.memory_space<vmem>>, vector<64x32xf32>
    %1176 = tpu.concatenate %1174, %1175 in 1 : vector<64x32xf32>, vector<64x32xf32> -> vector<64x64xf32>
    %c0_309 = arith.constant 0 : index
    %c0_310 = arith.constant 0 : index
    %1177 = vector.load %arg6[%c0_309, %c0_310] : memref<64x64xf32, #tpu.memory_space<vmem>>, vector<64x64xf32>
    %cst_311 = arith.constant dense<0.000000e+00> : vector<64x64xf32>
    %1178 = tpu.matmul %1176, %1177, %cst_311 {dimension_numbers = #tpu.dot_dimension_numbers<[1], [0], [0], [1], [0, 0, 1, 1], [], []>} : vector<64x64xf32>, vector<64x64xf32>, vector<64x64xf32> -> vector<64x64xf32>
    %c0_312 = arith.constant 0 : index
    %c0_313 = arith.constant 0 : index
    %1179 = vector.load %arg7[%c0_312, %c0_313] : memref<1x64xf32, #tpu.memory_space<vmem>>, vector<1x64xf32>
    %1180 = vector.broadcast %1179 : vector<1x64xf32> to vector<64x64xf32>
    %1181 = arith.addf %1178, %1180 : vector<64x64xf32>
    %cst_314 = arith.constant 0.000000e+00 : f32
    %1182 = vector.broadcast %cst_314 : f32 to vector<64x64xf32>
    %1183 = arith.maximumf %1181, %1182 : vector<64x64xf32>
    %c0_315 = arith.constant 0 : index
    %c0_316 = arith.constant 0 : index
    %1184 = vector.load %arg8[%c0_315, %c0_316] : memref<64x32xf32, #tpu.memory_space<vmem>>, vector<64x32xf32>
    %cst_317 = arith.constant dense<0.000000e+00> : vector<64x32xf32>
    %1185 = tpu.matmul %1183, %1184, %cst_317 {dimension_numbers = #tpu.dot_dimension_numbers<[1], [0], [0], [1], [0, 0, 1, 1], [], []>} : vector<64x64xf32>, vector<64x32xf32>, vector<64x32xf32> -> vector<64x32xf32>
    %c0_318 = arith.constant 0 : index
    %c0_319 = arith.constant 0 : index
    %1186 = vector.load %arg9[%c0_318, %c0_319] : memref<1x32xf32, #tpu.memory_space<vmem>>, vector<1x32xf32>
    %1187 = vector.broadcast %1186 : vector<1x32xf32> to vector<64x32xf32>
    %1188 = arith.addf %1185, %1187 : vector<64x32xf32>
    %cst_320 = arith.constant 0.000000e+00 : f32
    %1189 = vector.broadcast %cst_320 : f32 to vector<64x32xf32>
    %1190 = arith.maximumf %1188, %1189 : vector<64x32xf32>
    %c0_321 = arith.constant 0 : index
    %c0_322 = arith.constant 0 : index
    %1191 = vector.load %arg10[%c0_321, %c0_322] : memref<32x128xf32, #tpu.memory_space<vmem>>, vector<32x128xf32>
    %cst_323 = arith.constant dense<0.000000e+00> : vector<64x128xf32>
    %1192 = tpu.matmul %1190, %1191, %cst_323 {dimension_numbers = #tpu.dot_dimension_numbers<[1], [0], [0], [1], [0, 0, 1, 1], [], []>} : vector<64x32xf32>, vector<32x128xf32>, vector<64x128xf32> -> vector<64x128xf32>
    %c0_324 = arith.constant 0 : index
    %c0_325 = arith.constant 0 : index
    %1193 = vector.load %arg11[%c0_324, %c0_325] : memref<1x128xf32, #tpu.memory_space<vmem>>, vector<1x128xf32>
    %1194 = vector.broadcast %1193 : vector<1x128xf32> to vector<64x128xf32>
    %1195 = arith.addf %1192, %1194 : vector<64x128xf32>
    %c0_326 = arith.constant 0 : index
    %c0_327 = arith.constant 0 : index
    %1196 = vector.load %arg12[%c0_326, %c0_327] : memref<64x128xf32, #tpu.memory_space<vmem>>, vector<64x128xf32>
    tpu.vector_store %arg12[%c0_326, %c0_327], %1195 {strides = array<i32>} : memref<64x128xf32, #tpu.memory_space<vmem>>, vector<64x128xf32>,
    return
  }
}

</mosaic_0001>

<llo_original>
// kernel: model_forward.1
$region0: #{model_forward.1}
  #allocation0 [shape = 'u32[]', space=smem, size = 0x4, offset = 0x4, fixed_abs, tag = 'smem constant byte address 0x4 - core index']
  #allocation1 [shape = 'u32[144,128]{1,0:T(1,128)}', space=vmem, size = 0x12000, scoped, tag = 'internal scratch']
  #allocation2 [shape = 'f32[64,256]{1,0:T(8,128)}', space=vmem, size = 0x10000, scoped, tag = 'scratch operand']
  #allocation3 [shape = 'f32[64,32]{1,0:T(8,128)}', space=vmem, size = 0x8000, scoped, tag = 'scratch operand']
  #allocation4 [shape = 'f32[64,32]{1,0:T(8,128)}', space=vmem, size = 0x8000, scoped, tag = 'scratch operand']
  %s0 = inlined_call_operand.vmem [shape: f32[64,64], index: 0, kind: input, shape index: {}]
  %s1 = inlined_call_operand.vmem [shape: f32[2,64,256], index: 1, kind: input, shape index: {}]
  %s2 = inlined_call_operand.hbm [shape: f32[2,64,256], index: 2, kind: input, shape index: {}]
  %s3 = inlined_call_operand.vmem [shape: f32[2,1,256], index: 3, kind: input, shape index: {}]
  %s4 = inlined_call_operand.vmem [shape: f32[4,8,32], index: 4, kind: input, shape index: {}, may-alias: {4,5}]
  %s5 = inlined_call_operand.vmem [shape: f32[4,8,32], index: 5, kind: input, shape index: {}, may-alias: {4,5}]
  %s6 = inlined_call_operand.vmem [shape: f32[64,64], index: 6, kind: input, shape index: {}]
  %s7 = inlined_call_operand.vmem [shape: f32[1,64], index: 7, kind: input, shape index: {}]
  %s8 = inlined_call_operand.vmem [shape: f32[64,32], index: 8, kind: input, shape index: {}]
  %s9 = inlined_call_operand.vmem [shape: f32[1,32], index: 9, kind: input, shape index: {}]
  %s10 = inlined_call_operand.vmem [shape: f32[32,128], index: 10, kind: input, shape index: {}]
  %s11 = inlined_call_operand.vmem [shape: f32[1,128], index: 11, kind: input, shape index: {}]
  %s12 = inlined_call_operand.vmem [shape: f32[64,128], index: 12, kind: output, shape index: {0}]
  %s13 = inlined_call_operand.vmem [shape: f32[4,8,32], index: 13, kind: output, shape index: {1}]
  %s14 = inlined_call_operand.vmem [shape: f32[4,8,32], index: 14, kind: output, shape index: {2}]
  %15 = xla_tuple %s12, %s13, %s14
  %s16 = sld [smem:[#allocation0]]
  $region78: #{model_forward.1} parent=0
    _
  %s18 = ssub.s32 1, %s16
  %s19 = scalar_select 0, %s18, %s16
  $region1: #{model_forward.1} parent=0
    #allocation5 [shape = 'u8[131072]{0}', space=vmem, size = 0x20000, scoped, tag = 'input window, operand 2, single buffered']
    #allocation6 [shape = 's32[1]{0}', space=sflag, size = 0x4, scoped, tag = 'scoped memory for model_forward.1']
    %20 = vsyncpa [#allocation6], 0
    // Predicated region
    $region2: #{model_forward.1} parent=1 // pred_check
      _
    $region3: #{model_forward.1} parent=1 // pred_check_branch
      %22 = sbr.rel (0) target = $region5
    $region4: #{model_forward.1} parent=1 // pred_region
      _
    $region5: #{model_forward.1} parent=1 // pred_fallthru
      _
    // Predicated region
    $region6: #{model_forward.1} parent=1 // pred_check
      _
    $region7: #{model_forward.1} parent=1 // pred_check_branch
      %24 = sbr.rel (0) target = $region9
    $region8: #{model_forward.1} parent=1 // pred_region
      _
    $region9: #{model_forward.1} parent=1 // pred_fallthru
      _
    // Predicated region
    $region10: #{model_forward.1} parent=1 // pred_check
      _
    $region11: #{model_forward.1} parent=1 // pred_check_branch
      %26 = sbr.rel (0) target = $region13
    $region12: #{model_forward.1} parent=1 // pred_region
      %s28 = ssub.s32 4096, 4096
      %29 = vsyncadd [#allocation6], %s28
      %s30 = sshll.u32 [#allocation5], 4
      %s31 = int_to_ptr.vmem [resolvable:$true] %s30
      %36 = dma.hbm_to_vmem [thread:$0]  %s2, 4096, %s31, [#allocation6], 256, 256, 16
    $region13: #{model_forward.1} parent=1 // pred_fallthru
      _
    // Predicated region
    $region14: #{model_forward.1} parent=1 // pred_check
      _
    $region15: #{model_forward.1} parent=1 // pred_check_branch
      %38 = sbr.rel (0) target = $region17
    $region16: #{model_forward.1} parent=1 // pred_region
      _
    $region17: #{model_forward.1} parent=1 // pred_fallthru
      _
    // Predicated region
    $region18: #{model_forward.1} parent=1 // pred_check
      _
    $region19: #{model_forward.1} parent=1 // pred_check_branch
      %40 = sbr.rel (0) target = $region21
    $region20: #{model_forward.1} parent=1 // pred_region
      _
    $region21: #{model_forward.1} parent=1 // pred_fallthru
      _
    // Predicated region
    $region22: #{model_forward.1} parent=1 // pred_check
      _
    $region23: #{model_forward.1} parent=1 // pred_check_branch
      %42 = sbr.rel (0) target = $region25
    $region24: #{model_forward.1} parent=1 // pred_region
      _
    $region25: #{model_forward.1} parent=1 // pred_fallthru
      _
    // Predicated region
    $region26: #{model_forward.1} parent=1 // pred_check
      _
    $region27: #{model_forward.1} parent=1 // pred_check_branch
      %44 = sbr.rel (0) target = $region29
    $region28: #{model_forward.1} parent=1 // pred_region
      _
    $region29: #{model_forward.1} parent=1 // pred_fallthru
      _
    // Predicated region
    $region30: #{model_forward.1} parent=1 // pred_check
      _
    $region31: #{model_forward.1} parent=1 // pred_check_branch
      %46 = sbr.rel (0) target = $region33
    $region32: #{model_forward.1} parent=1 // pred_region
      _
    $region33: #{model_forward.1} parent=1 // pred_fallthru
      _
    // Predicated region
    $region34: #{model_forward.1} parent=1 // pred_check
      _
    $region35: #{model_forward.1} parent=1 // pred_check_branch
      %48 = sbr.rel (0) target = $region37
    $region36: #{model_forward.1} parent=1 // pred_region
      _
    $region37: #{model_forward.1} parent=1 // pred_fallthru
      _
    // Predicated region
    $region38: #{model_forward.1} parent=1 // pred_check
      _
    $region39: #{model_forward.1} parent=1 // pred_check_branch
      %50 = sbr.rel (0) target = $region41
    $region40: #{model_forward.1} parent=1 // pred_region
      _
    $region41: #{model_forward.1} parent=1 // pred_fallthru
      _
    // Predicated region
    $region42: #{model_forward.1} parent=1 // pred_check
      _
    $region43: #{model_forward.1} parent=1 // pred_check_branch
      %52 = sbr.rel (0) target = $region45
    $region44: #{model_forward.1} parent=1 // pred_region
      _
    $region45: #{model_forward.1} parent=1 // pred_fallthru
      _
    // Predicated region
    $region46: #{model_forward.1} parent=1 // pred_check
      _
    $region47: #{model_forward.1} parent=1 // pred_check_branch
      %54 = sbr.rel (0) target = $region49
    $region48: #{model_forward.1} parent=1 // pred_region
      _
    $region49: #{model_forward.1} parent=1 // pred_fallthru
      _
    // Predicated region
    $region50: #{model_forward.1} parent=1 // pred_check
      _
    $region51: #{model_forward.1} parent=1 // pred_check_branch
      %56 = sbr.rel (0) target = $region53
    $region52: #{model_forward.1} parent=1 // pred_region
      %57 = dma.done [#allocation6], 4096
    $region53: #{model_forward.1} parent=1 // pred_fallthru
      _
    %v58 = vld [vmem:[%s0] sm:$0xff]
    %v59 = vld [vmem:[%s0 + $0x8] sm:$0xff]
    %v60 = vld [vmem:[%s0 + $0x10] sm:$0xff]
    %v61 = vld [vmem:[%s0 + $0x18] sm:$0xff]
    %v62 = vld [vmem:[%s0 + $0x20] sm:$0xff]
    %v63 = vld [vmem:[%s0 + $0x28] sm:$0xff]
    %v64 = vld [vmem:[%s0 + $0x30] sm:$0xff]
    %v65 = vld [vmem:[%s0 + $0x38] sm:$0xff]
    %v66 = vld [vmem:[%s1] sm:$0xff]
    %v67 = vld [vmem:[%s1 + $0x8] sm:$0xff]
    %v68 = vld [vmem:[%s1 + $0x10] sm:$0xff]
    %v69 = vld [vmem:[%s1 + $0x18] sm:$0xff]
    %v70 = vld [vmem:[%s1 + $0x20] sm:$0xff]
    %v71 = vld [vmem:[%s1 + $0x28] sm:$0xff]
    %v72 = vld [vmem:[%s1 + $0x30] sm:$0xff]
    %v73 = vld [vmem:[%s1 + $0x38] sm:$0xff]
    %v74 = vld [vmem:[%s1 + $0x40] sm:$0xff]
    %v75 = vld [vmem:[%s1 + $0x48] sm:$0xff]
    %v76 = vld [vmem:[%s1 + $0x50] sm:$0xff]
    %v77 = vld [vmem:[%s1 + $0x58] sm:$0xff]
    %v78 = vld [vmem:[%s1 + $0x60] sm:$0xff]
    %v79 = vld [vmem:[%s1 + $0x68] sm:$0xff]
    %v80 = vld [vmem:[%s1 + $0x70] sm:$0xff]
    %v81 = vld [vmem:[%s1 + $0x78] sm:$0xff]
    %v82 = vld [vmem:[%s3] sm:$0x3]
    %v84 = vlaneseq
    %v85 = vshrl.u32 %v84, 7
    %v86 = vsub.s32 0, %v85
    %v87 = vrot.slane %v82, %v86
    %v88 = vlaneseq
    %v89 = vshrl.u32 %v88, 7
    %v90 = vsub.s32 1, %v89
    %v91 = vrot.slane %v82, %v90
    %vm94 = vcmask 523264
    %v96 = vsel %vm94, %v58, 0
    %v99 = vsel %vm94, %v59, 0
    %v102 = vsel %vm94, %v60, 0
    %v105 = vsel %vm94, %v61, 0
    %v108 = vsel %vm94, %v62, 0
    %v111 = vsel %vm94, %v63, 0
    %v114 = vsel %vm94, %v64, 0
    %v117 = vsel %vm94, %v65, 0
    %119 = vmatprep.subr.mxu0 0.0
    %120 = vmatpush1.msra.mxu0 0.0
    %121 = vmatprep.subr.mxu0 0.0
    %122 = vmatpush1.msra.mxu0 0.0
    %123 = vmatprep.subr.mxu0 0.0
    %124 = vmatpush1.msra.mxu0 0.0
    %125 = vmatprep.subr.mxu0 0.0
    %126 = vmatpush1.msra.mxu0 0.0
    %127 = vmatprep.subr.mxu0 0.0
    %128 = vmatpush1.msra.mxu0 0.0
    %129 = vmatprep.subr.mxu0 0.0
    %130 = vmatpush1.msra.mxu0 0.0
    %131 = vmatprep.subr.mxu0 0.0
    %132 = vmatpush1.msra.mxu0 0.0
    %133 = vmatprep.subr.mxu0 0.0
    %134 = vmatpush1.msra.mxu0 0.0
    %135 = vmatprep.subr.mxu0 %v81
    %136 = vmatpush1.msra.mxu0 %v80
    %137 = vmatprep.subr.mxu0 %v79
    %138 = vmatpush1.msra.mxu0 %v78
    %139 = vmatprep.subr.mxu0 %v77
    %140 = vmatpush1.msra.mxu0 %v76
    %141 = vmatprep.subr.mxu0 %v75
    %142 = vmatpush1.msra.mxu0 %v74
    %143 = vmatprep.subr.mxu0 %v73
    %144 = vmatpush1.msra.mxu0 %v72
    %145 = vmatprep.subr.mxu0 %v71
    %146 = vmatpush1.msra.mxu0 %v70
    %147 = vmatprep.subr.mxu0 %v69
    %148 = vmatpush1.msra.mxu0 %v68
    %149 = vmatprep.subr.mxu0 %v67
    %150 = vmatpush1.msra.mxu0 %v66
    %151 = vmatprep.subr.mxu0 0.0
    %152 = vmatpush2.msra.mxu0 0.0
    %153 = vmatprep.subr.mxu0 0.0
    %154 = vmatpush2.msra.mxu0 0.0
    %155 = vmatprep.subr.mxu0 0.0
    %156 = vmatpush2.msra.mxu0 0.0
    %157 = vmatprep.subr.mxu0 0.0
    %158 = vmatpush2.msra.mxu0 0.0
    %159 = vmatprep.subr.mxu0 0.0
    %160 = vmatpush2.msra.mxu0 0.0
    %161 = vmatprep.subr.mxu0 0.0
    %162 = vmatpush2.msra.mxu0 0.0
    %163 = vmatprep.subr.mxu0 0.0
    %164 = vmatpush2.msra.mxu0 0.0
    %165 = vmatprep.subr.mxu0 0.0
    %166 = vmatpush2.msra.mxu0 0.0
    %167 = vmatprep.subr.mxu0 0.0
    %168 = vmatpush2.msra.mxu0 0.0
    %169 = vmatprep.subr.mxu0 0.0
    %170 = vmatpush2.msra.mxu0 0.0
    %171 = vmatprep.subr.mxu0 0.0
    %172 = vmatpush2.msra.mxu0 0.0
    %173 = vmatprep.subr.mxu0 0.0
    %174 = vmatpush2.msra.mxu0 0.0
    %175 = vmatprep.subr.mxu0 0.0
    %176 = vmatpush2.msra.mxu0 0.0
    %177 = vmatprep.subr.mxu0 0.0
    %178 = vmatpush2.msra.mxu0 0.0
    %179 = vmatprep.subr.mxu0 0.0
    %180 = vmatpush2.msra.mxu0 0.0
    %181 = vmatprep.subr.mxu0 0.0
    %182 = vmatpush2.msra.mxu0 0.0
    %183 = vmatprep.mubr.f32.mxu0 0.0
    %184 = vmatmul.mubr.f32.gmra.mxu0 %v96
    %v185 = vpop.f32.mrf.mxu0
    %v186 = vadd.f32 %v87, %v185
    %v187 = vpop.f32.mrf.mxu0
    %v188 = vadd.f32 %v91, %v187
    %189 = vmatprep.mubr.f32.mxu0 0.0
    %190 = vmatmul.mubr.f32.gmra.mxu0 %v99
    %v191 = vpop.f32.mrf.mxu0
    %v192 = vadd.f32 %v87, %v191
    %v193 = vpop.f32.mrf.mxu0
    %v194 = vadd.f32 %v91, %v193
    %195 = vmatprep.mubr.f32.mxu0 0.0
    %196 = vmatmul.mubr.f32.gmra.mxu0 %v102
    %v197 = vpop.f32.mrf.mxu0
    %v198 = vadd.f32 %v87, %v197
    %v199 = vpop.f32.mrf.mxu0
    %v200 = vadd.f32 %v91, %v199
    %201 = vmatprep.mubr.f32.mxu0 0.0
    %202 = vmatmul.mubr.f32.gmra.mxu0 %v105
    %v203 = vpop.f32.mrf.mxu0
    %v204 = vadd.f32 %v87, %v203
    %v205 = vpop.f32.mrf.mxu0
    %v206 = vadd.f32 %v91, %v205
    %207 = vmatprep.mubr.f32.mxu0 0.0
    %208 = vmatmul.mubr.f32.gmra.mxu0 %v108
    %v209 = vpop.f32.mrf.mxu0
    %v210 = vadd.f32 %v87, %v209
    %v211 = vpop.f32.mrf.mxu0
    %v212 = vadd.f32 %v91, %v211
    %213 = vmatprep.mubr.f32.mxu0 0.0
    %214 = vmatmul.mubr.f32.gmra.mxu0 %v111
    %v215 = vpop.f32.mrf.mxu0
    %v216 = vadd.f32 %v87, %v215
    %v217 = vpop.f32.mrf.mxu0
    %v218 = vadd.f32 %v91, %v217
    %219 = vmatprep.mubr.f32.mxu0 0.0
    %220 = vmatmul.mubr.f32.gmra.mxu0 %v114
    %v221 = vpop.f32.mrf.mxu0
    %v222 = vadd.f32 %v87, %v221
    %v223 = vpop.f32.mrf.mxu0
    %v224 = vadd.f32 %v91, %v223
    %225 = vmatprep.mubr.f32.mxu0 0.0
    %226 = vmatmul.mubr.f32.gmra.mxu0 %v117
    %v227 = vpop.f32.mrf.mxu0
    %v228 = vadd.f32 %v87, %v227
    %v229 = vpop.f32.mrf.mxu0
    %v230 = vadd.f32 %v91, %v229
    %231 = vdwg.mxu0
    %232 = vst [vmem:[#allocation2] sm:$0xff] %v186
    %233 = vst [vmem:[#allocation2 + $0x8] sm:$0xff] %v188
    %234 = vst [vmem:[#allocation2 + $0x10] sm:$0xff] %v192
    %235 = vst [vmem:[#allocation2 + $0x18] sm:$0xff] %v194
    %236 = vst [vmem:[#allocation2 + $0x20] sm:$0xff] %v198
    %237 = vst [vmem:[#allocation2 + $0x28] sm:$0xff] %v200
    %238 = vst [vmem:[#allocation2 + $0x30] sm:$0xff] %v204
    %239 = vst [vmem:[#allocation2 + $0x38] sm:$0xff] %v206
    %240 = vst [vmem:[#allocation2 + $0x40] sm:$0xff] %v210
    %241 = vst [vmem:[#allocation2 + $0x48] sm:$0xff] %v212
    %242 = vst [vmem:[#allocation2 + $0x50] sm:$0xff] %v216
    %243 = vst [vmem:[#allocation2 + $0x58] sm:$0xff] %v218
    %244 = vst [vmem:[#allocation2 + $0x60] sm:$0xff] %v222
    %245 = vst [vmem:[#allocation2 + $0x68] sm:$0xff] %v224
    %246 = vst [vmem:[#allocation2 + $0x70] sm:$0xff] %v228
    %247 = vst [vmem:[#allocation2 + $0x78] sm:$0xff] %v230
    %v248 = vld [vmem:[#allocation5] sm:$0xff]
    %v249 = vld [vmem:[#allocation5 + $0x8] sm:$0xff]
    %v250 = vld [vmem:[#allocation5 + $0x10] sm:$0xff]
    %v251 = vld [vmem:[#allocation5 + $0x18] sm:$0xff]
    %v252 = vld [vmem:[#allocation5 + $0x20] sm:$0xff]
    %v253 = vld [vmem:[#allocation5 + $0x28] sm:$0xff]
    %v254 = vld [vmem:[#allocation5 + $0x30] sm:$0xff]
    %v255 = vld [vmem:[#allocation5 + $0x38] sm:$0xff]
    %v256 = vld [vmem:[#allocation5 + $0x40] sm:$0xff]
    %v257 = vld [vmem:[#allocation5 + $0x48] sm:$0xff]
    %v258 = vld [vmem:[#allocation5 + $0x50] sm:$0xff]
    %v259 = vld [vmem:[#allocation5 + $0x58] sm:$0xff]
    %v260 = vld [vmem:[#allocation5 + $0x60] sm:$0xff]
    %v261 = vld [vmem:[#allocation5 + $0x68] sm:$0xff]
    %v262 = vld [vmem:[#allocation5 + $0x70] sm:$0xff]
    %v263 = vld [vmem:[#allocation5 + $0x78] sm:$0xff]
    %v264 = vld [vmem:[%s4] sm:$0xff]
    %s265 = scalar_lea.vmem %s4, 8
    %v266 = vld [vmem:[%s265] sm:$0xff]
    %268 = vrot.lane.b32.xlu0 %v266, 32
    %v269 = vpop.permute.xlu0 %268
    %vm271 = vcmask 261120
    %v272 = vsel %vm271, %v264, %v269
    %v273 = vld [vmem:[%s5] sm:$0xff]
    %s274 = scalar_lea.vmem %s5, 8
    %v275 = vld [vmem:[%s274] sm:$0xff]
    %v277 = vsel %vm94, %v272, 0
    %279 = vmatprep.subr.mxu0 0.0
    %280 = vmatpush1.msra.mxu0 0.0
    %281 = vmatprep.subr.mxu0 0.0
    %282 = vmatpush1.msra.mxu0 0.0
    %283 = vmatprep.subr.mxu0 0.0
    %284 = vmatpush1.msra.mxu0 0.0
    %285 = vmatprep.subr.mxu0 0.0
    %286 = vmatpush1.msra.mxu0 0.0
    %287 = vmatprep.subr.mxu0 0.0
    %288 = vmatpush1.msra.mxu0 0.0
    %289 = vmatprep.subr.mxu0 0.0
    %290 = vmatpush1.msra.mxu0 0.0
    %291 = vmatprep.subr.mxu0 0.0
    %292 = vmatpush1.msra.mxu0 0.0
    %293 = vmatprep.subr.mxu0 0.0
    %294 = vmatpush1.msra.mxu0 0.0
    %295 = vmatprep.subr.mxu0 %v263
    %296 = vmatpush1.msra.mxu0 %v262
    %297 = vmatprep.subr.mxu0 %v261
    %298 = vmatpush1.msra.mxu0 %v260
    %299 = vmatprep.subr.mxu0 %v259
    %300 = vmatpush1.msra.mxu0 %v258
    %301 = vmatprep.subr.mxu0 %v257
    %302 = vmatpush1.msra.mxu0 %v256
    %303 = vmatprep.subr.mxu0 %v255
    %304 = vmatpush1.msra.mxu0 %v254
    %305 = vmatprep.subr.mxu0 %v253
    %306 = vmatpush1.msra.mxu0 %v252
    %307 = vmatprep.subr.mxu0 %v251
    %308 = vmatpush1.msra.mxu0 %v250
    %309 = vmatprep.subr.mxu0 %v249
    %310 = vmatpush1.msra.mxu0 %v248
    %311 = vmatprep.subr.mxu0 0.0
    %312 = vmatpush2.msra.mxu0 0.0
    %313 = vmatprep.subr.mxu0 0.0
    %314 = vmatpush2.msra.mxu0 0.0
    %315 = vmatprep.subr.mxu0 0.0
    %316 = vmatpush2.msra.mxu0 0.0
    %317 = vmatprep.subr.mxu0 0.0
    %318 = vmatpush2.msra.mxu0 0.0
    %319 = vmatprep.subr.mxu0 0.0
    %320 = vmatpush2.msra.mxu0 0.0
    %321 = vmatprep.subr.mxu0 0.0
    %322 = vmatpush2.msra.mxu0 0.0
    %323 = vmatprep.subr.mxu0 0.0
    %324 = vmatpush2.msra.mxu0 0.0
    %325 = vmatprep.subr.mxu0 0.0
    %326 = vmatpush2.msra.mxu0 0.0
    %327 = vmatprep.subr.mxu0 0.0
    %328 = vmatpush2.msra.mxu0 0.0
    %329 = vmatprep.subr.mxu0 0.0
    %330 = vmatpush2.msra.mxu0 0.0
    %331 = vmatprep.subr.mxu0 0.0
    %332 = vmatpush2.msra.mxu0 0.0
    %333 = vmatprep.subr.mxu0 0.0
    %334 = vmatpush2.msra.mxu0 0.0
    %335 = vmatprep.subr.mxu0 0.0
    %336 = vmatpush2.msra.mxu0 0.0
    %337 = vmatprep.subr.mxu0 0.0
    %338 = vmatpush2.msra.mxu0 0.0
    %339 = vmatprep.subr.mxu0 0.0
    %340 = vmatpush2.msra.mxu0 0.0
    %341 = vmatprep.subr.mxu0 0.0
    %342 = vmatpush2.msra.mxu0 0.0
    %343 = vmatprep.mubr.f32.mxu0 0.0
    %344 = vmatmul.mubr.f32.gmra.mxu0 %v277
    %v345 = vpop.f32.mrf.mxu0
    %v346 = vadd.f32 0.0, %v345
    %v347 = vpop.f32.mrf.mxu0
    %v348 = vadd.f32 0.0, %v347
    %349 = vdwg.mxu0
    %s350 = smul.u32 0, 2
    %s351 = smul.addr %s350, 8
    %s352 = scalar_lea.vmem [#allocation2], %s351
    %v353 = vld [vmem:[%s352] sm:$0xff]
    %v354 = vadd.f32 %v353, %v346
    %s355 = smul.u32 7, 2
    %s356 = smul.addr %s355, 8
    %s357 = scalar_lea.vmem [#allocation2], %s356
    %v358 = vld [vmem:[%s357 + $0x8] sm:$0xff]
    %v359 = vadd.f32 %v358, %v348
    %v360 = vxor.u32 %v354, 2147483648
    %v361 = vmul.f32 %v360, 1.442695
    %v362 = vpow.pop %v361
    %v363 = vadd.f32 %v362, 1.0
    %v364 = vrcp.pop %v363
    %v365 = vmul.f32 1.0, %v364
    %v366 = vtanh.pop %v354
    %v367 = vxor.u32 %v359, 2147483648
    %v368 = vmul.f32 %v367, 1.442695
    %v369 = vpow.pop %v368
    %v370 = vadd.f32 %v369, 1.0
    %v371 = vrcp.pop %v370
    %v372 = vmul.f32 1.0, %v371
    %v373 = vtanh.pop %v359
    %375 = vrot.lane.b32.xlu0 %v273, 32
    %v376 = vpop.permute.xlu0 %375
    %v378 = vmul.f32 %v365, %v376
    %380 = vrot.lane.b32.xlu0 %v366, 64
    %v381 = vpop.permute.xlu0 %380
    %v383 = vmul.f32 %v365, %v381
    %385 = vrot.lane.b32.xlu0 %v383, 32
    %v386 = vpop.permute.xlu0 %385
    %v388 = vadd.f32 %v378, %v386
    %390 = vrot.lane.b32.xlu0 %v275, 32
    %v391 = vpop.permute.xlu0 %390
    %v393 = vmul.f32 %v372, %v391
    %395 = vrot.lane.b32.xlu0 %v373, 64
    %v396 = vpop.permute.xlu0 %395
    %v398 = vmul.f32 %v372, %v396
    %400 = vrot.lane.b32.xlu0 %v398, 32
    %v401 = vpop.permute.xlu0 %400
    %v403 = vadd.f32 %v393, %v401
    %v404 = vtanh.pop %v388
    %406 = vrot.lane.b32.xlu0 %v404, 64
    %v407 = vpop.permute.xlu0 %406
    %v409 = vmul.f32 %v365, %v407
    %v410 = vtanh.pop %v403
    %412 = vrot.lane.b32.xlu0 %v410, 64
    %v413 = vpop.permute.xlu0 %412
    %v415 = vmul.f32 %v372, %v413
    %417 = vrot.lane.b32.xlu0 %v409, 32
    %v418 = vpop.permute.xlu0 %417
    %420 = vst.msk [vmem:[#allocation3] sm:$0xff] %vm271, %v418
    %422 = vrot.lane.b32.xlu0 %v415, 32
    %v423 = vpop.permute.xlu0 %422
    %s425 = scalar_lea.vmem [#allocation4], 56
    %426 = vst.msk [vmem:[%s425] sm:$0xff] %vm271, %v423
    %427 = vrot.lane.b32.xlu0 %v415, 64
    %v428 = vpop.permute.xlu0 %427
    %v430 = vsel %vm271, %v418, %v428
    %v432 = vsel %vm94, %v430, 0
    %434 = vmatprep.subr.mxu0 0.0
    %435 = vmatpush1.msra.mxu0 0.0
    %436 = vmatprep.subr.mxu0 0.0
    %437 = vmatpush1.msra.mxu0 0.0
    %438 = vmatprep.subr.mxu0 0.0
    %439 = vmatpush1.msra.mxu0 0.0
    %440 = vmatprep.subr.mxu0 0.0
    %441 = vmatpush1.msra.mxu0 0.0
    %442 = vmatprep.subr.mxu0 0.0
    %443 = vmatpush1.msra.mxu0 0.0
    %444 = vmatprep.subr.mxu0 0.0
    %445 = vmatpush1.msra.mxu0 0.0
    %446 = vmatprep.subr.mxu0 0.0
    %447 = vmatpush1.msra.mxu0 0.0
    %448 = vmatprep.subr.mxu0 0.0
    %449 = vmatpush1.msra.mxu0 0.0
    %450 = vmatprep.subr.mxu0 %v263
    %451 = vmatpush1.msra.mxu0 %v262
    %452 = vmatprep.subr.mxu0 %v261
    %453 = vmatpush1.msra.mxu0 %v260
    %454 = vmatprep.subr.mxu0 %v259
    %455 = vmatpush1.msra.mxu0 %v258
    %456 = vmatprep.subr.mxu0 %v257
    %457 = vmatpush1.msra.mxu0 %v256
    %458 = vmatprep.subr.mxu0 %v255
    %459 = vmatpush1.msra.mxu0 %v254
    %460 = vmatprep.subr.mxu0 %v253
    %461 = vmatpush1.msra.mxu0 %v252
    %462 = vmatprep.subr.mxu0 %v251
    %463 = vmatpush1.msra.mxu0 %v250
    %464 = vmatprep.subr.mxu0 %v249
    %465 = vmatpush1.msra.mxu0 %v248
    %466 = vmatprep.subr.mxu0 0.0
    %467 = vmatpush2.msra.mxu0 0.0
    %468 = vmatprep.subr.mxu0 0.0
    %469 = vmatpush2.msra.mxu0 0.0
    %470 = vmatprep.subr.mxu0 0.0
    %471 = vmatpush2.msra.mxu0 0.0
    %472 = vmatprep.subr.mxu0 0.0
    %473 = vmatpush2.msra.mxu0 0.0
    %474 = vmatprep.subr.mxu0 0.0
    %475 = vmatpush2.msra.mxu0 0.0
    %476 = vmatprep.subr.mxu0 0.0
    %477 = vmatpush2.msra.mxu0 0.0
    %478 = vmatprep.subr.mxu0 0.0
    %479 = vmatpush2.msra.mxu0 0.0
    %480 = vmatprep.subr.mxu0 0.0
    %481 = vmatpush2.msra.mxu0 0.0
    %482 = vmatprep.subr.mxu0 0.0
    %483 = vmatpush2.msra.mxu0 0.0
    %484 = vmatprep.subr.mxu0 0.0
    %485 = vmatpush2.msra.mxu0 0.0
    %486 = vmatprep.subr.mxu0 0.0
    %487 = vmatpush2.msra.mxu0 0.0
    %488 = vmatprep.subr.mxu0 0.0
    %489 = vmatpush2.msra.mxu0 0.0
    %490 = vmatprep.subr.mxu0 0.0
    %491 = vmatpush2.msra.mxu0 0.0
    %492 = vmatprep.subr.mxu0 0.0
    %493 = vmatpush2.msra.mxu0 0.0
    %494 = vmatprep.subr.mxu0 0.0
    %495 = vmatpush2.msra.mxu0 0.0
    %496 = vmatprep.subr.mxu0 0.0
    %497 = vmatpush2.msra.mxu0 0.0
    %498 = vmatprep.mubr.f32.mxu0 0.0
    %499 = vmatmul.mubr.f32.gmra.mxu0 %v432
    %v500 = vpop.f32.mrf.mxu0
    %v501 = vadd.f32 0.0, %v500
    %v502 = vpop.f32.mrf.mxu0
    %v503 = vadd.f32 0.0, %v502
    %504 = vdwg.mxu0
    %s505 = smul.u32 1, 2
    %s506 = smul.addr %s505, 8
    %s507 = scalar_lea.vmem [#allocation2], %s506
    %v508 = vld [vmem:[%s507] sm:$0xff]
    %v509 = vadd.f32 %v508, %v501
    %s510 = smul.u32 6, 2
    %s511 = smul.addr %s510, 8
    %s512 = scalar_lea.vmem [#allocation2], %s511
    %v513 = vld [vmem:[%s512 + $0x8] sm:$0xff]
    %v514 = vadd.f32 %v513, %v503
    %v515 = vxor.u32 %v509, 2147483648
    %v516 = vmul.f32 %v515, 1.442695
    %v517 = vpow.pop %v516
    %v518 = vadd.f32 %v517, 1.0
    %v519 = vrcp.pop %v518
    %v520 = vmul.f32 1.0, %v519
    %v521 = vtanh.pop %v509
    %v522 = vxor.u32 %v514, 2147483648
    %v523 = vmul.f32 %v522, 1.442695
    %v524 = vpow.pop %v523
    %v525 = vadd.f32 %v524, 1.0
    %v526 = vrcp.pop %v525
    %v527 = vmul.f32 1.0, %v526
    %v528 = vtanh.pop %v514
    %v529 = vmul.f32 %v520, %v388
    %531 = vrot.lane.b32.xlu0 %v521, 64
    %v532 = vpop.permute.xlu0 %531
    %v534 = vmul.f32 %v520, %v532
    %536 = vrot.lane.b32.xlu0 %v534, 32
    %v537 = vpop.permute.xlu0 %536
    %v539 = vadd.f32 %v529, %v537
    %v540 = vmul.f32 %v527, %v403
    %542 = vrot.lane.b32.xlu0 %v528, 64
    %v543 = vpop.permute.xlu0 %542
    %v545 = vmul.f32 %v527, %v543
    %547 = vrot.lane.b32.xlu0 %v545, 32
    %v548 = vpop.permute.xlu0 %547
    %v550 = vadd.f32 %v540, %v548
    %v551 = vtanh.pop %v539
    %553 = vrot.lane.b32.xlu0 %v551, 64
    %v554 = vpop.permute.xlu0 %553
    %v556 = vmul.f32 %v520, %v554
    %v557 = vtanh.pop %v550
    %559 = vrot.lane.b32.xlu0 %v557, 64
    %v560 = vpop.permute.xlu0 %559
    %v562 = vmul.f32 %v527, %v560
    %564 = vrot.lane.b32.xlu0 %v556, 32
    %v565 = vpop.permute.xlu0 %564
    %s567 = scalar_lea.vmem [#allocation3], 8
    %568 = vst.msk [vmem:[%s567] sm:$0xff] %vm271, %v565
    %570 = vrot.lane.b32.xlu0 %v562, 32
    %v571 = vpop.permute.xlu0 %570
    %s573 = scalar_lea.vmem [#allocation4], 48
    %574 = vst.msk [vmem:[%s573] sm:$0xff] %vm271, %v571
    %575 = vrot.lane.b32.xlu0 %v562, 64
    %v576 = vpop.permute.xlu0 %575
    %v578 = vsel %vm271, %v565, %v576
    %v580 = vsel %vm94, %v578, 0
    %582 = vmatprep.subr.mxu0 0.0
    %583 = vmatpush1.msra.mxu0 0.0
    %584 = vmatprep.subr.mxu0 0.0
    %585 = vmatpush1.msra.mxu0 0.0
    %586 = vmatprep.subr.mxu0 0.0
    %587 = vmatpush1.msra.mxu0 0.0
    %588 = vmatprep.subr.mxu0 0.0
    %589 = vmatpush1.msra.mxu0 0.0
    %590 = vmatprep.subr.mxu0 0.0
    %591 = vmatpush1.msra.mxu0 0.0
    %592 = vmatprep.subr.mxu0 0.0
    %593 = vmatpush1.msra.mxu0 0.0
    %594 = vmatprep.subr.mxu0 0.0
    %595 = vmatpush1.msra.mxu0 0.0
    %596 = vmatprep.subr.mxu0 0.0
    %597 = vmatpush1.msra.mxu0 0.0
    %598 = vmatprep.subr.mxu0 %v263
    %599 = vmatpush1.msra.mxu0 %v262
    %600 = vmatprep.subr.mxu0 %v261
    %601 = vmatpush1.msra.mxu0 %v260
    %602 = vmatprep.subr.mxu0 %v259
    %603 = vmatpush1.msra.mxu0 %v258
    %604 = vmatprep.subr.mxu0 %v257
    %605 = vmatpush1.msra.mxu0 %v256
    %606 = vmatprep.subr.mxu0 %v255
    %607 = vmatpush1.msra.mxu0 %v254
    %608 = vmatprep.subr.mxu0 %v253
    %609 = vmatpush1.msra.mxu0 %v252
    %610 = vmatprep.subr.mxu0 %v251
    %611 = vmatpush1.msra.mxu0 %v250
    %612 = vmatprep.subr.mxu0 %v249
    %613 = vmatpush1.msra.mxu0 %v248
    %614 = vmatprep.subr.mxu0 0.0
    %615 = vmatpush2.msra.mxu0 0.0
    %616 = vmatprep.subr.mxu0 0.0
    %617 = vmatpush2.msra.mxu0 0.0
    %618 = vmatprep.subr.mxu0 0.0
    %619 = vmatpush2.msra.mxu0 0.0
    %620 = vmatprep.subr.mxu0 0.0
    %621 = vmatpush2.msra.mxu0 0.0
    %622 = vmatprep.subr.mxu0 0.0
    %623 = vmatpush2.msra.mxu0 0.0
    %624 = vmatprep.subr.mxu0 0.0
    %625 = vmatpush2.msra.mxu0 0.0
    %626 = vmatprep.subr.mxu0 0.0
    %627 = vmatpush2.msra.mxu0 0.0
    %628 = vmatprep.subr.mxu0 0.0
    %629 = vmatpush2.msra.mxu0 0.0
    %630 = vmatprep.subr.mxu0 0.0
    %631 = vmatpush2.msra.mxu0 0.0
    %632 = vmatprep.subr.mxu0 0.0
    %633 = vmatpush2.msra.mxu0 0.0
    %634 = vmatprep.subr.mxu0 0.0
    %635 = vmatpush2.msra.mxu0 0.0
    %636 = vmatprep.subr.mxu0 0.0
    %637 = vmatpush2.msra.mxu0 0.0
    %638 = vmatprep.subr.mxu0 0.0
    %639 = vmatpush2.msra.mxu0 0.0
    %640 = vmatprep.subr.mxu0 0.0
    %641 = vmatpush2.msra.mxu0 0.0
    %642 = vmatprep.subr.mxu0 0.0
    %643 = vmatpush2.msra.mxu0 0.0
    %644 = vmatprep.subr.mxu0 0.0
    %645 = vmatpush2.msra.mxu0 0.0
    %646 = vmatprep.mubr.f32.mxu0 0.0
    %647 = vmatmul.mubr.f32.gmra.mxu0 %v580
    %v648 = vpop.f32.mrf.mxu0
    %v649 = vadd.f32 0.0, %v648
    %v650 = vpop.f32.mrf.mxu0
    %v651 = vadd.f32 0.0, %v650
    %652 = vdwg.mxu0
    %s653 = smul.u32 2, 2
    %s654 = smul.addr %s653, 8
    %s655 = scalar_lea.vmem [#allocation2], %s654
    %v656 = vld [vmem:[%s655] sm:$0xff]
    %v657 = vadd.f32 %v656, %v649
    %s658 = smul.u32 5, 2
    %s659 = smul.addr %s658, 8
    %s660 = scalar_lea.vmem [#allocation2], %s659
    %v661 = vld [vmem:[%s660 + $0x8] sm:$0xff]
    %v662 = vadd.f32 %v661, %v651
    %v663 = vxor.u32 %v657, 2147483648
    %v664 = vmul.f32 %v663, 1.442695
    %v665 = vpow.pop %v664
    %v666 = vadd.f32 %v665, 1.0
    %v667 = vrcp.pop %v666
    %v668 = vmul.f32 1.0, %v667
    %v669 = vtanh.pop %v657
    %v670 = vxor.u32 %v662, 2147483648
    %v671 = vmul.f32 %v670, 1.442695
    %v672 = vpow.pop %v671
    %v673 = vadd.f32 %v672, 1.0
    %v674 = vrcp.pop %v673
    %v675 = vmul.f32 1.0, %v674
    %v676 = vtanh.pop %v662
    %v677 = vmul.f32 %v668, %v539
    %679 = vrot.lane.b32.xlu0 %v669, 64
    %v680 = vpop.permute.xlu0 %679
    %v682 = vmul.f32 %v668, %v680
    %684 = vrot.lane.b32.xlu0 %v682, 32
    %v685 = vpop.permute.xlu0 %684
    %v687 = vadd.f32 %v677, %v685
    %v688 = vmul.f32 %v675, %v550
    %690 = vrot.lane.b32.xlu0 %v676, 64
    %v691 = vpop.permute.xlu0 %690
    %v693 = vmul.f32 %v675, %v691
    %695 = vrot.lane.b32.xlu0 %v693, 32
    %v696 = vpop.permute.xlu0 %695
    %v698 = vadd.f32 %v688, %v696
    %v699 = vtanh.pop %v687
    %701 = vrot.lane.b32.xlu0 %v699, 64
    %v702 = vpop.permute.xlu0 %701
    %v704 = vmul.f32 %v668, %v702
    %v705 = vtanh.pop %v698
    %707 = vrot.lane.b32.xlu0 %v705, 64
    %v708 = vpop.permute.xlu0 %707
    %v710 = vmul.f32 %v675, %v708
    %712 = vrot.lane.b32.xlu0 %v704, 32
    %v713 = vpop.permute.xlu0 %712
    %s715 = scalar_lea.vmem [#allocation3], 16
    %716 = vst.msk [vmem:[%s715] sm:$0xff] %vm271, %v713
    %718 = vrot.lane.b32.xlu0 %v710, 32
    %v719 = vpop.permute.xlu0 %718
    %s721 = scalar_lea.vmem [#allocation4], 40
    %722 = vst.msk [vmem:[%s721] sm:$0xff] %vm271, %v719
    %723 = vrot.lane.b32.xlu0 %v710, 64
    %v724 = vpop.permute.xlu0 %723
    %v726 = vsel %vm271, %v713, %v724
    %v728 = vsel %vm94, %v726, 0
    %730 = vmatprep.subr.mxu0 0.0
    %731 = vmatpush1.msra.mxu0 0.0
    %732 = vmatprep.subr.mxu0 0.0
    %733 = vmatpush1.msra.mxu0 0.0
    %734 = vmatprep.subr.mxu0 0.0
    %735 = vmatpush1.msra.mxu0 0.0
    %736 = vmatprep.subr.mxu0 0.0
    %737 = vmatpush1.msra.mxu0 0.0
    %738 = vmatprep.subr.mxu0 0.0
    %739 = vmatpush1.msra.mxu0 0.0
    %740 = vmatprep.subr.mxu0 0.0
    %741 = vmatpush1.msra.mxu0 0.0
    %742 = vmatprep.subr.mxu0 0.0
    %743 = vmatpush1.msra.mxu0 0.0
    %744 = vmatprep.subr.mxu0 0.0
    %745 = vmatpush1.msra.mxu0 0.0
    %746 = vmatprep.subr.mxu0 %v263
    %747 = vmatpush1.msra.mxu0 %v262
    %748 = vmatprep.subr.mxu0 %v261
    %749 = vmatpush1.msra.mxu0 %v260
    %750 = vmatprep.subr.mxu0 %v259
    %751 = vmatpush1.msra.mxu0 %v258
    %752 = vmatprep.subr.mxu0 %v257
    %753 = vmatpush1.msra.mxu0 %v256
    %754 = vmatprep.subr.mxu0 %v255
    %755 = vmatpush1.msra.mxu0 %v254
    %756 = vmatprep.subr.mxu0 %v253
    %757 = vmatpush1.msra.mxu0 %v252
    %758 = vmatprep.subr.mxu0 %v251
    %759 = vmatpush1.msra.mxu0 %v250
    %760 = vmatprep.subr.mxu0 %v249
    %761 = vmatpush1.msra.mxu0 %v248
    %762 = vmatprep.subr.mxu0 0.0
    %763 = vmatpush2.msra.mxu0 0.0
    %764 = vmatprep.subr.mxu0 0.0
    %765 = vmatpush2.msra.mxu0 0.0
    %766 = vmatprep.subr.mxu0 0.0
    %767 = vmatpush2.msra.mxu0 0.0
    %768 = vmatprep.subr.mxu0 0.0
    %769 = vmatpush2.msra.mxu0 0.0
    %770 = vmatprep.subr.mxu0 0.0
    %771 = vmatpush2.msra.mxu0 0.0
    %772 = vmatprep.subr.mxu0 0.0
    %773 = vmatpush2.msra.mxu0 0.0
    %774 = vmatprep.subr.mxu0 0.0
    %775 = vmatpush2.msra.mxu0 0.0
    %776 = vmatprep.subr.mxu0 0.0
    %777 = vmatpush2.msra.mxu0 0.0
    %778 = vmatprep.subr.mxu0 0.0
    %779 = vmatpush2.msra.mxu0 0.0
    %780 = vmatprep.subr.mxu0 0.0
    %781 = vmatpush2.msra.mxu0 0.0
    %782 = vmatprep.subr.mxu0 0.0
    %783 = vmatpush2.msra.mxu0 0.0
    %784 = vmatprep.subr.mxu0 0.0
    %785 = vmatpush2.msra.mxu0 0.0
    %786 = vmatprep.subr.mxu0 0.0
    %787 = vmatpush2.msra.mxu0 0.0
    %788 = vmatprep.subr.mxu0 0.0
    %789 = vmatpush2.msra.mxu0 0.0
    %790 = vmatprep.subr.mxu0 0.0
    %791 = vmatpush2.msra.mxu0 0.0
    %792 = vmatprep.subr.mxu0 0.0
    %793 = vmatpush2.msra.mxu0 0.0
    %794 = vmatprep.mubr.f32.mxu0 0.0
    %795 = vmatmul.mubr.f32.gmra.mxu0 %v728
    %v796 = vpop.f32.mrf.mxu0
    %v797 = vadd.f32 0.0, %v796
    %v798 = vpop.f32.mrf.mxu0
    %v799 = vadd.f32 0.0, %v798
    %800 = vdwg.mxu0
    %s801 = smul.u32 3, 2
    %s802 = smul.addr %s801, 8
    %s803 = scalar_lea.vmem [#allocation2], %s802
    %v804 = vld [vmem:[%s803] sm:$0xff]
    %v805 = vadd.f32 %v804, %v797
    %s806 = smul.u32 4, 2
    %s807 = smul.addr %s806, 8
    %s808 = scalar_lea.vmem [#allocation2], %s807
    %v809 = vld [vmem:[%s808 + $0x8] sm:$0xff]
    %v810 = vadd.f32 %v809, %v799
    %v811 = vxor.u32 %v805, 2147483648
    %v812 = vmul.f32 %v811, 1.442695
    %v813 = vpow.pop %v812
    %v814 = vadd.f32 %v813, 1.0
    %v815 = vrcp.pop %v814
    %v816 = vmul.f32 1.0, %v815
    %v817 = vtanh.pop %v805
    %v818 = vxor.u32 %v810, 2147483648
    %v819 = vmul.f32 %v818, 1.442695
    %v820 = vpow.pop %v819
    %v821 = vadd.f32 %v820, 1.0
    %v822 = vrcp.pop %v821
    %v823 = vmul.f32 1.0, %v822
    %v824 = vtanh.pop %v810
    %v825 = vmul.f32 %v816, %v687
    %827 = vrot.lane.b32.xlu0 %v817, 64
    %v828 = vpop.permute.xlu0 %827
    %v830 = vmul.f32 %v816, %v828
    %832 = vrot.lane.b32.xlu0 %v830, 32
    %v833 = vpop.permute.xlu0 %832
    %v835 = vadd.f32 %v825, %v833
    %v836 = vmul.f32 %v823, %v698
    %838 = vrot.lane.b32.xlu0 %v824, 64
    %v839 = vpop.permute.xlu0 %838
    %v841 = vmul.f32 %v823, %v839
    %843 = vrot.lane.b32.xlu0 %v841, 32
    %v844 = vpop.permute.xlu0 %843
    %v846 = vadd.f32 %v836, %v844
    %v847 = vtanh.pop %v835
    %849 = vrot.lane.b32.xlu0 %v847, 64
    %v850 = vpop.permute.xlu0 %849
    %v852 = vmul.f32 %v816, %v850
    %v853 = vtanh.pop %v846
    %855 = vrot.lane.b32.xlu0 %v853, 64
    %v856 = vpop.permute.xlu0 %855
    %v858 = vmul.f32 %v823, %v856
    %860 = vrot.lane.b32.xlu0 %v852, 32
    %v861 = vpop.permute.xlu0 %860
    %s863 = scalar_lea.vmem [#allocation3], 24
    %864 = vst.msk [vmem:[%s863] sm:$0xff] %vm271, %v861
    %866 = vrot.lane.b32.xlu0 %v858, 32
    %v867 = vpop.permute.xlu0 %866
    %s869 = scalar_lea.vmem [#allocation4], 32
    %870 = vst.msk [vmem:[%s869] sm:$0xff] %vm271, %v867
    %871 = vrot.lane.b32.xlu0 %v858, 64
    %v872 = vpop.permute.xlu0 %871
    %v874 = vsel %vm271, %v861, %v872
    %v876 = vsel %vm94, %v874, 0
    %878 = vmatprep.subr.mxu0 0.0
    %879 = vmatpush1.msra.mxu0 0.0
    %880 = vmatprep.subr.mxu0 0.0
    %881 = vmatpush1.msra.mxu0 0.0
    %882 = vmatprep.subr.mxu0 0.0
    %883 = vmatpush1.msra.mxu0 0.0
    %884 = vmatprep.subr.mxu0 0.0
    %885 = vmatpush1.msra.mxu0 0.0
    %886 = vmatprep.subr.mxu0 0.0
    %887 = vmatpush1.msra.mxu0 0.0
    %888 = vmatprep.subr.mxu0 0.0
    %889 = vmatpush1.msra.mxu0 0.0
    %890 = vmatprep.subr.mxu0 0.0
    %891 = vmatpush1.msra.mxu0 0.0
    %892 = vmatprep.subr.mxu0 0.0
    %893 = vmatpush1.msra.mxu0 0.0
    %894 = vmatprep.subr.mxu0 %v263
    %895 = vmatpush1.msra.mxu0 %v262
    %896 = vmatprep.subr.mxu0 %v261
    %897 = vmatpush1.msra.mxu0 %v260
    %898 = vmatprep.subr.mxu0 %v259
    %899 = vmatpush1.msra.mxu0 %v258
    %900 = vmatprep.subr.mxu0 %v257
    %901 = vmatpush1.msra.mxu0 %v256
    %902 = vmatprep.subr.mxu0 %v255
    %903 = vmatpush1.msra.mxu0 %v254
    %904 = vmatprep.subr.mxu0 %v253
    %905 = vmatpush1.msra.mxu0 %v252
    %906 = vmatprep.subr.mxu0 %v251
    %907 = vmatpush1.msra.mxu0 %v250
    %908 = vmatprep.subr.mxu0 %v249
    %909 = vmatpush1.msra.mxu0 %v248
    %910 = vmatprep.subr.mxu0 0.0
    %911 = vmatpush2.msra.mxu0 0.0
    %912 = vmatprep.subr.mxu0 0.0
    %913 = vmatpush2.msra.mxu0 0.0
    %914 = vmatprep.subr.mxu0 0.0
    %915 = vmatpush2.msra.mxu0 0.0
    %916 = vmatprep.subr.mxu0 0.0
    %917 = vmatpush2.msra.mxu0 0.0
    %918 = vmatprep.subr.mxu0 0.0
    %919 = vmatpush2.msra.mxu0 0.0
    %920 = vmatprep.subr.mxu0 0.0
    %921 = vmatpush2.msra.mxu0 0.0
    %922 = vmatprep.subr.mxu0 0.0
    %923 = vmatpush2.msra.mxu0 0.0
    %924 = vmatprep.subr.mxu0 0.0
    %925 = vmatpush2.msra.mxu0 0.0
    %926 = vmatprep.subr.mxu0 0.0
    %927 = vmatpush2.msra.mxu0 0.0
    %928 = vmatprep.subr.mxu0 0.0
    %929 = vmatpush2.msra.mxu0 0.0
    %930 = vmatprep.subr.mxu0 0.0
    %931 = vmatpush2.msra.mxu0 0.0
    %932 = vmatprep.subr.mxu0 0.0
    %933 = vmatpush2.msra.mxu0 0.0
    %934 = vmatprep.subr.mxu0 0.0
    %935 = vmatpush2.msra.mxu0 0.0
    %936 = vmatprep.subr.mxu0 0.0
    %937 = vmatpush2.msra.mxu0 0.0
    %938 = vmatprep.subr.mxu0 0.0
    %939 = vmatpush2.msra.mxu0 0.0
    %940 = vmatprep.subr.mxu0 0.0
    %941 = vmatpush2.msra.mxu0 0.0
    %942 = vmatprep.mubr.f32.mxu0 0.0
    %943 = vmatmul.mubr.f32.gmra.mxu0 %v876
    %v944 = vpop.f32.mrf.mxu0
    %v945 = vadd.f32 0.0, %v944
    %v946 = vpop.f32.mrf.mxu0
    %v947 = vadd.f32 0.0, %v946
    %948 = vdwg.mxu0
    %v949 = vld [vmem:[%s808] sm:$0xff]
    %v950 = vadd.f32 %v949, %v945
    %v951 = vld [vmem:[%s803 + $0x8] sm:$0xff]
    %v952 = vadd.f32 %v951, %v947
    %v953 = vxor.u32 %v950, 2147483648
    %v954 = vmul.f32 %v953, 1.442695
    %v955 = vpow.pop %v954
    %v956 = vadd.f32 %v955, 1.0
    %v957 = vrcp.pop %v956
    %v958 = vmul.f32 1.0, %v957
    %v959 = vtanh.pop %v950
    %v960 = vxor.u32 %v952, 2147483648
    %v961 = vmul.f32 %v960, 1.442695
    %v962 = vpow.pop %v961
    %v963 = vadd.f32 %v962, 1.0
    %v964 = vrcp.pop %v963
    %v965 = vmul.f32 1.0, %v964
    %v966 = vtanh.pop %v952
    %v967 = vmul.f32 %v958, %v835
    %969 = vrot.lane.b32.xlu0 %v959, 64
    %v970 = vpop.permute.xlu0 %969
    %v972 = vmul.f32 %v958, %v970
    %974 = vrot.lane.b32.xlu0 %v972, 32
    %v975 = vpop.permute.xlu0 %974
    %v977 = vadd.f32 %v967, %v975
    %v978 = vmul.f32 %v965, %v846
    %980 = vrot.lane.b32.xlu0 %v966, 64
    %v981 = vpop.permute.xlu0 %980
    %v983 = vmul.f32 %v965, %v981
    %985 = vrot.lane.b32.xlu0 %v983, 32
    %v986 = vpop.permute.xlu0 %985
    %v988 = vadd.f32 %v978, %v986
    %v989 = vtanh.pop %v977
    %991 = vrot.lane.b32.xlu0 %v989, 64
    %v992 = vpop.permute.xlu0 %991
    %v994 = vmul.f32 %v958, %v992
    %v995 = vtanh.pop %v988
    %997 = vrot.lane.b32.xlu0 %v995, 64
    %v998 = vpop.permute.xlu0 %997
    %v1000 = vmul.f32 %v965, %v998
    %1002 = vrot.lane.b32.xlu0 %v994, 32
    %v1003 = vpop.permute.xlu0 %1002
    %s1005 = scalar_lea.vmem [#allocation3], 32
    %1006 = vst.msk [vmem:[%s1005] sm:$0xff] %vm271, %v1003
    %1008 = vrot.lane.b32.xlu0 %v1000, 32
    %v1009 = vpop.permute.xlu0 %1008
    %s1011 = scalar_lea.vmem [#allocation4], 24
    %1012 = vst.msk [vmem:[%s1011] sm:$0xff] %vm271, %v1009
    %1013 = vrot.lane.b32.xlu0 %v1000, 64
    %v1014 = vpop.permute.xlu0 %1013
    %v1016 = vsel %vm271, %v1003, %v1014
    %v1018 = vsel %vm94, %v1016, 0
    %1020 = vmatprep.subr.mxu0 0.0
    %1021 = vmatpush1.msra.mxu0 0.0
    %1022 = vmatprep.subr.mxu0 0.0
    %1023 = vmatpush1.msra.mxu0 0.0
    %1024 = vmatprep.subr.mxu0 0.0
    %1025 = vmatpush1.msra.mxu0 0.0
    %1026 = vmatprep.subr.mxu0 0.0
    %1027 = vmatpush1.msra.mxu0 0.0
    %1028 = vmatprep.subr.mxu0 0.0
    %1029 = vmatpush1.msra.mxu0 0.0
    %1030 = vmatprep.subr.mxu0 0.0
    %1031 = vmatpush1.msra.mxu0 0.0
    %1032 = vmatprep.subr.mxu0 0.0
    %1033 = vmatpush1.msra.mxu0 0.0
    %1034 = vmatprep.subr.mxu0 0.0
    %1035 = vmatpush1.msra.mxu0 0.0
    %1036 = vmatprep.subr.mxu0 %v263
    %1037 = vmatpush1.msra.mxu0 %v262
    %1038 = vmatprep.subr.mxu0 %v261
    %1039 = vmatpush1.msra.mxu0 %v260
    %1040 = vmatprep.subr.mxu0 %v259
    %1041 = vmatpush1.msra.mxu0 %v258
    %1042 = vmatprep.subr.mxu0 %v257
    %1043 = vmatpush1.msra.mxu0 %v256
    %1044 = vmatprep.subr.mxu0 %v255
    %1045 = vmatpush1.msra.mxu0 %v254
    %1046 = vmatprep.subr.mxu0 %v253
    %1047 = vmatpush1.msra.mxu0 %v252
    %1048 = vmatprep.subr.mxu0 %v251
    %1049 = vmatpush1.msra.mxu0 %v250
    %1050 = vmatprep.subr.mxu0 %v249
    %1051 = vmatpush1.msra.mxu0 %v248
    %1052 = vmatprep.subr.mxu0 0.0
    %1053 = vmatpush2.msra.mxu0 0.0
    %1054 = vmatprep.subr.mxu0 0.0
    %1055 = vmatpush2.msra.mxu0 0.0
    %1056 = vmatprep.subr.mxu0 0.0
    %1057 = vmatpush2.msra.mxu0 0.0
    %1058 = vmatprep.subr.mxu0 0.0
    %1059 = vmatpush2.msra.mxu0 0.0
    %1060 = vmatprep.subr.mxu0 0.0
    %1061 = vmatpush2.msra.mxu0 0.0
    %1062 = vmatprep.subr.mxu0 0.0
    %1063 = vmatpush2.msra.mxu0 0.0
    %1064 = vmatprep.subr.mxu0 0.0
    %1065 = vmatpush2.msra.mxu0 0.0
    %1066 = vmatprep.subr.mxu0 0.0
    %1067 = vmatpush2.msra.mxu0 0.0
    %1068 = vmatprep.subr.mxu0 0.0
    %1069 = vmatpush2.msra.mxu0 0.0
    %1070 = vmatprep.subr.mxu0 0.0
    %1071 = vmatpush2.msra.mxu0 0.0
    %1072 = vmatprep.subr.mxu0 0.0
    %1073 = vmatpush2.msra.mxu0 0.0
    %1074 = vmatprep.subr.mxu0 0.0
    %1075 = vmatpush2.msra.mxu0 0.0
    %1076 = vmatprep.subr.mxu0 0.0
    %1077 = vmatpush2.msra.mxu0 0.0
    %1078 = vmatprep.subr.mxu0 0.0
    %1079 = vmatpush2.msra.mxu0 0.0
    %1080 = vmatprep.subr.mxu0 0.0
    %1081 = vmatpush2.msra.mxu0 0.0
    %1082 = vmatprep.subr.mxu0 0.0
    %1083 = vmatpush2.msra.mxu0 0.0
    %1084 = vmatprep.mubr.f32.mxu0 0.0
    %1085 = vmatmul.mubr.f32.gmra.mxu0 %v1018
    %v1086 = vpop.f32.mrf.mxu0
    %v1087 = vadd.f32 0.0, %v1086
    %v1088 = vpop.f32.mrf.mxu0
    %v1089 = vadd.f32 0.0, %v1088
    %1090 = vdwg.mxu0
    %v1091 = vld [vmem:[%s660] sm:$0xff]
    %v1092 = vadd.f32 %v1091, %v1087
    %v1093 = vld [vmem:[%s655 + $0x8] sm:$0xff]
    %v1094 = vadd.f32 %v1093, %v1089
    %v1095 = vxor.u32 %v1092, 2147483648
    %v1096 = vmul.f32 %v1095, 1.442695
    %v1097 = vpow.pop %v1096
    %v1098 = vadd.f32 %v1097, 1.0
    %v1099 = vrcp.pop %v1098
    %v1100 = vmul.f32 1.0, %v1099
    %v1101 = vtanh.pop %v1092
    %v1102 = vxor.u32 %v1094, 2147483648
    %v1103 = vmul.f32 %v1102, 1.442695
    %v1104 = vpow.pop %v1103
    %v1105 = vadd.f32 %v1104, 1.0
    %v1106 = vrcp.pop %v1105
    %v1107 = vmul.f32 1.0, %v1106
    %v1108 = vtanh.pop %v1094
    %v1109 = vmul.f32 %v1100, %v977
    %1111 = vrot.lane.b32.xlu0 %v1101, 64
    %v1112 = vpop.permute.xlu0 %1111
    %v1114 = vmul.f32 %v1100, %v1112
    %1116 = vrot.lane.b32.xlu0 %v1114, 32
    %v1117 = vpop.permute.xlu0 %1116
    %v1119 = vadd.f32 %v1109, %v1117
    %v1120 = vmul.f32 %v1107, %v988
    %1122 = vrot.lane.b32.xlu0 %v1108, 64
    %v1123 = vpop.permute.xlu0 %1122
    %v1125 = vmul.f32 %v1107, %v1123
    %1127 = vrot.lane.b32.xlu0 %v1125, 32
    %v1128 = vpop.permute.xlu0 %1127
    %v1130 = vadd.f32 %v1120, %v1128
    %v1131 = vtanh.pop %v1119
    %1133 = vrot.lane.b32.xlu0 %v1131, 64
    %v1134 = vpop.permute.xlu0 %1133
    %v1136 = vmul.f32 %v1100, %v1134
    %v1137 = vtanh.pop %v1130
    %1139 = vrot.lane.b32.xlu0 %v1137, 64
    %v1140 = vpop.permute.xlu0 %1139
    %v1142 = vmul.f32 %v1107, %v1140
    %1144 = vrot.lane.b32.xlu0 %v1136, 32
    %v1145 = vpop.permute.xlu0 %1144
    %s1147 = scalar_lea.vmem [#allocation3], 40
    %1148 = vst.msk [vmem:[%s1147] sm:$0xff] %vm271, %v1145
    %1150 = vrot.lane.b32.xlu0 %v1142, 32
    %v1151 = vpop.permute.xlu0 %1150
    %s1153 = scalar_lea.vmem [#allocation4], 16
    %1154 = vst.msk [vmem:[%s1153] sm:$0xff] %vm271, %v1151
    %1155 = vrot.lane.b32.xlu0 %v1142, 64
    %v1156 = vpop.permute.xlu0 %1155
    %v1158 = vsel %vm271, %v1145, %v1156
    %v1160 = vsel %vm94, %v1158, 0
    %1162 = vmatprep.subr.mxu0 0.0
    %1163 = vmatpush1.msra.mxu0 0.0
    %1164 = vmatprep.subr.mxu0 0.0
    %1165 = vmatpush1.msra.mxu0 0.0
    %1166 = vmatprep.subr.mxu0 0.0
    %1167 = vmatpush1.msra.mxu0 0.0
    %1168 = vmatprep.subr.mxu0 0.0
    %1169 = vmatpush1.msra.mxu0 0.0
    %1170 = vmatprep.subr.mxu0 0.0
    %1171 = vmatpush1.msra.mxu0 0.0
    %1172 = vmatprep.subr.mxu0 0.0
    %1173 = vmatpush1.msra.mxu0 0.0
    %1174 = vmatprep.subr.mxu0 0.0
    %1175 = vmatpush1.msra.mxu0 0.0
    %1176 = vmatprep.subr.mxu0 0.0
    %1177 = vmatpush1.msra.mxu0 0.0
    %1178 = vmatprep.subr.mxu0 %v263
    %1179 = vmatpush1.msra.mxu0 %v262
    %1180 = vmatprep.subr.mxu0 %v261
    %1181 = vmatpush1.msra.mxu0 %v260
    %1182 = vmatprep.subr.mxu0 %v259
    %1183 = vmatpush1.msra.mxu0 %v258
    %1184 = vmatprep.subr.mxu0 %v257
    %1185 = vmatpush1.msra.mxu0 %v256
    %1186 = vmatprep.subr.mxu0 %v255
    %1187 = vmatpush1.msra.mxu0 %v254
    %1188 = vmatprep.subr.mxu0 %v253
    %1189 = vmatpush1.msra.mxu0 %v252
    %1190 = vmatprep.subr.mxu0 %v251
    %1191 = vmatpush1.msra.mxu0 %v250
    %1192 = vmatprep.subr.mxu0 %v249
    %1193 = vmatpush1.msra.mxu0 %v248
    %1194 = vmatprep.subr.mxu0 0.0
    %1195 = vmatpush2.msra.mxu0 0.0
    %1196 = vmatprep.subr.mxu0 0.0
    %1197 = vmatpush2.msra.mxu0 0.0
    %1198 = vmatprep.subr.mxu0 0.0
    %1199 = vmatpush2.msra.mxu0 0.0
    %1200 = vmatprep.subr.mxu0 0.0
    %1201 = vmatpush2.msra.mxu0 0.0
    %1202 = vmatprep.subr.mxu0 0.0
    %1203 = vmatpush2.msra.mxu0 0.0
    %1204 = vmatprep.subr.mxu0 0.0
    %1205 = vmatpush2.msra.mxu0 0.0
    %1206 = vmatprep.subr.mxu0 0.0
    %1207 = vmatpush2.msra.mxu0 0.0
    %1208 = vmatprep.subr.mxu0 0.0
    %1209 = vmatpush2.msra.mxu0 0.0
    %1210 = vmatprep.subr.mxu0 0.0
    %1211 = vmatpush2.msra.mxu0 0.0
    %1212 = vmatprep.subr.mxu0 0.0
    %1213 = vmatpush2.msra.mxu0 0.0
    %1214 = vmatprep.subr.mxu0 0.0
    %1215 = vmatpush2.msra.mxu0 0.0
    %1216 = vmatprep.subr.mxu0 0.0
    %1217 = vmatpush2.msra.mxu0 0.0
    %1218 = vmatprep.subr.mxu0 0.0
    %1219 = vmatpush2.msra.mxu0 0.0
    %1220 = vmatprep.subr.mxu0 0.0
    %1221 = vmatpush2.msra.mxu0 0.0
    %1222 = vmatprep.subr.mxu0 0.0
    %1223 = vmatpush2.msra.mxu0 0.0
    %1224 = vmatprep.subr.mxu0 0.0
    %1225 = vmatpush2.msra.mxu0 0.0
    %1226 = vmatprep.mubr.f32.mxu0 0.0
    %1227 = vmatmul.mubr.f32.gmra.mxu0 %v1160
    %v1228 = vpop.f32.mrf.mxu0
    %v1229 = vadd.f32 0.0, %v1228
    %v1230 = vpop.f32.mrf.mxu0
    %v1231 = vadd.f32 0.0, %v1230
    %1232 = vdwg.mxu0
    %v1233 = vld [vmem:[%s512] sm:$0xff]
    %v1234 = vadd.f32 %v1233, %v1229
    %v1235 = vld [vmem:[%s507 + $0x8] sm:$0xff]
    %v1236 = vadd.f32 %v1235, %v1231
    %v1237 = vxor.u32 %v1234, 2147483648
    %v1238 = vmul.f32 %v1237, 1.442695
    %v1239 = vpow.pop %v1238
    %v1240 = vadd.f32 %v1239, 1.0
    %v1241 = vrcp.pop %v1240
    %v1242 = vmul.f32 1.0, %v1241
    %v1243 = vtanh.pop %v1234
    %v1244 = vxor.u32 %v1236, 2147483648
    %v1245 = vmul.f32 %v1244, 1.442695
    %v1246 = vpow.pop %v1245
    %v1247 = vadd.f32 %v1246, 1.0
    %v1248 = vrcp.pop %v1247
    %v1249 = vmul.f32 1.0, %v1248
    %v1250 = vtanh.pop %v1236
    %v1251 = vmul.f32 %v1242, %v1119
    %1253 = vrot.lane.b32.xlu0 %v1243, 64
    %v1254 = vpop.permute.xlu0 %1253
    %v1256 = vmul.f32 %v1242, %v1254
    %1258 = vrot.lane.b32.xlu0 %v1256, 32
    %v1259 = vpop.permute.xlu0 %1258
    %v1261 = vadd.f32 %v1251, %v1259
    %v1262 = vmul.f32 %v1249, %v1130
    %1264 = vrot.lane.b32.xlu0 %v1250, 64
    %v1265 = vpop.permute.xlu0 %1264
    %v1267 = vmul.f32 %v1249, %v1265
    %1269 = vrot.lane.b32.xlu0 %v1267, 32
    %v1270 = vpop.permute.xlu0 %1269
    %v1272 = vadd.f32 %v1262, %v1270
    %v1273 = vtanh.pop %v1261
    %1275 = vrot.lane.b32.xlu0 %v1273, 64
    %v1276 = vpop.permute.xlu0 %1275
    %v1278 = vmul.f32 %v1242, %v1276
    %v1279 = vtanh.pop %v1272
    %1281 = vrot.lane.b32.xlu0 %v1279, 64
    %v1282 = vpop.permute.xlu0 %1281
    %v1284 = vmul.f32 %v1249, %v1282
    %1286 = vrot.lane.b32.xlu0 %v1278, 32
    %v1287 = vpop.permute.xlu0 %1286
    %s1289 = scalar_lea.vmem [#allocation3], 48
    %1290 = vst.msk [vmem:[%s1289] sm:$0xff] %vm271, %v1287
    %1292 = vrot.lane.b32.xlu0 %v1284, 32
    %v1293 = vpop.permute.xlu0 %1292
    %s1295 = scalar_lea.vmem [#allocation4], 8
    %1296 = vst.msk [vmem:[%s1295] sm:$0xff] %vm271, %v1293
    %1297 = vrot.lane.b32.xlu0 %v1284, 64
    %v1298 = vpop.permute.xlu0 %1297
    %v1300 = vsel %vm271, %v1287, %v1298
    %v1302 = vsel %vm94, %v1300, 0
    %1304 = vmatprep.subr.mxu0 0.0
    %1305 = vmatpush1.msra.mxu0 0.0
    %1306 = vmatprep.subr.mxu0 0.0
    %1307 = vmatpush1.msra.mxu0 0.0
    %1308 = vmatprep.subr.mxu0 0.0
    %1309 = vmatpush1.msra.mxu0 0.0
    %1310 = vmatprep.subr.mxu0 0.0
    %1311 = vmatpush1.msra.mxu0 0.0
    %1312 = vmatprep.subr.mxu0 0.0
    %1313 = vmatpush1.msra.mxu0 0.0
    %1314 = vmatprep.subr.mxu0 0.0
    %1315 = vmatpush1.msra.mxu0 0.0
    %1316 = vmatprep.subr.mxu0 0.0
    %1317 = vmatpush1.msra.mxu0 0.0
    %1318 = vmatprep.subr.mxu0 0.0
    %1319 = vmatpush1.msra.mxu0 0.0
    %1320 = vmatprep.subr.mxu0 %v263
    %1321 = vmatpush1.msra.mxu0 %v262
    %1322 = vmatprep.subr.mxu0 %v261
    %1323 = vmatpush1.msra.mxu0 %v260
    %1324 = vmatprep.subr.mxu0 %v259
    %1325 = vmatpush1.msra.mxu0 %v258
    %1326 = vmatprep.subr.mxu0 %v257
    %1327 = vmatpush1.msra.mxu0 %v256
    %1328 = vmatprep.subr.mxu0 %v255
    %1329 = vmatpush1.msra.mxu0 %v254
    %1330 = vmatprep.subr.mxu0 %v253
    %1331 = vmatpush1.msra.mxu0 %v252
    %1332 = vmatprep.subr.mxu0 %v251
    %1333 = vmatpush1.msra.mxu0 %v250
    %1334 = vmatprep.subr.mxu0 %v249
    %1335 = vmatpush1.msra.mxu0 %v248
    %1336 = vmatprep.subr.mxu0 0.0
    %1337 = vmatpush2.msra.mxu0 0.0
    %1338 = vmatprep.subr.mxu0 0.0
    %1339 = vmatpush2.msra.mxu0 0.0
    %1340 = vmatprep.subr.mxu0 0.0
    %1341 = vmatpush2.msra.mxu0 0.0
    %1342 = vmatprep.subr.mxu0 0.0
    %1343 = vmatpush2.msra.mxu0 0.0
    %1344 = vmatprep.subr.mxu0 0.0
    %1345 = vmatpush2.msra.mxu0 0.0
    %1346 = vmatprep.subr.mxu0 0.0
    %1347 = vmatpush2.msra.mxu0 0.0
    %1348 = vmatprep.subr.mxu0 0.0
    %1349 = vmatpush2.msra.mxu0 0.0
    %1350 = vmatprep.subr.mxu0 0.0
    %1351 = vmatpush2.msra.mxu0 0.0
    %1352 = vmatprep.subr.mxu0 0.0
    %1353 = vmatpush2.msra.mxu0 0.0
    %1354 = vmatprep.subr.mxu0 0.0
    %1355 = vmatpush2.msra.mxu0 0.0
    %1356 = vmatprep.subr.mxu0 0.0
    %1357 = vmatpush2.msra.mxu0 0.0
    %1358 = vmatprep.subr.mxu0 0.0
    %1359 = vmatpush2.msra.mxu0 0.0
    %1360 = vmatprep.subr.mxu0 0.0
    %1361 = vmatpush2.msra.mxu0 0.0
    %1362 = vmatprep.subr.mxu0 0.0
    %1363 = vmatpush2.msra.mxu0 0.0
    %1364 = vmatprep.subr.mxu0 0.0
    %1365 = vmatpush2.msra.mxu0 0.0
    %1366 = vmatprep.subr.mxu0 0.0
    %1367 = vmatpush2.msra.mxu0 0.0
    %1368 = vmatprep.mubr.f32.mxu0 0.0
    %1369 = vmatmul.mubr.f32.gmra.mxu0 %v1302
    %v1370 = vpop.f32.mrf.mxu0
    %v1371 = vadd.f32 0.0, %v1370
    %v1372 = vpop.f32.mrf.mxu0
    %v1373 = vadd.f32 0.0, %v1372
    %1374 = vdwg.mxu0
    %v1375 = vld [vmem:[%s357] sm:$0xff]
    %v1376 = vadd.f32 %v1375, %v1371
    %v1377 = vld [vmem:[%s352 + $0x8] sm:$0xff]
    %v1378 = vadd.f32 %v1377, %v1373
    %v1379 = vxor.u32 %v1376, 2147483648
    %v1380 = vmul.f32 %v1379, 1.442695
    %v1381 = vpow.pop %v1380
    %v1382 = vadd.f32 %v1381, 1.0
    %v1383 = vrcp.pop %v1382
    %v1384 = vmul.f32 1.0, %v1383
    %v1385 = vtanh.pop %v1376
    %v1386 = vxor.u32 %v1378, 2147483648
    %v1387 = vmul.f32 %v1386, 1.442695
    %v1388 = vpow.pop %v1387
    %v1389 = vadd.f32 %v1388, 1.0
    %v1390 = vrcp.pop %v1389
    %v1391 = vmul.f32 1.0, %v1390
    %v1392 = vtanh.pop %v1378
    %v1393 = vmul.f32 %v1384, %v1261
    %1395 = vrot.lane.b32.xlu0 %v1385, 64
    %v1396 = vpop.permute.xlu0 %1395
    %v1398 = vmul.f32 %v1384, %v1396
    %1400 = vrot.lane.b32.xlu0 %v1398, 32
    %v1401 = vpop.permute.xlu0 %1400
    %v1403 = vadd.f32 %v1393, %v1401
    %v1404 = vmul.f32 %v1391, %v1272
    %1406 = vrot.lane.b32.xlu0 %v1392, 64
    %v1407 = vpop.permute.xlu0 %1406
    %v1409 = vmul.f32 %v1391, %v1407
    %1411 = vrot.lane.b32.xlu0 %v1409, 32
    %v1412 = vpop.permute.xlu0 %1411
    %v1414 = vadd.f32 %v1404, %v1412
    %v1415 = vtanh.pop %v1403
    %1417 = vrot.lane.b32.xlu0 %v1415, 64
    %v1418 = vpop.permute.xlu0 %1417
    %v1420 = vmul.f32 %v1384, %v1418
    %v1421 = vtanh.pop %v1414
    %1423 = vrot.lane.b32.xlu0 %v1421, 64
    %v1424 = vpop.permute.xlu0 %1423
    %v1426 = vmul.f32 %v1391, %v1424
    %1428 = vrot.lane.b32.xlu0 %v1420, 32
    %v1429 = vpop.permute.xlu0 %1428
    %s1431 = scalar_lea.vmem [#allocation3], 56
    %1432 = vst.msk [vmem:[%s1431] sm:$0xff] %vm271, %v1429
    %1434 = vrot.lane.b32.xlu0 %v1426, 32
    %v1435 = vpop.permute.xlu0 %1434
    %1437 = vst.msk [vmem:[#allocation4] sm:$0xff] %vm271, %v1435
    %1438 = vrot.lane.b32.xlu0 %v1426, 64
    %v1439 = vpop.permute.xlu0 %1438
    %v1441 = vsel %vm271, %v1429, %v1439
    %1442 = vst.msk [vmem:[%s13] sm:$0xff] %vm271, %v1441
    %1444 = vrot.lane.b32.xlu0 %v1441, 96
    %v1445 = vpop.permute.xlu0 %1444
    %s1447 = scalar_lea.vmem %s13, 8
    %1448 = vst.msk [vmem:[%s1447] sm:$0xff] %vm271, %v1445
    %1450 = vrot.lane.b32.xlu0 %v1403, 96
    %v1451 = vpop.permute.xlu0 %1450
    %1453 = vst.msk [vmem:[%s14] sm:$0xff] %vm271, %v1451
    %1455 = vrot.lane.b32.xlu0 %v1414, 96
    %v1456 = vpop.permute.xlu0 %1455
    %s1458 = scalar_lea.vmem %s14, 8
    %1459 = vst.msk [vmem:[%s1458] sm:$0xff] %vm271, %v1456
    %v1460 = vld [vmem:[#allocation3] sm:$0xff]
    %v1461 = vld [vmem:[#allocation3 + $0x8] sm:$0xff]
    %v1462 = vld [vmem:[#allocation3 + $0x10] sm:$0xff]
    %v1463 = vld [vmem:[#allocation3 + $0x18] sm:$0xff]
    %v1464 = vld [vmem:[#allocation3 + $0x20] sm:$0xff]
    %v1465 = vld [vmem:[#allocation3 + $0x28] sm:$0xff]
    %v1466 = vld [vmem:[#allocation3 + $0x30] sm:$0xff]
    %v1467 = vld [vmem:[#allocation3 + $0x38] sm:$0xff]
    %v1468 = vld [vmem:[#allocation4] sm:$0xff]
    %v1469 = vld [vmem:[#allocation4 + $0x8] sm:$0xff]
    %v1470 = vld [vmem:[#allocation4 + $0x10] sm:$0xff]
    %v1471 = vld [vmem:[#allocation4 + $0x18] sm:$0xff]
    %v1472 = vld [vmem:[#allocation4 + $0x20] sm:$0xff]
    %v1473 = vld [vmem:[#allocation4 + $0x28] sm:$0xff]
    %v1474 = vld [vmem:[#allocation4 + $0x30] sm:$0xff]
    %v1475 = vld [vmem:[#allocation4 + $0x38] sm:$0xff]
    %1484 = vrot.lane.b32.xlu0 %v1468, 32
    %v1485 = vpop.permute.xlu0 %1484
    %1486 = vrot.lane.b32.xlu0 %v1469, 32
    %v1487 = vpop.permute.xlu0 %1486
    %1488 = vrot.lane.b32.xlu0 %v1470, 32
    %v1489 = vpop.permute.xlu0 %1488
    %1490 = vrot.lane.b32.xlu0 %v1471, 32
    %v1491 = vpop.permute.xlu0 %1490
    %1492 = vrot.lane.b32.xlu0 %v1472, 32
    %v1493 = vpop.permute.xlu0 %1492
    %1494 = vrot.lane.b32.xlu0 %v1473, 32
    %v1495 = vpop.permute.xlu0 %1494
    %1496 = vrot.lane.b32.xlu0 %v1474, 32
    %v1497 = vpop.permute.xlu0 %1496
    %1498 = vrot.lane.b32.xlu0 %v1475, 32
    %v1499 = vpop.permute.xlu0 %1498
    %v1508 = vsel %vm271, %v1460, %v1485
    %v1509 = vsel %vm271, %v1461, %v1487
    %v1510 = vsel %vm271, %v1462, %v1489
    %v1511 = vsel %vm271, %v1463, %v1491
    %v1512 = vsel %vm271, %v1464, %v1493
    %v1513 = vsel %vm271, %v1465, %v1495
    %v1514 = vsel %vm271, %v1466, %v1497
    %v1515 = vsel %vm271, %v1467, %v1499
    %s1516 = scalar_lea.vmem %s1, 128
    %v1517 = vld [vmem:[%s1516] sm:$0xff]
    %v1518 = vld [vmem:[%s1516 + $0x8] sm:$0xff]
    %v1519 = vld [vmem:[%s1516 + $0x10] sm:$0xff]
    %v1520 = vld [vmem:[%s1516 + $0x18] sm:$0xff]
    %v1521 = vld [vmem:[%s1516 + $0x20] sm:$0xff]
    %v1522 = vld [vmem:[%s1516 + $0x28] sm:$0xff]
    %v1523 = vld [vmem:[%s1516 + $0x30] sm:$0xff]
    %v1524 = vld [vmem:[%s1516 + $0x38] sm:$0xff]
    %v1525 = vld [vmem:[%s1516 + $0x40] sm:$0xff]
    %v1526 = vld [vmem:[%s1516 + $0x48] sm:$0xff]
    %v1527 = vld [vmem:[%s1516 + $0x50] sm:$0xff]
    %v1528 = vld [vmem:[%s1516 + $0x58] sm:$0xff]
    %v1529 = vld [vmem:[%s1516 + $0x60] sm:$0xff]
    %v1530 = vld [vmem:[%s1516 + $0x68] sm:$0xff]
    %v1531 = vld [vmem:[%s1516 + $0x70] sm:$0xff]
    %v1532 = vld [vmem:[%s1516 + $0x78] sm:$0xff]
    %s1533 = scalar_lea.vmem %s3, 2
    %v1534 = vld [vmem:[%s1533] sm:$0x3]
    %v1536 = vlaneseq
    %v1537 = vshrl.u32 %v1536, 7
    %v1538 = vsub.s32 0, %v1537
    %v1539 = vrot.slane %v1534, %v1538
    %v1540 = vlaneseq
    %v1541 = vshrl.u32 %v1540, 7
    %v1542 = vsub.s32 1, %v1541
    %v1543 = vrot.slane %v1534, %v1542
    %v1547 = vsel %vm94, %v1508, 0
    %v1550 = vsel %vm94, %v1509, 0
    %v1553 = vsel %vm94, %v1510, 0
    %v1556 = vsel %vm94, %v1511, 0
    %v1559 = vsel %vm94, %v1512, 0
    %v1562 = vsel %vm94, %v1513, 0
    %v1565 = vsel %vm94, %v1514, 0
    %v1568 = vsel %vm94, %v1515, 0
    %1570 = vmatprep.subr.mxu0 0.0
    %1571 = vmatpush1.msra.mxu0 0.0
    %1572 = vmatprep.subr.mxu0 0.0
    %1573 = vmatpush1.msra.mxu0 0.0
    %1574 = vmatprep.subr.mxu0 0.0
    %1575 = vmatpush1.msra.mxu0 0.0
    %1576 = vmatprep.subr.mxu0 0.0
    %1577 = vmatpush1.msra.mxu0 0.0
    %1578 = vmatprep.subr.mxu0 0.0
    %1579 = vmatpush1.msra.mxu0 0.0
    %1580 = vmatprep.subr.mxu0 0.0
    %1581 = vmatpush1.msra.mxu0 0.0
    %1582 = vmatprep.subr.mxu0 0.0
    %1583 = vmatpush1.msra.mxu0 0.0
    %1584 = vmatprep.subr.mxu0 0.0
    %1585 = vmatpush1.msra.mxu0 0.0
    %1586 = vmatprep.subr.mxu0 %v1532
    %1587 = vmatpush1.msra.mxu0 %v1531
    %1588 = vmatprep.subr.mxu0 %v1530
    %1589 = vmatpush1.msra.mxu0 %v1529
    %1590 = vmatprep.subr.mxu0 %v1528
    %1591 = vmatpush1.msra.mxu0 %v1527
    %1592 = vmatprep.subr.mxu0 %v1526
    %1593 = vmatpush1.msra.mxu0 %v1525
    %1594 = vmatprep.subr.mxu0 %v1524
    %1595 = vmatpush1.msra.mxu0 %v1523
    %1596 = vmatprep.subr.mxu0 %v1522
    %1597 = vmatpush1.msra.mxu0 %v1521
    %1598 = vmatprep.subr.mxu0 %v1520
    %1599 = vmatpush1.msra.mxu0 %v1519
    %1600 = vmatprep.subr.mxu0 %v1518
    %1601 = vmatpush1.msra.mxu0 %v1517
    %1602 = vmatprep.subr.mxu0 0.0
    %1603 = vmatpush2.msra.mxu0 0.0
    %1604 = vmatprep.subr.mxu0 0.0
    %1605 = vmatpush2.msra.mxu0 0.0
    %1606 = vmatprep.subr.mxu0 0.0
    %1607 = vmatpush2.msra.mxu0 0.0
    %1608 = vmatprep.subr.mxu0 0.0
    %1609 = vmatpush2.msra.mxu0 0.0
    %1610 = vmatprep.subr.mxu0 0.0
    %1611 = vmatpush2.msra.mxu0 0.0
    %1612 = vmatprep.subr.mxu0 0.0
    %1613 = vmatpush2.msra.mxu0 0.0
    %1614 = vmatprep.subr.mxu0 0.0
    %1615 = vmatpush2.msra.mxu0 0.0
    %1616 = vmatprep.subr.mxu0 0.0
    %1617 = vmatpush2.msra.mxu0 0.0
    %1618 = vmatprep.subr.mxu0 0.0
    %1619 = vmatpush2.msra.mxu0 0.0
    %1620 = vmatprep.subr.mxu0 0.0
    %1621 = vmatpush2.msra.mxu0 0.0
    %1622 = vmatprep.subr.mxu0 0.0
    %1623 = vmatpush2.msra.mxu0 0.0
    %1624 = vmatprep.subr.mxu0 0.0
    %1625 = vmatpush2.msra.mxu0 0.0
    %1626 = vmatprep.subr.mxu0 0.0
    %1627 = vmatpush2.msra.mxu0 0.0
    %1628 = vmatprep.subr.mxu0 0.0
    %1629 = vmatpush2.msra.mxu0 0.0
    %1630 = vmatprep.subr.mxu0 0.0
    %1631 = vmatpush2.msra.mxu0 0.0
    %1632 = vmatprep.subr.mxu0 0.0
    %1633 = vmatpush2.msra.mxu0 0.0
    %1634 = vmatprep.mubr.f32.mxu0 0.0
    %1635 = vmatmul.mubr.f32.gmra.mxu0 %v1547
    %v1636 = vpop.f32.mrf.mxu0
    %v1637 = vadd.f32 %v1539, %v1636
    %v1638 = vpop.f32.mrf.mxu0
    %v1639 = vadd.f32 %v1543, %v1638
    %1640 = vmatprep.mubr.f32.mxu0 0.0
    %1641 = vmatmul.mubr.f32.gmra.mxu0 %v1550
    %v1642 = vpop.f32.mrf.mxu0
    %v1643 = vadd.f32 %v1539, %v1642
    %v1644 = vpop.f32.mrf.mxu0
    %v1645 = vadd.f32 %v1543, %v1644
    %1646 = vmatprep.mubr.f32.mxu0 0.0
    %1647 = vmatmul.mubr.f32.gmra.mxu0 %v1553
    %v1648 = vpop.f32.mrf.mxu0
    %v1649 = vadd.f32 %v1539, %v1648
    %v1650 = vpop.f32.mrf.mxu0
    %v1651 = vadd.f32 %v1543, %v1650
    %1652 = vmatprep.mubr.f32.mxu0 0.0
    %1653 = vmatmul.mubr.f32.gmra.mxu0 %v1556
    %v1654 = vpop.f32.mrf.mxu0
    %v1655 = vadd.f32 %v1539, %v1654
    %v1656 = vpop.f32.mrf.mxu0
    %v1657 = vadd.f32 %v1543, %v1656
    %1658 = vmatprep.mubr.f32.mxu0 0.0
    %1659 = vmatmul.mubr.f32.gmra.mxu0 %v1559
    %v1660 = vpop.f32.mrf.mxu0
    %v1661 = vadd.f32 %v1539, %v1660
    %v1662 = vpop.f32.mrf.mxu0
    %v1663 = vadd.f32 %v1543, %v1662
    %1664 = vmatprep.mubr.f32.mxu0 0.0
    %1665 = vmatmul.mubr.f32.gmra.mxu0 %v1562
    %v1666 = vpop.f32.mrf.mxu0
    %v1667 = vadd.f32 %v1539, %v1666
    %v1668 = vpop.f32.mrf.mxu0
    %v1669 = vadd.f32 %v1543, %v1668
    %1670 = vmatprep.mubr.f32.mxu0 0.0
    %1671 = vmatmul.mubr.f32.gmra.mxu0 %v1565
    %v1672 = vpop.f32.mrf.mxu0
    %v1673 = vadd.f32 %v1539, %v1672
    %v1674 = vpop.f32.mrf.mxu0
    %v1675 = vadd.f32 %v1543, %v1674
    %1676 = vmatprep.mubr.f32.mxu0 0.0
    %1677 = vmatmul.mubr.f32.gmra.mxu0 %v1568
    %v1678 = vpop.f32.mrf.mxu0
    %v1679 = vadd.f32 %v1539, %v1678
    %v1680 = vpop.f32.mrf.mxu0
    %v1681 = vadd.f32 %v1543, %v1680
    %1682 = vdwg.mxu0
    %1683 = vst [vmem:[#allocation2] sm:$0xff] %v1637
    %1684 = vst [vmem:[#allocation2 + $0x8] sm:$0xff] %v1639
    %1685 = vst [vmem:[#allocation2 + $0x10] sm:$0xff] %v1643
    %1686 = vst [vmem:[#allocation2 + $0x18] sm:$0xff] %v1645
    %1687 = vst [vmem:[#allocation2 + $0x20] sm:$0xff] %v1649
    %1688 = vst [vmem:[#allocation2 + $0x28] sm:$0xff] %v1651
    %1689 = vst [vmem:[#allocation2 + $0x30] sm:$0xff] %v1655
    %1690 = vst [vmem:[#allocation2 + $0x38] sm:$0xff] %v1657
    %1691 = vst [vmem:[#allocation2 + $0x40] sm:$0xff] %v1661
    %1692 = vst [vmem:[#allocation2 + $0x48] sm:$0xff] %v1663
    %1693 = vst [vmem:[#allocation2 + $0x50] sm:$0xff] %v1667
    %1694 = vst [vmem:[#allocation2 + $0x58] sm:$0xff] %v1669
    %1695 = vst [vmem:[#allocation2 + $0x60] sm:$0xff] %v1673
    %1696 = vst [vmem:[#allocation2 + $0x68] sm:$0xff] %v1675
    %1697 = vst [vmem:[#allocation2 + $0x70] sm:$0xff] %v1679
    %1698 = vst [vmem:[#allocation2 + $0x78] sm:$0xff] %v1681
    %s1699 = scalar_lea.vmem [#allocation5], 128
    %v1700 = vld [vmem:[%s1699] sm:$0xff]
    %v1701 = vld [vmem:[%s1699 + $0x8] sm:$0xff]
    %v1702 = vld [vmem:[%s1699 + $0x10] sm:$0xff]
    %v1703 = vld [vmem:[%s1699 + $0x18] sm:$0xff]
    %v1704 = vld [vmem:[%s1699 + $0x20] sm:$0xff]
    %v1705 = vld [vmem:[%s1699 + $0x28] sm:$0xff]
    %v1706 = vld [vmem:[%s1699 + $0x30] sm:$0xff]
    %v1707 = vld [vmem:[%s1699 + $0x38] sm:$0xff]
    %v1708 = vld [vmem:[%s1699 + $0x40] sm:$0xff]
    %v1709 = vld [vmem:[%s1699 + $0x48] sm:$0xff]
    %v1710 = vld [vmem:[%s1699 + $0x50] sm:$0xff]
    %v1711 = vld [vmem:[%s1699 + $0x58] sm:$0xff]
    %v1712 = vld [vmem:[%s1699 + $0x60] sm:$0xff]
    %v1713 = vld [vmem:[%s1699 + $0x68] sm:$0xff]
    %v1714 = vld [vmem:[%s1699 + $0x70] sm:$0xff]
    %v1715 = vld [vmem:[%s1699 + $0x78] sm:$0xff]
    %s1716 = scalar_lea.vmem %s4, 16
    %v1717 = vld [vmem:[%s1716] sm:$0xff]
    %s1718 = scalar_lea.vmem %s4, 24
    %v1719 = vld [vmem:[%s1718] sm:$0xff]
    %1721 = vrot.lane.b32.xlu0 %v1719, 32
    %v1722 = vpop.permute.xlu0 %1721
    %v1724 = vsel %vm271, %v1717, %v1722
    %s1725 = scalar_lea.vmem %s5, 16
    %v1726 = vld [vmem:[%s1725] sm:$0xff]
    %s1727 = scalar_lea.vmem %s5, 24
    %v1728 = vld [vmem:[%s1727] sm:$0xff]
    %v1730 = vsel %vm94, %v1724, 0
    %1732 = vmatprep.subr.mxu0 0.0
    %1733 = vmatpush1.msra.mxu0 0.0
    %1734 = vmatprep.subr.mxu0 0.0
    %1735 = vmatpush1.msra.mxu0 0.0
    %1736 = vmatprep.subr.mxu0 0.0
    %1737 = vmatpush1.msra.mxu0 0.0
    %1738 = vmatprep.subr.mxu0 0.0
    %1739 = vmatpush1.msra.mxu0 0.0
    %1740 = vmatprep.subr.mxu0 0.0
    %1741 = vmatpush1.msra.mxu0 0.0
    %1742 = vmatprep.subr.mxu0 0.0
    %1743 = vmatpush1.msra.mxu0 0.0
    %1744 = vmatprep.subr.mxu0 0.0
    %1745 = vmatpush1.msra.mxu0 0.0
    %1746 = vmatprep.subr.mxu0 0.0
    %1747 = vmatpush1.msra.mxu0 0.0
    %1748 = vmatprep.subr.mxu0 %v1715
    %1749 = vmatpush1.msra.mxu0 %v1714
    %1750 = vmatprep.subr.mxu0 %v1713
    %1751 = vmatpush1.msra.mxu0 %v1712
    %1752 = vmatprep.subr.mxu0 %v1711
    %1753 = vmatpush1.msra.mxu0 %v1710
    %1754 = vmatprep.subr.mxu0 %v1709
    %1755 = vmatpush1.msra.mxu0 %v1708
    %1756 = vmatprep.subr.mxu0 %v1707
    %1757 = vmatpush1.msra.mxu0 %v1706
    %1758 = vmatprep.subr.mxu0 %v1705
    %1759 = vmatpush1.msra.mxu0 %v1704
    %1760 = vmatprep.subr.mxu0 %v1703
    %1761 = vmatpush1.msra.mxu0 %v1702
    %1762 = vmatprep.subr.mxu0 %v1701
    %1763 = vmatpush1.msra.mxu0 %v1700
    %1764 = vmatprep.subr.mxu0 0.0
    %1765 = vmatpush2.msra.mxu0 0.0
    %1766 = vmatprep.subr.mxu0 0.0
    %1767 = vmatpush2.msra.mxu0 0.0
    %1768 = vmatprep.subr.mxu0 0.0
    %1769 = vmatpush2.msra.mxu0 0.0
    %1770 = vmatprep.subr.mxu0 0.0
    %1771 = vmatpush2.msra.mxu0 0.0
    %1772 = vmatprep.subr.mxu0 0.0
    %1773 = vmatpush2.msra.mxu0 0.0
    %1774 = vmatprep.subr.mxu0 0.0
    %1775 = vmatpush2.msra.mxu0 0.0
    %1776 = vmatprep.subr.mxu0 0.0
    %1777 = vmatpush2.msra.mxu0 0.0
    %1778 = vmatprep.subr.mxu0 0.0
    %1779 = vmatpush2.msra.mxu0 0.0
    %1780 = vmatprep.subr.mxu0 0.0
    %1781 = vmatpush2.msra.mxu0 0.0
    %1782 = vmatprep.subr.mxu0 0.0
    %1783 = vmatpush2.msra.mxu0 0.0
    %1784 = vmatprep.subr.mxu0 0.0
    %1785 = vmatpush2.msra.mxu0 0.0
    %1786 = vmatprep.subr.mxu0 0.0
    %1787 = vmatpush2.msra.mxu0 0.0
    %1788 = vmatprep.subr.mxu0 0.0
    %1789 = vmatpush2.msra.mxu0 0.0
    %1790 = vmatprep.subr.mxu0 0.0
    %1791 = vmatpush2.msra.mxu0 0.0
    %1792 = vmatprep.subr.mxu0 0.0
    %1793 = vmatpush2.msra.mxu0 0.0
    %1794 = vmatprep.subr.mxu0 0.0
    %1795 = vmatpush2.msra.mxu0 0.0
    %1796 = vmatprep.mubr.f32.mxu0 0.0
    %1797 = vmatmul.mubr.f32.gmra.mxu0 %v1730
    %v1798 = vpop.f32.mrf.mxu0
    %v1799 = vadd.f32 0.0, %v1798
    %v1800 = vpop.f32.mrf.mxu0
    %v1801 = vadd.f32 0.0, %v1800
    %1802 = vdwg.mxu0
    %v1803 = vld [vmem:[%s352] sm:$0xff]
    %v1804 = vadd.f32 %v1803, %v1799
    %v1805 = vld [vmem:[%s357 + $0x8] sm:$0xff]
    %v1806 = vadd.f32 %v1805, %v1801
    %v1807 = vxor.u32 %v1804, 2147483648
    %v1808 = vmul.f32 %v1807, 1.442695
    %v1809 = vpow.pop %v1808
    %v1810 = vadd.f32 %v1809, 1.0
    %v1811 = vrcp.pop %v1810
    %v1812 = vmul.f32 1.0, %v1811
    %v1813 = vtanh.pop %v1804
    %v1814 = vxor.u32 %v1806, 2147483648
    %v1815 = vmul.f32 %v1814, 1.442695
    %v1816 = vpow.pop %v1815
    %v1817 = vadd.f32 %v1816, 1.0
    %v1818 = vrcp.pop %v1817
    %v1819 = vmul.f32 1.0, %v1818
    %v1820 = vtanh.pop %v1806
    %1822 = vrot.lane.b32.xlu0 %v1726, 32
    %v1823 = vpop.permute.xlu0 %1822
    %v1825 = vmul.f32 %v1812, %v1823
    %1827 = vrot.lane.b32.xlu0 %v1813, 64
    %v1828 = vpop.permute.xlu0 %1827
    %v1830 = vmul.f32 %v1812, %v1828
    %1832 = vrot.lane.b32.xlu0 %v1830, 32
    %v1833 = vpop.permute.xlu0 %1832
    %v1835 = vadd.f32 %v1825, %v1833
    %1837 = vrot.lane.b32.xlu0 %v1728, 32
    %v1838 = vpop.permute.xlu0 %1837
    %v1840 = vmul.f32 %v1819, %v1838
    %1842 = vrot.lane.b32.xlu0 %v1820, 64
    %v1843 = vpop.permute.xlu0 %1842
    %v1845 = vmul.f32 %v1819, %v1843
    %1847 = vrot.lane.b32.xlu0 %v1845, 32
    %v1848 = vpop.permute.xlu0 %1847
    %v1850 = vadd.f32 %v1840, %v1848
    %v1851 = vtanh.pop %v1835
    %1853 = vrot.lane.b32.xlu0 %v1851, 64
    %v1854 = vpop.permute.xlu0 %1853
    %v1856 = vmul.f32 %v1812, %v1854
    %v1857 = vtanh.pop %v1850
    %1859 = vrot.lane.b32.xlu0 %v1857, 64
    %v1860 = vpop.permute.xlu0 %1859
    %v1862 = vmul.f32 %v1819, %v1860
    %1864 = vrot.lane.b32.xlu0 %v1856, 32
    %v1865 = vpop.permute.xlu0 %1864
    %1867 = vst.msk [vmem:[#allocation3] sm:$0xff] %vm271, %v1865
    %1869 = vrot.lane.b32.xlu0 %v1862, 32
    %v1870 = vpop.permute.xlu0 %1869
    %1872 = vst.msk [vmem:[%s425] sm:$0xff] %vm271, %v1870
    %1873 = vrot.lane.b32.xlu0 %v1862, 64
    %v1874 = vpop.permute.xlu0 %1873
    %v1876 = vsel %vm271, %v1865, %v1874
    %v1878 = vsel %vm94, %v1876, 0
    %1880 = vmatprep.subr.mxu0 0.0
    %1881 = vmatpush1.msra.mxu0 0.0
    %1882 = vmatprep.subr.mxu0 0.0
    %1883 = vmatpush1.msra.mxu0 0.0
    %1884 = vmatprep.subr.mxu0 0.0
    %1885 = vmatpush1.msra.mxu0 0.0
    %1886 = vmatprep.subr.mxu0 0.0
    %1887 = vmatpush1.msra.mxu0 0.0
    %1888 = vmatprep.subr.mxu0 0.0
    %1889 = vmatpush1.msra.mxu0 0.0
    %1890 = vmatprep.subr.mxu0 0.0
    %1891 = vmatpush1.msra.mxu0 0.0
    %1892 = vmatprep.subr.mxu0 0.0
    %1893 = vmatpush1.msra.mxu0 0.0
    %1894 = vmatprep.subr.mxu0 0.0
    %1895 = vmatpush1.msra.mxu0 0.0
    %1896 = vmatprep.subr.mxu0 %v1715
    %1897 = vmatpush1.msra.mxu0 %v1714
    %1898 = vmatprep.subr.mxu0 %v1713
    %1899 = vmatpush1.msra.mxu0 %v1712
    %1900 = vmatprep.subr.mxu0 %v1711
    %1901 = vmatpush1.msra.mxu0 %v1710
    %1902 = vmatprep.subr.mxu0 %v1709
    %1903 = vmatpush1.msra.mxu0 %v1708
    %1904 = vmatprep.subr.mxu0 %v1707
    %1905 = vmatpush1.msra.mxu0 %v1706
    %1906 = vmatprep.subr.mxu0 %v1705
    %1907 = vmatpush1.msra.mxu0 %v1704
    %1908 = vmatprep.subr.mxu0 %v1703
    %1909 = vmatpush1.msra.mxu0 %v1702
    %1910 = vmatprep.subr.mxu0 %v1701
    %1911 = vmatpush1.msra.mxu0 %v1700
    %1912 = vmatprep.subr.mxu0 0.0
    %1913 = vmatpush2.msra.mxu0 0.0
    %1914 = vmatprep.subr.mxu0 0.0
    %1915 = vmatpush2.msra.mxu0 0.0
    %1916 = vmatprep.subr.mxu0 0.0
    %1917 = vmatpush2.msra.mxu0 0.0
    %1918 = vmatprep.subr.mxu0 0.0
    %1919 = vmatpush2.msra.mxu0 0.0
    %1920 = vmatprep.subr.mxu0 0.0
    %1921 = vmatpush2.msra.mxu0 0.0
    %1922 = vmatprep.subr.mxu0 0.0
    %1923 = vmatpush2.msra.mxu0 0.0
    %1924 = vmatprep.subr.mxu0 0.0
    %1925 = vmatpush2.msra.mxu0 0.0
    %1926 = vmatprep.subr.mxu0 0.0
    %1927 = vmatpush2.msra.mxu0 0.0
    %1928 = vmatprep.subr.mxu0 0.0
    %1929 = vmatpush2.msra.mxu0 0.0
    %1930 = vmatprep.subr.mxu0 0.0
    %1931 = vmatpush2.msra.mxu0 0.0
    %1932 = vmatprep.subr.mxu0 0.0
    %1933 = vmatpush2.msra.mxu0 0.0
    %1934 = vmatprep.subr.mxu0 0.0
    %1935 = vmatpush2.msra.mxu0 0.0
    %1936 = vmatprep.subr.mxu0 0.0
    %1937 = vmatpush2.msra.mxu0 0.0
    %1938 = vmatprep.subr.mxu0 0.0
    %1939 = vmatpush2.msra.mxu0 0.0
    %1940 = vmatprep.subr.mxu0 0.0
    %1941 = vmatpush2.msra.mxu0 0.0
    %1942 = vmatprep.subr.mxu0 0.0
    %1943 = vmatpush2.msra.mxu0 0.0
    %1944 = vmatprep.mubr.f32.mxu0 0.0
    %1945 = vmatmul.mubr.f32.gmra.mxu0 %v1878
    %v1946 = vpop.f32.mrf.mxu0
    %v1947 = vadd.f32 0.0, %v1946
    %v1948 = vpop.f32.mrf.mxu0
    %v1949 = vadd.f32 0.0, %v1948
    %1950 = vdwg.mxu0
    %v1951 = vld [vmem:[%s507] sm:$0xff]
    %v1952 = vadd.f32 %v1951, %v1947
    %v1953 = vld [vmem:[%s512 + $0x8] sm:$0xff]
    %v1954 = vadd.f32 %v1953, %v1949
    %v1955 = vxor.u32 %v1952, 2147483648
    %v1956 = vmul.f32 %v1955, 1.442695
    %v1957 = vpow.pop %v1956
    %v1958 = vadd.f32 %v1957, 1.0
    %v1959 = vrcp.pop %v1958
    %v1960 = vmul.f32 1.0, %v1959
    %v1961 = vtanh.pop %v1952
    %v1962 = vxor.u32 %v1954, 2147483648
    %v1963 = vmul.f32 %v1962, 1.442695
    %v1964 = vpow.pop %v1963
    %v1965 = vadd.f32 %v1964, 1.0
    %v1966 = vrcp.pop %v1965
    %v1967 = vmul.f32 1.0, %v1966
    %v1968 = vtanh.pop %v1954
    %v1969 = vmul.f32 %v1960, %v1835
    %1971 = vrot.lane.b32.xlu0 %v1961, 64
    %v1972 = vpop.permute.xlu0 %1971
    %v1974 = vmul.f32 %v1960, %v1972
    %1976 = vrot.lane.b32.xlu0 %v1974, 32
    %v1977 = vpop.permute.xlu0 %1976
    %v1979 = vadd.f32 %v1969, %v1977
    %v1980 = vmul.f32 %v1967, %v1850
    %1982 = vrot.lane.b32.xlu0 %v1968, 64
    %v1983 = vpop.permute.xlu0 %1982
    %v1985 = vmul.f32 %v1967, %v1983
    %1987 = vrot.lane.b32.xlu0 %v1985, 32
    %v1988 = vpop.permute.xlu0 %1987
    %v1990 = vadd.f32 %v1980, %v1988
    %v1991 = vtanh.pop %v1979
    %1993 = vrot.lane.b32.xlu0 %v1991, 64
    %v1994 = vpop.permute.xlu0 %1993
    %v1996 = vmul.f32 %v1960, %v1994
    %v1997 = vtanh.pop %v1990
    %1999 = vrot.lane.b32.xlu0 %v1997, 64
    %v2000 = vpop.permute.xlu0 %1999
    %v2002 = vmul.f32 %v1967, %v2000
    %2004 = vrot.lane.b32.xlu0 %v1996, 32
    %v2005 = vpop.permute.xlu0 %2004
    %2007 = vst.msk [vmem:[%s567] sm:$0xff] %vm271, %v2005
    %2009 = vrot.lane.b32.xlu0 %v2002, 32
    %v2010 = vpop.permute.xlu0 %2009
    %2012 = vst.msk [vmem:[%s573] sm:$0xff] %vm271, %v2010
    %2013 = vrot.lane.b32.xlu0 %v2002, 64
    %v2014 = vpop.permute.xlu0 %2013
    %v2016 = vsel %vm271, %v2005, %v2014
    %v2018 = vsel %vm94, %v2016, 0
    %2020 = vmatprep.subr.mxu0 0.0
    %2021 = vmatpush1.msra.mxu0 0.0
    %2022 = vmatprep.subr.mxu0 0.0
    %2023 = vmatpush1.msra.mxu0 0.0
    %2024 = vmatprep.subr.mxu0 0.0
    %2025 = vmatpush1.msra.mxu0 0.0
    %2026 = vmatprep.subr.mxu0 0.0
    %2027 = vmatpush1.msra.mxu0 0.0
    %2028 = vmatprep.subr.mxu0 0.0
    %2029 = vmatpush1.msra.mxu0 0.0
    %2030 = vmatprep.subr.mxu0 0.0
    %2031 = vmatpush1.msra.mxu0 0.0
    %2032 = vmatprep.subr.mxu0 0.0
    %2033 = vmatpush1.msra.mxu0 0.0
    %2034 = vmatprep.subr.mxu0 0.0
    %2035 = vmatpush1.msra.mxu0 0.0
    %2036 = vmatprep.subr.mxu0 %v1715
    %2037 = vmatpush1.msra.mxu0 %v1714
    %2038 = vmatprep.subr.mxu0 %v1713
    %2039 = vmatpush1.msra.mxu0 %v1712
    %2040 = vmatprep.subr.mxu0 %v1711
    %2041 = vmatpush1.msra.mxu0 %v1710
    %2042 = vmatprep.subr.mxu0 %v1709
    %2043 = vmatpush1.msra.mxu0 %v1708
    %2044 = vmatprep.subr.mxu0 %v1707
    %2045 = vmatpush1.msra.mxu0 %v1706
    %2046 = vmatprep.subr.mxu0 %v1705
    %2047 = vmatpush1.msra.mxu0 %v1704
    %2048 = vmatprep.subr.mxu0 %v1703
    %2049 = vmatpush1.msra.mxu0 %v1702
    %2050 = vmatprep.subr.mxu0 %v1701
    %2051 = vmatpush1.msra.mxu0 %v1700
    %2052 = vmatprep.subr.mxu0 0.0
    %2053 = vmatpush2.msra.mxu0 0.0
    %2054 = vmatprep.subr.mxu0 0.0
    %2055 = vmatpush2.msra.mxu0 0.0
    %2056 = vmatprep.subr.mxu0 0.0
    %2057 = vmatpush2.msra.mxu0 0.0
    %2058 = vmatprep.subr.mxu0 0.0
    %2059 = vmatpush2.msra.mxu0 0.0
    %2060 = vmatprep.subr.mxu0 0.0
    %2061 = vmatpush2.msra.mxu0 0.0
    %2062 = vmatprep.subr.mxu0 0.0
    %2063 = vmatpush2.msra.mxu0 0.0
    %2064 = vmatprep.subr.mxu0 0.0
    %2065 = vmatpush2.msra.mxu0 0.0
    %2066 = vmatprep.subr.mxu0 0.0
    %2067 = vmatpush2.msra.mxu0 0.0
    %2068 = vmatprep.subr.mxu0 0.0
    %2069 = vmatpush2.msra.mxu0 0.0
    %2070 = vmatprep.subr.mxu0 0.0
    %2071 = vmatpush2.msra.mxu0 0.0
    %2072 = vmatprep.subr.mxu0 0.0
    %2073 = vmatpush2.msra.mxu0 0.0
    %2074 = vmatprep.subr.mxu0 0.0
    %2075 = vmatpush2.msra.mxu0 0.0
    %2076 = vmatprep.subr.mxu0 0.0
    %2077 = vmatpush2.msra.mxu0 0.0
    %2078 = vmatprep.subr.mxu0 0.0
    %2079 = vmatpush2.msra.mxu0 0.0
    %2080 = vmatprep.subr.mxu0 0.0
    %2081 = vmatpush2.msra.mxu0 0.0
    %2082 = vmatprep.subr.mxu0 0.0
    %2083 = vmatpush2.msra.mxu0 0.0
    %2084 = vmatprep.mubr.f32.mxu0 0.0
    %2085 = vmatmul.mubr.f32.gmra.mxu0 %v2018
    %v2086 = vpop.f32.mrf.mxu0
    %v2087 = vadd.f32 0.0, %v2086
    %v2088 = vpop.f32.mrf.mxu0
    %v2089 = vadd.f32 0.0, %v2088
    %2090 = vdwg.mxu0
    %v2091 = vld [vmem:[%s655] sm:$0xff]
    %v2092 = vadd.f32 %v2091, %v2087
    %v2093 = vld [vmem:[%s660 + $0x8] sm:$0xff]
    %v2094 = vadd.f32 %v2093, %v2089
    %v2095 = vxor.u32 %v2092, 2147483648
    %v2096 = vmul.f32 %v2095, 1.442695
    %v2097 = vpow.pop %v2096
    %v2098 = vadd.f32 %v2097, 1.0
    %v2099 = vrcp.pop %v2098
    %v2100 = vmul.f32 1.0, %v2099
    %v2101 = vtanh.pop %v2092
    %v2102 = vxor.u32 %v2094, 2147483648
    %v2103 = vmul.f32 %v2102, 1.442695
    %v2104 = vpow.pop %v2103
    %v2105 = vadd.f32 %v2104, 1.0
    %v2106 = vrcp.pop %v2105
    %v2107 = vmul.f32 1.0, %v2106
    %v2108 = vtanh.pop %v2094
    %v2109 = vmul.f32 %v2100, %v1979
    %2111 = vrot.lane.b32.xlu0 %v2101, 64
    %v2112 = vpop.permute.xlu0 %2111
    %v2114 = vmul.f32 %v2100, %v2112
    %2116 = vrot.lane.b32.xlu0 %v2114, 32
    %v2117 = vpop.permute.xlu0 %2116
    %v2119 = vadd.f32 %v2109, %v2117
    %v2120 = vmul.f32 %v2107, %v1990
    %2122 = vrot.lane.b32.xlu0 %v2108, 64
    %v2123 = vpop.permute.xlu0 %2122
    %v2125 = vmul.f32 %v2107, %v2123
    %2127 = vrot.lane.b32.xlu0 %v2125, 32
    %v2128 = vpop.permute.xlu0 %2127
    %v2130 = vadd.f32 %v2120, %v2128
    %v2131 = vtanh.pop %v2119
    %2133 = vrot.lane.b32.xlu0 %v2131, 64
    %v2134 = vpop.permute.xlu0 %2133
    %v2136 = vmul.f32 %v2100, %v2134
    %v2137 = vtanh.pop %v2130
    %2139 = vrot.lane.b32.xlu0 %v2137, 64
    %v2140 = vpop.permute.xlu0 %2139
    %v2142 = vmul.f32 %v2107, %v2140
    %2144 = vrot.lane.b32.xlu0 %v2136, 32
    %v2145 = vpop.permute.xlu0 %2144
    %2147 = vst.msk [vmem:[%s715] sm:$0xff] %vm271, %v2145
    %2149 = vrot.lane.b32.xlu0 %v2142, 32
    %v2150 = vpop.permute.xlu0 %2149
    %2152 = vst.msk [vmem:[%s721] sm:$0xff] %vm271, %v2150
    %2153 = vrot.lane.b32.xlu0 %v2142, 64
    %v2154 = vpop.permute.xlu0 %2153
    %v2156 = vsel %vm271, %v2145, %v2154
    %v2158 = vsel %vm94, %v2156, 0
    %2160 = vmatprep.subr.mxu0 0.0
    %2161 = vmatpush1.msra.mxu0 0.0
    %2162 = vmatprep.subr.mxu0 0.0
    %2163 = vmatpush1.msra.mxu0 0.0
    %2164 = vmatprep.subr.mxu0 0.0
    %2165 = vmatpush1.msra.mxu0 0.0
    %2166 = vmatprep.subr.mxu0 0.0
    %2167 = vmatpush1.msra.mxu0 0.0
    %2168 = vmatprep.subr.mxu0 0.0
    %2169 = vmatpush1.msra.mxu0 0.0
    %2170 = vmatprep.subr.mxu0 0.0
    %2171 = vmatpush1.msra.mxu0 0.0
    %2172 = vmatprep.subr.mxu0 0.0
    %2173 = vmatpush1.msra.mxu0 0.0
    %2174 = vmatprep.subr.mxu0 0.0
    %2175 = vmatpush1.msra.mxu0 0.0
    %2176 = vmatprep.subr.mxu0 %v1715
    %2177 = vmatpush1.msra.mxu0 %v1714
    %2178 = vmatprep.subr.mxu0 %v1713
    %2179 = vmatpush1.msra.mxu0 %v1712
    %2180 = vmatprep.subr.mxu0 %v1711
    %2181 = vmatpush1.msra.mxu0 %v1710
    %2182 = vmatprep.subr.mxu0 %v1709
    %2183 = vmatpush1.msra.mxu0 %v1708
    %2184 = vmatprep.subr.mxu0 %v1707
    %2185 = vmatpush1.msra.mxu0 %v1706
    %2186 = vmatprep.subr.mxu0 %v1705
    %2187 = vmatpush1.msra.mxu0 %v1704
    %2188 = vmatprep.subr.mxu0 %v1703
    %2189 = vmatpush1.msra.mxu0 %v1702
    %2190 = vmatprep.subr.mxu0 %v1701
    %2191 = vmatpush1.msra.mxu0 %v1700
    %2192 = vmatprep.subr.mxu0 0.0
    %2193 = vmatpush2.msra.mxu0 0.0
    %2194 = vmatprep.subr.mxu0 0.0
    %2195 = vmatpush2.msra.mxu0 0.0
    %2196 = vmatprep.subr.mxu0 0.0
    %2197 = vmatpush2.msra.mxu0 0.0
    %2198 = vmatprep.subr.mxu0 0.0
    %2199 = vmatpush2.msra.mxu0 0.0
    %2200 = vmatprep.subr.mxu0 0.0
    %2201 = vmatpush2.msra.mxu0 0.0
    %2202 = vmatprep.subr.mxu0 0.0
    %2203 = vmatpush2.msra.mxu0 0.0
    %2204 = vmatprep.subr.mxu0 0.0
    %2205 = vmatpush2.msra.mxu0 0.0
    %2206 = vmatprep.subr.mxu0 0.0
    %2207 = vmatpush2.msra.mxu0 0.0
    %2208 = vmatprep.subr.mxu0 0.0
    %2209 = vmatpush2.msra.mxu0 0.0
    %2210 = vmatprep.subr.mxu0 0.0
    %2211 = vmatpush2.msra.mxu0 0.0
    %2212 = vmatprep.subr.mxu0 0.0
    %2213 = vmatpush2.msra.mxu0 0.0
    %2214 = vmatprep.subr.mxu0 0.0
    %2215 = vmatpush2.msra.mxu0 0.0
    %2216 = vmatprep.subr.mxu0 0.0
    %2217 = vmatpush2.msra.mxu0 0.0
    %2218 = vmatprep.subr.mxu0 0.0
    %2219 = vmatpush2.msra.mxu0 0.0
    %2220 = vmatprep.subr.mxu0 0.0
    %2221 = vmatpush2.msra.mxu0 0.0
    %2222 = vmatprep.subr.mxu0 0.0
    %2223 = vmatpush2.msra.mxu0 0.0
    %2224 = vmatprep.mubr.f32.mxu0 0.0
    %2225 = vmatmul.mubr.f32.gmra.mxu0 %v2158
    %v2226 = vpop.f32.mrf.mxu0
    %v2227 = vadd.f32 0.0, %v2226
    %v2228 = vpop.f32.mrf.mxu0
    %v2229 = vadd.f32 0.0, %v2228
    %2230 = vdwg.mxu0
    %v2231 = vld [vmem:[%s803] sm:$0xff]
    %v2232 = vadd.f32 %v2231, %v2227
    %v2233 = vld [vmem:[%s808 + $0x8] sm:$0xff]
    %v2234 = vadd.f32 %v2233, %v2229
    %v2235 = vxor.u32 %v2232, 2147483648
    %v2236 = vmul.f32 %v2235, 1.442695
    %v2237 = vpow.pop %v2236
    %v2238 = vadd.f32 %v2237, 1.0
    %v2239 = vrcp.pop %v2238
    %v2240 = vmul.f32 1.0, %v2239
    %v2241 = vtanh.pop %v2232
    %v2242 = vxor.u32 %v2234, 2147483648
    %v2243 = vmul.f32 %v2242, 1.442695
    %v2244 = vpow.pop %v2243
    %v2245 = vadd.f32 %v2244, 1.0
    %v2246 = vrcp.pop %v2245
    %v2247 = vmul.f32 1.0, %v2246
    %v2248 = vtanh.pop %v2234
    %v2249 = vmul.f32 %v2240, %v2119
    %2251 = vrot.lane.b32.xlu0 %v2241, 64
    %v2252 = vpop.permute.xlu0 %2251
    %v2254 = vmul.f32 %v2240, %v2252
    %2256 = vrot.lane.b32.xlu0 %v2254, 32
    %v2257 = vpop.permute.xlu0 %2256
    %v2259 = vadd.f32 %v2249, %v2257
    %v2260 = vmul.f32 %v2247, %v2130
    %2262 = vrot.lane.b32.xlu0 %v2248, 64
    %v2263 = vpop.permute.xlu0 %2262
    %v2265 = vmul.f32 %v2247, %v2263
    %2267 = vrot.lane.b32.xlu0 %v2265, 32
    %v2268 = vpop.permute.xlu0 %2267
    %v2270 = vadd.f32 %v2260, %v2268
    %v2271 = vtanh.pop %v2259
    %2273 = vrot.lane.b32.xlu0 %v2271, 64
    %v2274 = vpop.permute.xlu0 %2273
    %v2276 = vmul.f32 %v2240, %v2274
    %v2277 = vtanh.pop %v2270
    %2279 = vrot.lane.b32.xlu0 %v2277, 64
    %v2280 = vpop.permute.xlu0 %2279
    %v2282 = vmul.f32 %v2247, %v2280
    %2284 = vrot.lane.b32.xlu0 %v2276, 32
    %v2285 = vpop.permute.xlu0 %2284
    %2287 = vst.msk [vmem:[%s863] sm:$0xff] %vm271, %v2285
    %2289 = vrot.lane.b32.xlu0 %v2282, 32
    %v2290 = vpop.permute.xlu0 %2289
    %2292 = vst.msk [vmem:[%s869] sm:$0xff] %vm271, %v2290
    %2293 = vrot.lane.b32.xlu0 %v2282, 64
    %v2294 = vpop.permute.xlu0 %2293
    %v2296 = vsel %vm271, %v2285, %v2294
    %v2298 = vsel %vm94, %v2296, 0
    %2300 = vmatprep.subr.mxu0 0.0
    %2301 = vmatpush1.msra.mxu0 0.0
    %2302 = vmatprep.subr.mxu0 0.0
    %2303 = vmatpush1.msra.mxu0 0.0
    %2304 = vmatprep.subr.mxu0 0.0
    %2305 = vmatpush1.msra.mxu0 0.0
    %2306 = vmatprep.subr.mxu0 0.0
    %2307 = vmatpush1.msra.mxu0 0.0
    %2308 = vmatprep.subr.mxu0 0.0
    %2309 = vmatpush1.msra.mxu0 0.0
    %2310 = vmatprep.subr.mxu0 0.0
    %2311 = vmatpush1.msra.mxu0 0.0
    %2312 = vmatprep.subr.mxu0 0.0
    %2313 = vmatpush1.msra.mxu0 0.0
    %2314 = vmatprep.subr.mxu0 0.0
    %2315 = vmatpush1.msra.mxu0 0.0
    %2316 = vmatprep.subr.mxu0 %v1715
    %2317 = vmatpush1.msra.mxu0 %v1714
    %2318 = vmatprep.subr.mxu0 %v1713
    %2319 = vmatpush1.msra.mxu0 %v1712
    %2320 = vmatprep.subr.mxu0 %v1711
    %2321 = vmatpush1.msra.mxu0 %v1710
    %2322 = vmatprep.subr.mxu0 %v1709
    %2323 = vmatpush1.msra.mxu0 %v1708
    %2324 = vmatprep.subr.mxu0 %v1707
    %2325 = vmatpush1.msra.mxu0 %v1706
    %2326 = vmatprep.subr.mxu0 %v1705
    %2327 = vmatpush1.msra.mxu0 %v1704
    %2328 = vmatprep.subr.mxu0 %v1703
    %2329 = vmatpush1.msra.mxu0 %v1702
    %2330 = vmatprep.subr.mxu0 %v1701
    %2331 = vmatpush1.msra.mxu0 %v1700
    %2332 = vmatprep.subr.mxu0 0.0
    %2333 = vmatpush2.msra.mxu0 0.0
    %2334 = vmatprep.subr.mxu0 0.0
    %2335 = vmatpush2.msra.mxu0 0.0
    %2336 = vmatprep.subr.mxu0 0.0
    %2337 = vmatpush2.msra.mxu0 0.0
    %2338 = vmatprep.subr.mxu0 0.0
    %2339 = vmatpush2.msra.mxu0 0.0
    %2340 = vmatprep.subr.mxu0 0.0
    %2341 = vmatpush2.msra.mxu0 0.0
    %2342 = vmatprep.subr.mxu0 0.0
    %2343 = vmatpush2.msra.mxu0 0.0
    %2344 = vmatprep.subr.mxu0 0.0
    %2345 = vmatpush2.msra.mxu0 0.0
    %2346 = vmatprep.subr.mxu0 0.0
    %2347 = vmatpush2.msra.mxu0 0.0
    %2348 = vmatprep.subr.mxu0 0.0
    %2349 = vmatpush2.msra.mxu0 0.0
    %2350 = vmatprep.subr.mxu0 0.0
    %2351 = vmatpush2.msra.mxu0 0.0
    %2352 = vmatprep.subr.mxu0 0.0
    %2353 = vmatpush2.msra.mxu0 0.0
    %2354 = vmatprep.subr.mxu0 0.0
    %2355 = vmatpush2.msra.mxu0 0.0
    %2356 = vmatprep.subr.mxu0 0.0
    %2357 = vmatpush2.msra.mxu0 0.0
    %2358 = vmatprep.subr.mxu0 0.0
    %2359 = vmatpush2.msra.mxu0 0.0
    %2360 = vmatprep.subr.mxu0 0.0
    %2361 = vmatpush2.msra.mxu0 0.0
    %2362 = vmatprep.subr.mxu0 0.0
    %2363 = vmatpush2.msra.mxu0 0.0
    %2364 = vmatprep.mubr.f32.mxu0 0.0
    %2365 = vmatmul.mubr.f32.gmra.mxu0 %v2298
    %v2366 = vpop.f32.mrf.mxu0
    %v2367 = vadd.f32 0.0, %v2366
    %v2368 = vpop.f32.mrf.mxu0
    %v2369 = vadd.f32 0.0, %v2368
    %2370 = vdwg.mxu0
    %v2371 = vld [vmem:[%s808] sm:$0xff]
    %v2372 = vadd.f32 %v2371, %v2367
    %v2373 = vld [vmem:[%s803 + $0x8] sm:$0xff]
    %v2374 = vadd.f32 %v2373, %v2369
    %v2375 = vxor.u32 %v2372, 2147483648
    %v2376 = vmul.f32 %v2375, 1.442695
    %v2377 = vpow.pop %v2376
    %v2378 = vadd.f32 %v2377, 1.0
    %v2379 = vrcp.pop %v2378
    %v2380 = vmul.f32 1.0, %v2379
    %v2381 = vtanh.pop %v2372
    %v2382 = vxor.u32 %v2374, 2147483648
    %v2383 = vmul.f32 %v2382, 1.442695
    %v2384 = vpow.pop %v2383
    %v2385 = vadd.f32 %v2384, 1.0
    %v2386 = vrcp.pop %v2385
    %v2387 = vmul.f32 1.0, %v2386
    %v2388 = vtanh.pop %v2374
    %v2389 = vmul.f32 %v2380, %v2259
    %2391 = vrot.lane.b32.xlu0 %v2381, 64
    %v2392 = vpop.permute.xlu0 %2391
    %v2394 = vmul.f32 %v2380, %v2392
    %2396 = vrot.lane.b32.xlu0 %v2394, 32
    %v2397 = vpop.permute.xlu0 %2396
    %v2399 = vadd.f32 %v2389, %v2397
    %v2400 = vmul.f32 %v2387, %v2270
    %2402 = vrot.lane.b32.xlu0 %v2388, 64
    %v2403 = vpop.permute.xlu0 %2402
    %v2405 = vmul.f32 %v2387, %v2403
    %2407 = vrot.lane.b32.xlu0 %v2405, 32
    %v2408 = vpop.permute.xlu0 %2407
    %v2410 = vadd.f32 %v2400, %v2408
    %v2411 = vtanh.pop %v2399
    %2413 = vrot.lane.b32.xlu0 %v2411, 64
    %v2414 = vpop.permute.xlu0 %2413
    %v2416 = vmul.f32 %v2380, %v2414
    %v2417 = vtanh.pop %v2410
    %2419 = vrot.lane.b32.xlu0 %v2417, 64
    %v2420 = vpop.permute.xlu0 %2419
    %v2422 = vmul.f32 %v2387, %v2420
    %2424 = vrot.lane.b32.xlu0 %v2416, 32
    %v2425 = vpop.permute.xlu0 %2424
    %2427 = vst.msk [vmem:[%s1005] sm:$0xff] %vm271, %v2425
    %2429 = vrot.lane.b32.xlu0 %v2422, 32
    %v2430 = vpop.permute.xlu0 %2429
    %2432 = vst.msk [vmem:[%s1011] sm:$0xff] %vm271, %v2430
    %2433 = vrot.lane.b32.xlu0 %v2422, 64
    %v2434 = vpop.permute.xlu0 %2433
    %v2436 = vsel %vm271, %v2425, %v2434
    %v2438 = vsel %vm94, %v2436, 0
    %2440 = vmatprep.subr.mxu0 0.0
    %2441 = vmatpush1.msra.mxu0 0.0
    %2442 = vmatprep.subr.mxu0 0.0
    %2443 = vmatpush1.msra.mxu0 0.0
    %2444 = vmatprep.subr.mxu0 0.0
    %2445 = vmatpush1.msra.mxu0 0.0
    %2446 = vmatprep.subr.mxu0 0.0
    %2447 = vmatpush1.msra.mxu0 0.0
    %2448 = vmatprep.subr.mxu0 0.0
    %2449 = vmatpush1.msra.mxu0 0.0
    %2450 = vmatprep.subr.mxu0 0.0
    %2451 = vmatpush1.msra.mxu0 0.0
    %2452 = vmatprep.subr.mxu0 0.0
    %2453 = vmatpush1.msra.mxu0 0.0
    %2454 = vmatprep.subr.mxu0 0.0
    %2455 = vmatpush1.msra.mxu0 0.0
    %2456 = vmatprep.subr.mxu0 %v1715
    %2457 = vmatpush1.msra.mxu0 %v1714
    %2458 = vmatprep.subr.mxu0 %v1713
    %2459 = vmatpush1.msra.mxu0 %v1712
    %2460 = vmatprep.subr.mxu0 %v1711
    %2461 = vmatpush1.msra.mxu0 %v1710
    %2462 = vmatprep.subr.mxu0 %v1709
    %2463 = vmatpush1.msra.mxu0 %v1708
    %2464 = vmatprep.subr.mxu0 %v1707
    %2465 = vmatpush1.msra.mxu0 %v1706
    %2466 = vmatprep.subr.mxu0 %v1705
    %2467 = vmatpush1.msra.mxu0 %v1704
    %2468 = vmatprep.subr.mxu0 %v1703
    %2469 = vmatpush1.msra.mxu0 %v1702
    %2470 = vmatprep.subr.mxu0 %v1701
    %2471 = vmatpush1.msra.mxu0 %v1700
    %2472 = vmatprep.subr.mxu0 0.0
    %2473 = vmatpush2.msra.mxu0 0.0
    %2474 = vmatprep.subr.mxu0 0.0
    %2475 = vmatpush2.msra.mxu0 0.0
    %2476 = vmatprep.subr.mxu0 0.0
    %2477 = vmatpush2.msra.mxu0 0.0
    %2478 = vmatprep.subr.mxu0 0.0
    %2479 = vmatpush2.msra.mxu0 0.0
    %2480 = vmatprep.subr.mxu0 0.0
    %2481 = vmatpush2.msra.mxu0 0.0
    %2482 = vmatprep.subr.mxu0 0.0
    %2483 = vmatpush2.msra.mxu0 0.0
    %2484 = vmatprep.subr.mxu0 0.0
    %2485 = vmatpush2.msra.mxu0 0.0
    %2486 = vmatprep.subr.mxu0 0.0
    %2487 = vmatpush2.msra.mxu0 0.0
    %2488 = vmatprep.subr.mxu0 0.0
    %2489 = vmatpush2.msra.mxu0 0.0
    %2490 = vmatprep.subr.mxu0 0.0
    %2491 = vmatpush2.msra.mxu0 0.0
    %2492 = vmatprep.subr.mxu0 0.0
    %2493 = vmatpush2.msra.mxu0 0.0
    %2494 = vmatprep.subr.mxu0 0.0
    %2495 = vmatpush2.msra.mxu0 0.0
    %2496 = vmatprep.subr.mxu0 0.0
    %2497 = vmatpush2.msra.mxu0 0.0
    %2498 = vmatprep.subr.mxu0 0.0
    %2499 = vmatpush2.msra.mxu0 0.0
    %2500 = vmatprep.subr.mxu0 0.0
    %2501 = vmatpush2.msra.mxu0 0.0
    %2502 = vmatprep.subr.mxu0 0.0
    %2503 = vmatpush2.msra.mxu0 0.0
    %2504 = vmatprep.mubr.f32.mxu0 0.0
    %2505 = vmatmul.mubr.f32.gmra.mxu0 %v2438
    %v2506 = vpop.f32.mrf.mxu0
    %v2507 = vadd.f32 0.0, %v2506
    %v2508 = vpop.f32.mrf.mxu0
    %v2509 = vadd.f32 0.0, %v2508
    %2510 = vdwg.mxu0
    %v2511 = vld [vmem:[%s660] sm:$0xff]
    %v2512 = vadd.f32 %v2511, %v2507
    %v2513 = vld [vmem:[%s655 + $0x8] sm:$0xff]
    %v2514 = vadd.f32 %v2513, %v2509
    %v2515 = vxor.u32 %v2512, 2147483648
    %v2516 = vmul.f32 %v2515, 1.442695
    %v2517 = vpow.pop %v2516
    %v2518 = vadd.f32 %v2517, 1.0
    %v2519 = vrcp.pop %v2518
    %v2520 = vmul.f32 1.0, %v2519
    %v2521 = vtanh.pop %v2512
    %v2522 = vxor.u32 %v2514, 2147483648
    %v2523 = vmul.f32 %v2522, 1.442695
    %v2524 = vpow.pop %v2523
    %v2525 = vadd.f32 %v2524, 1.0
    %v2526 = vrcp.pop %v2525
    %v2527 = vmul.f32 1.0, %v2526
    %v2528 = vtanh.pop %v2514
    %v2529 = vmul.f32 %v2520, %v2399
    %2531 = vrot.lane.b32.xlu0 %v2521, 64
    %v2532 = vpop.permute.xlu0 %2531
    %v2534 = vmul.f32 %v2520, %v2532
    %2536 = vrot.lane.b32.xlu0 %v2534, 32
    %v2537 = vpop.permute.xlu0 %2536
    %v2539 = vadd.f32 %v2529, %v2537
    %v2540 = vmul.f32 %v2527, %v2410
    %2542 = vrot.lane.b32.xlu0 %v2528, 64
    %v2543 = vpop.permute.xlu0 %2542
    %v2545 = vmul.f32 %v2527, %v2543
    %2547 = vrot.lane.b32.xlu0 %v2545, 32
    %v2548 = vpop.permute.xlu0 %2547
    %v2550 = vadd.f32 %v2540, %v2548
    %v2551 = vtanh.pop %v2539
    %2553 = vrot.lane.b32.xlu0 %v2551, 64
    %v2554 = vpop.permute.xlu0 %2553
    %v2556 = vmul.f32 %v2520, %v2554
    %v2557 = vtanh.pop %v2550
    %2559 = vrot.lane.b32.xlu0 %v2557, 64
    %v2560 = vpop.permute.xlu0 %2559
    %v2562 = vmul.f32 %v2527, %v2560
    %2564 = vrot.lane.b32.xlu0 %v2556, 32
    %v2565 = vpop.permute.xlu0 %2564
    %2567 = vst.msk [vmem:[%s1147] sm:$0xff] %vm271, %v2565
    %2569 = vrot.lane.b32.xlu0 %v2562, 32
    %v2570 = vpop.permute.xlu0 %2569
    %2572 = vst.msk [vmem:[%s1153] sm:$0xff] %vm271, %v2570
    %2573 = vrot.lane.b32.xlu0 %v2562, 64
    %v2574 = vpop.permute.xlu0 %2573
    %v2576 = vsel %vm271, %v2565, %v2574
    %v2578 = vsel %vm94, %v2576, 0
    %2580 = vmatprep.subr.mxu0 0.0
    %2581 = vmatpush1.msra.mxu0 0.0
    %2582 = vmatprep.subr.mxu0 0.0
    %2583 = vmatpush1.msra.mxu0 0.0
    %2584 = vmatprep.subr.mxu0 0.0
    %2585 = vmatpush1.msra.mxu0 0.0
    %2586 = vmatprep.subr.mxu0 0.0
    %2587 = vmatpush1.msra.mxu0 0.0
    %2588 = vmatprep.subr.mxu0 0.0
    %2589 = vmatpush1.msra.mxu0 0.0
    %2590 = vmatprep.subr.mxu0 0.0
    %2591 = vmatpush1.msra.mxu0 0.0
    %2592 = vmatprep.subr.mxu0 0.0
    %2593 = vmatpush1.msra.mxu0 0.0
    %2594 = vmatprep.subr.mxu0 0.0
    %2595 = vmatpush1.msra.mxu0 0.0
    %2596 = vmatprep.subr.mxu0 %v1715
    %2597 = vmatpush1.msra.mxu0 %v1714
    %2598 = vmatprep.subr.mxu0 %v1713
    %2599 = vmatpush1.msra.mxu0 %v1712
    %2600 = vmatprep.subr.mxu0 %v1711
    %2601 = vmatpush1.msra.mxu0 %v1710
    %2602 = vmatprep.subr.mxu0 %v1709
    %2603 = vmatpush1.msra.mxu0 %v1708
    %2604 = vmatprep.subr.mxu0 %v1707
    %2605 = vmatpush1.msra.mxu0 %v1706
    %2606 = vmatprep.subr.mxu0 %v1705
    %2607 = vmatpush1.msra.mxu0 %v1704
    %2608 = vmatprep.subr.mxu0 %v1703
    %2609 = vmatpush1.msra.mxu0 %v1702
    %2610 = vmatprep.subr.mxu0 %v1701
    %2611 = vmatpush1.msra.mxu0 %v1700
    %2612 = vmatprep.subr.mxu0 0.0
    %2613 = vmatpush2.msra.mxu0 0.0
    %2614 = vmatprep.subr.mxu0 0.0
    %2615 = vmatpush2.msra.mxu0 0.0
    %2616 = vmatprep.subr.mxu0 0.0
    %2617 = vmatpush2.msra.mxu0 0.0
    %2618 = vmatprep.subr.mxu0 0.0
    %2619 = vmatpush2.msra.mxu0 0.0
    %2620 = vmatprep.subr.mxu0 0.0
    %2621 = vmatpush2.msra.mxu0 0.0
    %2622 = vmatprep.subr.mxu0 0.0
    %2623 = vmatpush2.msra.mxu0 0.0
    %2624 = vmatprep.subr.mxu0 0.0
    %2625 = vmatpush2.msra.mxu0 0.0
    %2626 = vmatprep.subr.mxu0 0.0
    %2627 = vmatpush2.msra.mxu0 0.0
    %2628 = vmatprep.subr.mxu0 0.0
    %2629 = vmatpush2.msra.mxu0 0.0
    %2630 = vmatprep.subr.mxu0 0.0
    %2631 = vmatpush2.msra.mxu0 0.0
    %2632 = vmatprep.subr.mxu0 0.0
    %2633 = vmatpush2.msra.mxu0 0.0
    %2634 = vmatprep.subr.mxu0 0.0
    %2635 = vmatpush2.msra.mxu0 0.0
    %2636 = vmatprep.subr.mxu0 0.0
    %2637 = vmatpush2.msra.mxu0 0.0
    %2638 = vmatprep.subr.mxu0 0.0
    %2639 = vmatpush2.msra.mxu0 0.0
    %2640 = vmatprep.subr.mxu0 0.0
    %2641 = vmatpush2.msra.mxu0 0.0
    %2642 = vmatprep.subr.mxu0 0.0
    %2643 = vmatpush2.msra.mxu0 0.0
    %2644 = vmatprep.mubr.f32.mxu0 0.0
    %2645 = vmatmul.mubr.f32.gmra.mxu0 %v2578
    %v2646 = vpop.f32.mrf.mxu0
    %v2647 = vadd.f32 0.0, %v2646
    %v2648 = vpop.f32.mrf.mxu0
    %v2649 = vadd.f32 0.0, %v2648
    %2650 = vdwg.mxu0
    %v2651 = vld [vmem:[%s512] sm:$0xff]
    %v2652 = vadd.f32 %v2651, %v2647
    %v2653 = vld [vmem:[%s507 + $0x8] sm:$0xff]
    %v2654 = vadd.f32 %v2653, %v2649
    %v2655 = vxor.u32 %v2652, 2147483648
    %v2656 = vmul.f32 %v2655, 1.442695
    %v2657 = vpow.pop %v2656
    %v2658 = vadd.f32 %v2657, 1.0
    %v2659 = vrcp.pop %v2658
    %v2660 = vmul.f32 1.0, %v2659
    %v2661 = vtanh.pop %v2652
    %v2662 = vxor.u32 %v2654, 2147483648
    %v2663 = vmul.f32 %v2662, 1.442695
    %v2664 = vpow.pop %v2663
    %v2665 = vadd.f32 %v2664, 1.0
    %v2666 = vrcp.pop %v2665
    %v2667 = vmul.f32 1.0, %v2666
    %v2668 = vtanh.pop %v2654
    %v2669 = vmul.f32 %v2660, %v2539
    %2671 = vrot.lane.b32.xlu0 %v2661, 64
    %v2672 = vpop.permute.xlu0 %2671
    %v2674 = vmul.f32 %v2660, %v2672
    %2676 = vrot.lane.b32.xlu0 %v2674, 32
    %v2677 = vpop.permute.xlu0 %2676
    %v2679 = vadd.f32 %v2669, %v2677
    %v2680 = vmul.f32 %v2667, %v2550
    %2682 = vrot.lane.b32.xlu0 %v2668, 64
    %v2683 = vpop.permute.xlu0 %2682
    %v2685 = vmul.f32 %v2667, %v2683
    %2687 = vrot.lane.b32.xlu0 %v2685, 32
    %v2688 = vpop.permute.xlu0 %2687
    %v2690 = vadd.f32 %v2680, %v2688
    %v2691 = vtanh.pop %v2679
    %2693 = vrot.lane.b32.xlu0 %v2691, 64
    %v2694 = vpop.permute.xlu0 %2693
    %v2696 = vmul.f32 %v2660, %v2694
    %v2697 = vtanh.pop %v2690
    %2699 = vrot.lane.b32.xlu0 %v2697, 64
    %v2700 = vpop.permute.xlu0 %2699
    %v2702 = vmul.f32 %v2667, %v2700
    %2704 = vrot.lane.b32.xlu0 %v2696, 32
    %v2705 = vpop.permute.xlu0 %2704
    %2707 = vst.msk [vmem:[%s1289] sm:$0xff] %vm271, %v2705
    %2709 = vrot.lane.b32.xlu0 %v2702, 32
    %v2710 = vpop.permute.xlu0 %2709
    %2712 = vst.msk [vmem:[%s1295] sm:$0xff] %vm271, %v2710
    %2713 = vrot.lane.b32.xlu0 %v2702, 64
    %v2714 = vpop.permute.xlu0 %2713
    %v2716 = vsel %vm271, %v2705, %v2714
    %v2718 = vsel %vm94, %v2716, 0
    %2720 = vmatprep.subr.mxu0 0.0
    %2721 = vmatpush1.msra.mxu0 0.0
    %2722 = vmatprep.subr.mxu0 0.0
    %2723 = vmatpush1.msra.mxu0 0.0
    %2724 = vmatprep.subr.mxu0 0.0
    %2725 = vmatpush1.msra.mxu0 0.0
    %2726 = vmatprep.subr.mxu0 0.0
    %2727 = vmatpush1.msra.mxu0 0.0
    %2728 = vmatprep.subr.mxu0 0.0
    %2729 = vmatpush1.msra.mxu0 0.0
    %2730 = vmatprep.subr.mxu0 0.0
    %2731 = vmatpush1.msra.mxu0 0.0
    %2732 = vmatprep.subr.mxu0 0.0
    %2733 = vmatpush1.msra.mxu0 0.0
    %2734 = vmatprep.subr.mxu0 0.0
    %2735 = vmatpush1.msra.mxu0 0.0
    %2736 = vmatprep.subr.mxu0 %v1715
    %2737 = vmatpush1.msra.mxu0 %v1714
    %2738 = vmatprep.subr.mxu0 %v1713
    %2739 = vmatpush1.msra.mxu0 %v1712
    %2740 = vmatprep.subr.mxu0 %v1711
    %2741 = vmatpush1.msra.mxu0 %v1710
    %2742 = vmatprep.subr.mxu0 %v1709
    %2743 = vmatpush1.msra.mxu0 %v1708
    %2744 = vmatprep.subr.mxu0 %v1707
    %2745 = vmatpush1.msra.mxu0 %v1706
    %2746 = vmatprep.subr.mxu0 %v1705
    %2747 = vmatpush1.msra.mxu0 %v1704
    %2748 = vmatprep.subr.mxu0 %v1703
    %2749 = vmatpush1.msra.mxu0 %v1702
    %2750 = vmatprep.subr.mxu0 %v1701
    %2751 = vmatpush1.msra.mxu0 %v1700
    %2752 = vmatprep.subr.mxu0 0.0
    %2753 = vmatpush2.msra.mxu0 0.0
    %2754 = vmatprep.subr.mxu0 0.0
    %2755 = vmatpush2.msra.mxu0 0.0
    %2756 = vmatprep.subr.mxu0 0.0
    %2757 = vmatpush2.msra.mxu0 0.0
    %2758 = vmatprep.subr.mxu0 0.0
    %2759 = vmatpush2.msra.mxu0 0.0
    %2760 = vmatprep.subr.mxu0 0.0
    %2761 = vmatpush2.msra.mxu0 0.0
    %2762 = vmatprep.subr.mxu0 0.0
    %2763 = vmatpush2.msra.mxu0 0.0
    %2764 = vmatprep.subr.mxu0 0.0
    %2765 = vmatpush2.msra.mxu0 0.0
    %2766 = vmatprep.subr.mxu0 0.0
    %2767 = vmatpush2.msra.mxu0 0.0
    %2768 = vmatprep.subr.mxu0 0.0
    %2769 = vmatpush2.msra.mxu0 0.0
    %2770 = vmatprep.subr.mxu0 0.0
    %2771 = vmatpush2.msra.mxu0 0.0
    %2772 = vmatprep.subr.mxu0 0.0
    %2773 = vmatpush2.msra.mxu0 0.0
    %2774 = vmatprep.subr.mxu0 0.0
    %2775 = vmatpush2.msra.mxu0 0.0
    %2776 = vmatprep.subr.mxu0 0.0
    %2777 = vmatpush2.msra.mxu0 0.0
    %2778 = vmatprep.subr.mxu0 0.0
    %2779 = vmatpush2.msra.mxu0 0.0
    %2780 = vmatprep.subr.mxu0 0.0
    %2781 = vmatpush2.msra.mxu0 0.0
    %2782 = vmatprep.subr.mxu0 0.0
    %2783 = vmatpush2.msra.mxu0 0.0
    %2784 = vmatprep.mubr.f32.mxu0 0.0
    %2785 = vmatmul.mubr.f32.gmra.mxu0 %v2718
    %v2786 = vpop.f32.mrf.mxu0
    %v2787 = vadd.f32 0.0, %v2786
    %v2788 = vpop.f32.mrf.mxu0
    %v2789 = vadd.f32 0.0, %v2788
    %2790 = vdwg.mxu0
    %v2791 = vld [vmem:[%s357] sm:$0xff]
    %v2792 = vadd.f32 %v2791, %v2787
    %v2793 = vld [vmem:[%s352 + $0x8] sm:$0xff]
    %v2794 = vadd.f32 %v2793, %v2789
    %v2795 = vxor.u32 %v2792, 2147483648
    %v2796 = vmul.f32 %v2795, 1.442695
    %v2797 = vpow.pop %v2796
    %v2798 = vadd.f32 %v2797, 1.0
    %v2799 = vrcp.pop %v2798
    %v2800 = vmul.f32 1.0, %v2799
    %v2801 = vtanh.pop %v2792
    %v2802 = vxor.u32 %v2794, 2147483648
    %v2803 = vmul.f32 %v2802, 1.442695
    %v2804 = vpow.pop %v2803
    %v2805 = vadd.f32 %v2804, 1.0
    %v2806 = vrcp.pop %v2805
    %v2807 = vmul.f32 1.0, %v2806
    %v2808 = vtanh.pop %v2794
    %v2809 = vmul.f32 %v2800, %v2679
    %2811 = vrot.lane.b32.xlu0 %v2801, 64
    %v2812 = vpop.permute.xlu0 %2811
    %v2814 = vmul.f32 %v2800, %v2812
    %2816 = vrot.lane.b32.xlu0 %v2814, 32
    %v2817 = vpop.permute.xlu0 %2816
    %v2819 = vadd.f32 %v2809, %v2817
    %v2820 = vmul.f32 %v2807, %v2690
    %2822 = vrot.lane.b32.xlu0 %v2808, 64
    %v2823 = vpop.permute.xlu0 %2822
    %v2825 = vmul.f32 %v2807, %v2823
    %2827 = vrot.lane.b32.xlu0 %v2825, 32
    %v2828 = vpop.permute.xlu0 %2827
    %v2830 = vadd.f32 %v2820, %v2828
    %v2831 = vtanh.pop %v2819
    %2833 = vrot.lane.b32.xlu0 %v2831, 64
    %v2834 = vpop.permute.xlu0 %2833
    %v2836 = vmul.f32 %v2800, %v2834
    %v2837 = vtanh.pop %v2830
    %2839 = vrot.lane.b32.xlu0 %v2837, 64
    %v2840 = vpop.permute.xlu0 %2839
    %v2842 = vmul.f32 %v2807, %v2840
    %2844 = vrot.lane.b32.xlu0 %v2836, 32
    %v2845 = vpop.permute.xlu0 %2844
    %2847 = vst.msk [vmem:[%s1431] sm:$0xff] %vm271, %v2845
    %2849 = vrot.lane.b32.xlu0 %v2842, 32
    %v2850 = vpop.permute.xlu0 %2849
    %2852 = vst.msk [vmem:[#allocation4] sm:$0xff] %vm271, %v2850
    %2853 = vrot.lane.b32.xlu0 %v2842, 64
    %v2854 = vpop.permute.xlu0 %2853
    %v2856 = vsel %vm271, %v2845, %v2854
    %s2857 = scalar_lea.vmem %s13, 16
    %2858 = vst.msk [vmem:[%s2857] sm:$0xff] %vm271, %v2856
    %2860 = vrot.lane.b32.xlu0 %v2856, 96
    %v2861 = vpop.permute.xlu0 %2860
    %s2863 = scalar_lea.vmem %s13, 24
    %2864 = vst.msk [vmem:[%s2863] sm:$0xff] %vm271, %v2861
    %2866 = vrot.lane.b32.xlu0 %v2819, 96
    %v2867 = vpop.permute.xlu0 %2866
    %s2869 = scalar_lea.vmem %s14, 16
    %2870 = vst.msk [vmem:[%s2869] sm:$0xff] %vm271, %v2867
    %2872 = vrot.lane.b32.xlu0 %v2830, 96
    %v2873 = vpop.permute.xlu0 %2872
    %s2875 = scalar_lea.vmem %s14, 24
    %2876 = vst.msk [vmem:[%s2875] sm:$0xff] %vm271, %v2873
    %v2877 = vld [vmem:[#allocation3] sm:$0xff]
    %v2878 = vld [vmem:[#allocation3 + $0x8] sm:$0xff]
    %v2879 = vld [vmem:[#allocation3 + $0x10] sm:$0xff]
    %v2880 = vld [vmem:[#allocation3 + $0x18] sm:$0xff]
    %v2881 = vld [vmem:[#allocation3 + $0x20] sm:$0xff]
    %v2882 = vld [vmem:[#allocation3 + $0x28] sm:$0xff]
    %v2883 = vld [vmem:[#allocation3 + $0x30] sm:$0xff]
    %v2884 = vld [vmem:[#allocation3 + $0x38] sm:$0xff]
    %v2885 = vld [vmem:[#allocation4] sm:$0xff]
    %v2886 = vld [vmem:[#allocation4 + $0x8] sm:$0xff]
    %v2887 = vld [vmem:[#allocation4 + $0x10] sm:$0xff]
    %v2888 = vld [vmem:[#allocation4 + $0x18] sm:$0xff]
    %v2889 = vld [vmem:[#allocation4 + $0x20] sm:$0xff]
    %v2890 = vld [vmem:[#allocation4 + $0x28] sm:$0xff]
    %v2891 = vld [vmem:[#allocation4 + $0x30] sm:$0xff]
    %v2892 = vld [vmem:[#allocation4 + $0x38] sm:$0xff]
    %2901 = vrot.lane.b32.xlu0 %v2885, 32
    %v2902 = vpop.permute.xlu0 %2901
    %2903 = vrot.lane.b32.xlu0 %v2886, 32
    %v2904 = vpop.permute.xlu0 %2903
    %2905 = vrot.lane.b32.xlu0 %v2887, 32
    %v2906 = vpop.permute.xlu0 %2905
    %2907 = vrot.lane.b32.xlu0 %v2888, 32
    %v2908 = vpop.permute.xlu0 %2907
    %2909 = vrot.lane.b32.xlu0 %v2889, 32
    %v2910 = vpop.permute.xlu0 %2909
    %2911 = vrot.lane.b32.xlu0 %v2890, 32
    %v2912 = vpop.permute.xlu0 %2911
    %2913 = vrot.lane.b32.xlu0 %v2891, 32
    %v2914 = vpop.permute.xlu0 %2913
    %2915 = vrot.lane.b32.xlu0 %v2892, 32
    %v2916 = vpop.permute.xlu0 %2915
    %v2925 = vsel %vm271, %v2877, %v2902
    %v2926 = vsel %vm271, %v2878, %v2904
    %v2927 = vsel %vm271, %v2879, %v2906
    %v2928 = vsel %vm271, %v2880, %v2908
    %v2929 = vsel %vm271, %v2881, %v2910
    %v2930 = vsel %vm271, %v2882, %v2912
    %v2931 = vsel %vm271, %v2883, %v2914
    %v2932 = vsel %vm271, %v2884, %v2916
    %v2933 = vld [vmem:[%s6] sm:$0xff]
    %v2934 = vld [vmem:[%s6 + $0x8] sm:$0xff]
    %v2935 = vld [vmem:[%s6 + $0x10] sm:$0xff]
    %v2936 = vld [vmem:[%s6 + $0x18] sm:$0xff]
    %v2937 = vld [vmem:[%s6 + $0x20] sm:$0xff]
    %v2938 = vld [vmem:[%s6 + $0x28] sm:$0xff]
    %v2939 = vld [vmem:[%s6 + $0x30] sm:$0xff]
    %v2940 = vld [vmem:[%s6 + $0x38] sm:$0xff]
    %v2941 = vld [vmem:[%s7] sm:$0x1]
    %v2943 = vlaneseq
    %v2944 = vshrl.u32 %v2943, 7
    %v2945 = vsub.s32 0, %v2944
    %v2946 = vrot.slane %v2941, %v2945
    %v2949 = vsel %vm94, %v2925, 0
    %v2952 = vsel %vm94, %v2926, 0
    %v2955 = vsel %vm94, %v2927, 0
    %v2958 = vsel %vm94, %v2928, 0
    %v2961 = vsel %vm94, %v2929, 0
    %v2964 = vsel %vm94, %v2930, 0
    %v2967 = vsel %vm94, %v2931, 0
    %v2970 = vsel %vm94, %v2932, 0
    %2972 = vmatprep.subr.mxu0 0.0
    %2973 = vmatpush1.msra.mxu0 0.0
    %2974 = vmatprep.subr.mxu0 0.0
    %2975 = vmatpush1.msra.mxu0 0.0
    %2976 = vmatprep.subr.mxu0 0.0
    %2977 = vmatpush1.msra.mxu0 0.0
    %2978 = vmatprep.subr.mxu0 0.0
    %2979 = vmatpush1.msra.mxu0 0.0
    %2980 = vmatprep.subr.mxu0 0.0
    %2981 = vmatpush1.msra.mxu0 0.0
    %2982 = vmatprep.subr.mxu0 0.0
    %2983 = vmatpush1.msra.mxu0 0.0
    %2984 = vmatprep.subr.mxu0 0.0
    %2985 = vmatpush1.msra.mxu0 0.0
    %2986 = vmatprep.subr.mxu0 0.0
    %2987 = vmatpush1.msra.mxu0 0.0
    %2988 = vmatprep.subr.mxu0 0.0
    %2989 = vmatpush1.msra.mxu0 %v2940
    %2990 = vmatprep.subr.mxu0 0.0
    %2991 = vmatpush1.msra.mxu0 %v2939
    %2992 = vmatprep.subr.mxu0 0.0
    %2993 = vmatpush1.msra.mxu0 %v2938
    %2994 = vmatprep.subr.mxu0 0.0
    %2995 = vmatpush1.msra.mxu0 %v2937
    %2996 = vmatprep.subr.mxu0 0.0
    %2997 = vmatpush1.msra.mxu0 %v2936
    %2998 = vmatprep.subr.mxu0 0.0
    %2999 = vmatpush1.msra.mxu0 %v2935
    %3000 = vmatprep.subr.mxu0 0.0
    %3001 = vmatpush1.msra.mxu0 %v2934
    %3002 = vmatprep.subr.mxu0 0.0
    %3003 = vmatpush1.msra.mxu0 %v2933
    %3004 = vmatprep.subr.mxu0 0.0
    %3005 = vmatpush2.msra.mxu0 0.0
    %3006 = vmatprep.subr.mxu0 0.0
    %3007 = vmatpush2.msra.mxu0 0.0
    %3008 = vmatprep.subr.mxu0 0.0
    %3009 = vmatpush2.msra.mxu0 0.0
    %3010 = vmatprep.subr.mxu0 0.0
    %3011 = vmatpush2.msra.mxu0 0.0
    %3012 = vmatprep.subr.mxu0 0.0
    %3013 = vmatpush2.msra.mxu0 0.0
    %3014 = vmatprep.subr.mxu0 0.0
    %3015 = vmatpush2.msra.mxu0 0.0
    %3016 = vmatprep.subr.mxu0 0.0
    %3017 = vmatpush2.msra.mxu0 0.0
    %3018 = vmatprep.subr.mxu0 0.0
    %3019 = vmatpush2.msra.mxu0 0.0
    %3020 = vmatprep.subr.mxu0 0.0
    %3021 = vmatpush2.msra.mxu0 0.0
    %3022 = vmatprep.subr.mxu0 0.0
    %3023 = vmatpush2.msra.mxu0 0.0
    %3024 = vmatprep.subr.mxu0 0.0
    %3025 = vmatpush2.msra.mxu0 0.0
    %3026 = vmatprep.subr.mxu0 0.0
    %3027 = vmatpush2.msra.mxu0 0.0
    %3028 = vmatprep.subr.mxu0 0.0
    %3029 = vmatpush2.msra.mxu0 0.0
    %3030 = vmatprep.subr.mxu0 0.0
    %3031 = vmatpush2.msra.mxu0 0.0
    %3032 = vmatprep.subr.mxu0 0.0
    %3033 = vmatpush2.msra.mxu0 0.0
    %3034 = vmatprep.subr.mxu0 0.0
    %3035 = vmatpush2.msra.mxu0 0.0
    %3036 = vmatprep.mubr.f32.mxu0 0.0
    %3037 = vmatmul.mubr.f32.gmra.mxu0 %v2949
    %v3038 = vpop.f32.mrf.mxu0
    %v3039 = vadd.f32 %v2946, %v3038
    %v3040 = vpop.f32.mrf.mxu0
    %3041 = vmatprep.mubr.f32.mxu0 0.0
    %3042 = vmatmul.mubr.f32.gmra.mxu0 %v2952
    %v3043 = vpop.f32.mrf.mxu0
    %v3044 = vadd.f32 %v2946, %v3043
    %v3045 = vpop.f32.mrf.mxu0
    %3046 = vmatprep.mubr.f32.mxu0 0.0
    %3047 = vmatmul.mubr.f32.gmra.mxu0 %v2955
    %v3048 = vpop.f32.mrf.mxu0
    %v3049 = vadd.f32 %v2946, %v3048
    %v3050 = vpop.f32.mrf.mxu0
    %3051 = vmatprep.mubr.f32.mxu0 0.0
    %3052 = vmatmul.mubr.f32.gmra.mxu0 %v2958
    %v3053 = vpop.f32.mrf.mxu0
    %v3054 = vadd.f32 %v2946, %v3053
    %v3055 = vpop.f32.mrf.mxu0
    %3056 = vmatprep.mubr.f32.mxu0 0.0
    %3057 = vmatmul.mubr.f32.gmra.mxu0 %v2961
    %v3058 = vpop.f32.mrf.mxu0
    %v3059 = vadd.f32 %v2946, %v3058
    %v3060 = vpop.f32.mrf.mxu0
    %3061 = vmatprep.mubr.f32.mxu0 0.0
    %3062 = vmatmul.mubr.f32.gmra.mxu0 %v2964
    %v3063 = vpop.f32.mrf.mxu0
    %v3064 = vadd.f32 %v2946, %v3063
    %v3065 = vpop.f32.mrf.mxu0
    %3066 = vmatprep.mubr.f32.mxu0 0.0
    %3067 = vmatmul.mubr.f32.gmra.mxu0 %v2967
    %v3068 = vpop.f32.mrf.mxu0
    %v3069 = vadd.f32 %v2946, %v3068
    %v3070 = vpop.f32.mrf.mxu0
    %3071 = vmatprep.mubr.f32.mxu0 0.0
    %3072 = vmatmul.mubr.f32.gmra.mxu0 %v2970
    %v3073 = vpop.f32.mrf.mxu0
    %v3074 = vadd.f32 %v2946, %v3073
    %v3075 = vpop.f32.mrf.mxu0
    %3076 = vdwg.mxu0
    %v3077 = vmax.f32 %v3039, 0.0
    %v3078 = vmax.f32 %v3044, 0.0
    %v3079 = vmax.f32 %v3049, 0.0
    %v3080 = vmax.f32 %v3054, 0.0
    %v3081 = vmax.f32 %v3059, 0.0
    %v3082 = vmax.f32 %v3064, 0.0
    %v3083 = vmax.f32 %v3069, 0.0
    %v3084 = vmax.f32 %v3074, 0.0
    %v3085 = vld [vmem:[%s8] sm:$0xff]
    %v3086 = vld [vmem:[%s8 + $0x8] sm:$0xff]
    %v3087 = vld [vmem:[%s8 + $0x10] sm:$0xff]
    %v3088 = vld [vmem:[%s8 + $0x18] sm:$0xff]
    %v3089 = vld [vmem:[%s8 + $0x20] sm:$0xff]
    %v3090 = vld [vmem:[%s8 + $0x28] sm:$0xff]
    %v3091 = vld [vmem:[%s8 + $0x30] sm:$0xff]
    %v3092 = vld [vmem:[%s8 + $0x38] sm:$0xff]
    %v3093 = vld [vmem:[%s9] sm:$0x1]
    %v3095 = vlaneseq
    %v3096 = vshrl.u32 %v3095, 7
    %v3097 = vsub.s32 0, %v3096
    %v3098 = vrot.slane %v3093, %v3097
    %v3101 = vsel %vm94, %v3077, 0
    %v3104 = vsel %vm94, %v3078, 0
    %v3107 = vsel %vm94, %v3079, 0
    %v3110 = vsel %vm94, %v3080, 0
    %v3113 = vsel %vm94, %v3081, 0
    %v3116 = vsel %vm94, %v3082, 0
    %v3119 = vsel %vm94, %v3083, 0
    %v3122 = vsel %vm94, %v3084, 0
    %3124 = vmatprep.subr.mxu0 0.0
    %3125 = vmatpush1.msra.mxu0 0.0
    %3126 = vmatprep.subr.mxu0 0.0
    %3127 = vmatpush1.msra.mxu0 0.0
    %3128 = vmatprep.subr.mxu0 0.0
    %3129 = vmatpush1.msra.mxu0 0.0
    %3130 = vmatprep.subr.mxu0 0.0
    %3131 = vmatpush1.msra.mxu0 0.0
    %3132 = vmatprep.subr.mxu0 0.0
    %3133 = vmatpush1.msra.mxu0 0.0
    %3134 = vmatprep.subr.mxu0 0.0
    %3135 = vmatpush1.msra.mxu0 0.0
    %3136 = vmatprep.subr.mxu0 0.0
    %3137 = vmatpush1.msra.mxu0 0.0
    %3138 = vmatprep.subr.mxu0 0.0
    %3139 = vmatpush1.msra.mxu0 0.0
    %3140 = vmatprep.subr.mxu0 0.0
    %3141 = vmatpush1.msra.mxu0 %v3092
    %3142 = vmatprep.subr.mxu0 0.0
    %3143 = vmatpush1.msra.mxu0 %v3091
    %3144 = vmatprep.subr.mxu0 0.0
    %3145 = vmatpush1.msra.mxu0 %v3090
    %3146 = vmatprep.subr.mxu0 0.0
    %3147 = vmatpush1.msra.mxu0 %v3089
    %3148 = vmatprep.subr.mxu0 0.0
    %3149 = vmatpush1.msra.mxu0 %v3088
    %3150 = vmatprep.subr.mxu0 0.0
    %3151 = vmatpush1.msra.mxu0 %v3087
    %3152 = vmatprep.subr.mxu0 0.0
    %3153 = vmatpush1.msra.mxu0 %v3086
    %3154 = vmatprep.subr.mxu0 0.0
    %3155 = vmatpush1.msra.mxu0 %v3085
    %3156 = vmatprep.subr.mxu0 0.0
    %3157 = vmatpush2.msra.mxu0 0.0
    %3158 = vmatprep.subr.mxu0 0.0
    %3159 = vmatpush2.msra.mxu0 0.0
    %3160 = vmatprep.subr.mxu0 0.0
    %3161 = vmatpush2.msra.mxu0 0.0
    %3162 = vmatprep.subr.mxu0 0.0
    %3163 = vmatpush2.msra.mxu0 0.0
    %3164 = vmatprep.subr.mxu0 0.0
    %3165 = vmatpush2.msra.mxu0 0.0
    %3166 = vmatprep.subr.mxu0 0.0
    %3167 = vmatpush2.msra.mxu0 0.0
    %3168 = vmatprep.subr.mxu0 0.0
    %3169 = vmatpush2.msra.mxu0 0.0
    %3170 = vmatprep.subr.mxu0 0.0
    %3171 = vmatpush2.msra.mxu0 0.0
    %3172 = vmatprep.subr.mxu0 0.0
    %3173 = vmatpush2.msra.mxu0 0.0
    %3174 = vmatprep.subr.mxu0 0.0
    %3175 = vmatpush2.msra.mxu0 0.0
    %3176 = vmatprep.subr.mxu0 0.0
    %3177 = vmatpush2.msra.mxu0 0.0
    %3178 = vmatprep.subr.mxu0 0.0
    %3179 = vmatpush2.msra.mxu0 0.0
    %3180 = vmatprep.subr.mxu0 0.0
    %3181 = vmatpush2.msra.mxu0 0.0
    %3182 = vmatprep.subr.mxu0 0.0
    %3183 = vmatpush2.msra.mxu0 0.0
    %3184 = vmatprep.subr.mxu0 0.0
    %3185 = vmatpush2.msra.mxu0 0.0
    %3186 = vmatprep.subr.mxu0 0.0
    %3187 = vmatpush2.msra.mxu0 0.0
    %3188 = vmatprep.mubr.f32.mxu0 0.0
    %3189 = vmatmul.mubr.f32.gmra.mxu0 %v3101
    %v3190 = vpop.f32.mrf.mxu0
    %v3191 = vadd.f32 %v3098, %v3190
    %v3192 = vpop.f32.mrf.mxu0
    %3193 = vmatprep.mubr.f32.mxu0 0.0
    %3194 = vmatmul.mubr.f32.gmra.mxu0 %v3104
    %v3195 = vpop.f32.mrf.mxu0
    %v3196 = vadd.f32 %v3098, %v3195
    %v3197 = vpop.f32.mrf.mxu0
    %3198 = vmatprep.mubr.f32.mxu0 0.0
    %3199 = vmatmul.mubr.f32.gmra.mxu0 %v3107
    %v3200 = vpop.f32.mrf.mxu0
    %v3201 = vadd.f32 %v3098, %v3200
    %v3202 = vpop.f32.mrf.mxu0
    %3203 = vmatprep.mubr.f32.mxu0 0.0
    %3204 = vmatmul.mubr.f32.gmra.mxu0 %v3110
    %v3205 = vpop.f32.mrf.mxu0
    %v3206 = vadd.f32 %v3098, %v3205
    %v3207 = vpop.f32.mrf.mxu0
    %3208 = vmatprep.mubr.f32.mxu0 0.0
    %3209 = vmatmul.mubr.f32.gmra.mxu0 %v3113
    %v3210 = vpop.f32.mrf.mxu0
    %v3211 = vadd.f32 %v3098, %v3210
    %v3212 = vpop.f32.mrf.mxu0
    %3213 = vmatprep.mubr.f32.mxu0 0.0
    %3214 = vmatmul.mubr.f32.gmra.mxu0 %v3116
    %v3215 = vpop.f32.mrf.mxu0
    %v3216 = vadd.f32 %v3098, %v3215
    %v3217 = vpop.f32.mrf.mxu0
    %3218 = vmatprep.mubr.f32.mxu0 0.0
    %3219 = vmatmul.mubr.f32.gmra.mxu0 %v3119
    %v3220 = vpop.f32.mrf.mxu0
    %v3221 = vadd.f32 %v3098, %v3220
    %v3222 = vpop.f32.mrf.mxu0
    %3223 = vmatprep.mubr.f32.mxu0 0.0
    %3224 = vmatmul.mubr.f32.gmra.mxu0 %v3122
    %v3225 = vpop.f32.mrf.mxu0
    %v3226 = vadd.f32 %v3098, %v3225
    %v3227 = vpop.f32.mrf.mxu0
    %3228 = vdwg.mxu0
    %v3229 = vmax.f32 %v3191, 0.0
    %v3230 = vmax.f32 %v3196, 0.0
    %v3231 = vmax.f32 %v3201, 0.0
    %v3232 = vmax.f32 %v3206, 0.0
    %v3233 = vmax.f32 %v3211, 0.0
    %v3234 = vmax.f32 %v3216, 0.0
    %v3235 = vmax.f32 %v3221, 0.0
    %v3236 = vmax.f32 %v3226, 0.0
    %v3237 = vld [vmem:[%s10] sm:$0xff]
    %v3238 = vld [vmem:[%s10 + $0x8] sm:$0xff]
    %v3239 = vld [vmem:[%s10 + $0x10] sm:$0xff]
    %v3240 = vld [vmem:[%s10 + $0x18] sm:$0xff]
    %v3241 = vld [vmem:[%s11] sm:$0x1]
    %v3243 = vlaneseq
    %v3244 = vshrl.u32 %v3243, 7
    %v3245 = vsub.s32 0, %v3244
    %v3246 = vrot.slane %v3241, %v3245
    %v3249 = vsel %vm271, %v3229, 0
    %v3252 = vsel %vm271, %v3230, 0
    %v3255 = vsel %vm271, %v3231, 0
    %v3258 = vsel %vm271, %v3232, 0
    %v3261 = vsel %vm271, %v3233, 0
    %v3264 = vsel %vm271, %v3234, 0
    %v3267 = vsel %vm271, %v3235, 0
    %v3270 = vsel %vm271, %v3236, 0
    %3272 = vmatprep.subr.mxu0 0.0
    %3273 = vmatpush1.msra.mxu0 0.0
    %3274 = vmatprep.subr.mxu0 0.0
    %3275 = vmatpush1.msra.mxu0 0.0
    %3276 = vmatprep.subr.mxu0 0.0
    %3277 = vmatpush1.msra.mxu0 0.0
    %3278 = vmatprep.subr.mxu0 0.0
    %3279 = vmatpush1.msra.mxu0 0.0
    %3280 = vmatprep.subr.mxu0 0.0
    %3281 = vmatpush1.msra.mxu0 0.0
    %3282 = vmatprep.subr.mxu0 0.0
    %3283 = vmatpush1.msra.mxu0 0.0
    %3284 = vmatprep.subr.mxu0 0.0
    %3285 = vmatpush1.msra.mxu0 0.0
    %3286 = vmatprep.subr.mxu0 0.0
    %3287 = vmatpush1.msra.mxu0 0.0
    %3288 = vmatprep.subr.mxu0 0.0
    %3289 = vmatpush1.msra.mxu0 0.0
    %3290 = vmatprep.subr.mxu0 0.0
    %3291 = vmatpush1.msra.mxu0 0.0
    %3292 = vmatprep.subr.mxu0 0.0
    %3293 = vmatpush1.msra.mxu0 0.0
    %3294 = vmatprep.subr.mxu0 0.0
    %3295 = vmatpush1.msra.mxu0 0.0
    %3296 = vmatprep.subr.mxu0 0.0
    %3297 = vmatpush1.msra.mxu0 %v3240
    %3298 = vmatprep.subr.mxu0 0.0
    %3299 = vmatpush1.msra.mxu0 %v3239
    %3300 = vmatprep.subr.mxu0 0.0
    %3301 = vmatpush1.msra.mxu0 %v3238
    %3302 = vmatprep.subr.mxu0 0.0
    %3303 = vmatpush1.msra.mxu0 %v3237
    %3304 = vmatprep.subr.mxu0 0.0
    %3305 = vmatpush2.msra.mxu0 0.0
    %3306 = vmatprep.subr.mxu0 0.0
    %3307 = vmatpush2.msra.mxu0 0.0
    %3308 = vmatprep.subr.mxu0 0.0
    %3309 = vmatpush2.msra.mxu0 0.0
    %3310 = vmatprep.subr.mxu0 0.0
    %3311 = vmatpush2.msra.mxu0 0.0
    %3312 = vmatprep.subr.mxu0 0.0
    %3313 = vmatpush2.msra.mxu0 0.0
    %3314 = vmatprep.subr.mxu0 0.0
    %3315 = vmatpush2.msra.mxu0 0.0
    %3316 = vmatprep.subr.mxu0 0.0
    %3317 = vmatpush2.msra.mxu0 0.0
    %3318 = vmatprep.subr.mxu0 0.0
    %3319 = vmatpush2.msra.mxu0 0.0
    %3320 = vmatprep.subr.mxu0 0.0
    %3321 = vmatpush2.msra.mxu0 0.0
    %3322 = vmatprep.subr.mxu0 0.0
    %3323 = vmatpush2.msra.mxu0 0.0
    %3324 = vmatprep.subr.mxu0 0.0
    %3325 = vmatpush2.msra.mxu0 0.0
    %3326 = vmatprep.subr.mxu0 0.0
    %3327 = vmatpush2.msra.mxu0 0.0
    %3328 = vmatprep.subr.mxu0 0.0
    %3329 = vmatpush2.msra.mxu0 0.0
    %3330 = vmatprep.subr.mxu0 0.0
    %3331 = vmatpush2.msra.mxu0 0.0
    %3332 = vmatprep.subr.mxu0 0.0
    %3333 = vmatpush2.msra.mxu0 0.0
    %3334 = vmatprep.subr.mxu0 0.0
    %3335 = vmatpush2.msra.mxu0 0.0
    %3336 = vmatprep.mubr.f32.mxu0 0.0
    %3337 = vmatmul.mubr.f32.gmra.mxu0 %v3249
    %v3338 = vpop.f32.mrf.mxu0
    %v3339 = vadd.f32 %v3246, %v3338
    %v3340 = vpop.f32.mrf.mxu0
    %3341 = vmatprep.mubr.f32.mxu0 0.0
    %3342 = vmatmul.mubr.f32.gmra.mxu0 %v3252
    %v3343 = vpop.f32.mrf.mxu0
    %v3344 = vadd.f32 %v3246, %v3343
    %v3345 = vpop.f32.mrf.mxu0
    %3346 = vmatprep.mubr.f32.mxu0 0.0
    %3347 = vmatmul.mubr.f32.gmra.mxu0 %v3255
    %v3348 = vpop.f32.mrf.mxu0
    %v3349 = vadd.f32 %v3246, %v3348
    %v3350 = vpop.f32.mrf.mxu0
    %3351 = vmatprep.mubr.f32.mxu0 0.0
    %3352 = vmatmul.mubr.f32.gmra.mxu0 %v3258
    %v3353 = vpop.f32.mrf.mxu0
    %v3354 = vadd.f32 %v3246, %v3353
    %v3355 = vpop.f32.mrf.mxu0
    %3356 = vmatprep.mubr.f32.mxu0 0.0
    %3357 = vmatmul.mubr.f32.gmra.mxu0 %v3261
    %v3358 = vpop.f32.mrf.mxu0
    %v3359 = vadd.f32 %v3246, %v3358
    %v3360 = vpop.f32.mrf.mxu0
    %3361 = vmatprep.mubr.f32.mxu0 0.0
    %3362 = vmatmul.mubr.f32.gmra.mxu0 %v3264
    %v3363 = vpop.f32.mrf.mxu0
    %v3364 = vadd.f32 %v3246, %v3363
    %v3365 = vpop.f32.mrf.mxu0
    %3366 = vmatprep.mubr.f32.mxu0 0.0
    %3367 = vmatmul.mubr.f32.gmra.mxu0 %v3267
    %v3368 = vpop.f32.mrf.mxu0
    %v3369 = vadd.f32 %v3246, %v3368
    %v3370 = vpop.f32.mrf.mxu0
    %3371 = vmatprep.mubr.f32.mxu0 0.0
    %3372 = vmatmul.mubr.f32.gmra.mxu0 %v3270
    %v3373 = vpop.f32.mrf.mxu0
    %v3374 = vadd.f32 %v3246, %v3373
    %v3375 = vpop.f32.mrf.mxu0
    %3376 = vdwg.mxu0
    %3377 = vst [vmem:[%s12] sm:$0xff] %v3339
    %3378 = vst [vmem:[%s12 + $0x8] sm:$0xff] %v3344
    %3379 = vst [vmem:[%s12 + $0x10] sm:$0xff] %v3349
    %3380 = vst [vmem:[%s12 + $0x18] sm:$0xff] %v3354
    %3381 = vst [vmem:[%s12 + $0x20] sm:$0xff] %v3359
    %3382 = vst [vmem:[%s12 + $0x28] sm:$0xff] %v3364
    %3383 = vst [vmem:[%s12 + $0x30] sm:$0xff] %v3369
    %3384 = vst [vmem:[%s12 + $0x38] sm:$0xff] %v3374
    // Predicated region
    $region54: #{model_forward.1} parent=1 // pred_check
      _
    $region55: #{model_forward.1} parent=1 // pred_check_branch
      %3386 = sbr.rel (0) target = $region57
    $region56: #{model_forward.1} parent=1 // pred_region
      _
    $region57: #{model_forward.1} parent=1 // pred_fallthru
      _
    // Predicated region
    $region58: #{model_forward.1} parent=1 // pred_check
      _
    $region59: #{model_forward.1} parent=1 // pred_check_branch
      %3388 = sbr.rel (0) target = $region61
    $region60: #{model_forward.1} parent=1 // pred_region
      _
    $region61: #{model_forward.1} parent=1 // pred_fallthru
      _
    // Predicated region
    $region62: #{model_forward.1} parent=1 // pred_check
      _
    $region63: #{model_forward.1} parent=1 // pred_check_branch
      %3390 = sbr.rel (0) target = $region65
    $region64: #{model_forward.1} parent=1 // pred_region
      _
    $region65: #{model_forward.1} parent=1 // pred_fallthru
      _
    // Predicated region
    $region66: #{model_forward.1} parent=1 // pred_check
      _
    $region67: #{model_forward.1} parent=1 // pred_check_branch
      %3392 = sbr.rel (0) target = $region69
    $region68: #{model_forward.1} parent=1 // pred_region
      _
    $region69: #{model_forward.1} parent=1 // pred_fallthru
      _
    // Predicated region
    $region70: #{model_forward.1} parent=1 // pred_check
      _
    $region71: #{model_forward.1} parent=1 // pred_check_branch
      %3394 = sbr.rel (0) target = $region73
    $region72: #{model_forward.1} parent=1 // pred_region
      _
    $region73: #{model_forward.1} parent=1 // pred_fallthru
      _
    // Predicated region
    $region74: #{model_forward.1} parent=1 // pred_check
      _
    $region75: #{model_forward.1} parent=1 // pred_check_branch
      %3396 = sbr.rel (0) target = $region77
    $region76: #{model_forward.1} parent=1 // pred_region
      _
    $region77: #{model_forward.1} parent=1 // pred_fallthru
      _
    %3397 = vsyncpa [#allocation6], 1

</llo_original>
